<compile_context>
chip_gen: v7x
topology: tpu7x:2x2x1
jax: 0.10.0
libtpu: 0.0.40
codegen_flags: <defaults>
</compile_context>

<pallas_src>
import jax
import jax.numpy as jnp
from jax.experimental import pallas as pl
from jax.experimental.pallas import tpu as pltpu


# ----------------------------------------------------------------------------
# Small-model configuration (consistent with MelGANGenerator's constraints:
#   channels >= prod(upsample_scales), channels % 2**len(upsample_scales) == 0)
# ----------------------------------------------------------------------------
CFG = dict(
    in_channels=16,
    out_channels=1,
    kernel_size=7,
    channels=32,
    upsample_scales=[2, 2],
    stack_kernel_size=3,
    stacks=2,
)

NEG_SLOPE = 0.2


def _leaky(x, slope=NEG_SLOPE):
    return jnp.where(x >= 0, x, slope * x)


def _polyphase_plan(stride):
    """Static tap plan for ConvTranspose1d(kernel=2s, stride=s,
    padding=s//2+s%2, output_padding=s%2) expressed as `s` phase convolutions.

    Phase r produces   y[s*m + r] = w_eq[:, :, k0]     @ x[m + q0]
                                  + w_eq[:, :, k0 + s] @ x[m + q0 + 1]
    where w_eq is the flipped/transposed (regular-conv equivalent) weight and
    out-of-range x indices are zero.  For this module's parameterization
    q0 is always -1 or 0, so each phase only needs one zero column of padding.
    """
    K = 2 * stride
    padding = stride // 2 + stride % 2
    lp = K - 1 - padding            # left zero-pad of the zero-inserted signal
    plan = []
    for r in range(stride):
        k0 = (lp - r) % stride
        q0 = -((lp - r) // stride)
        plan.append((k0, q0))
    return plan


# ----------------------------------------------------------------------------
# Parameter initialization (deterministic, synthetic -- PyTorch layouts)
# ----------------------------------------------------------------------------
def init_params(key, cfg):
    p = {}
    counter = [0]

    def nxt():
        counter[0] += 1
        return jax.random.fold_in(key, counter[0])

    def w_init(shape):  # follows reset_parameters: N(0, 0.02)
        return 0.02 * jax.random.normal(nxt(), shape, jnp.float32)

    def b_init(shape):
        return 0.01 * jax.random.normal(nxt(), shape, jnp.float32)

    ks, ch, inc = cfg["kernel_size"], cfg["channels"], cfg["in_channels"]
    p["conv0_w"] = w_init((ch, inc, ks))
    p["conv0_b"] = b_init((ch,))
    for i, s in enumerate(cfg["upsample_scales"]):
        cin, cout = ch // 2 ** i, ch // 2 ** (i + 1)
        p[f"up{i}_w"] = w_init((cin, cout, 2 * s))   # ConvTranspose1d (in, out, K)
        p[f"up{i}_b"] = b_init((cout,))
        for j in range(cfg["stacks"]):
            kk = cfg["stack_kernel_size"]
            p[f"res{i}_{j}_w1"] = w_init((cout, cout, kk))
            p[f"res{i}_{j}_b1"] = b_init((cout,))
            p[f"res{i}_{j}_w2"] = w_init((cout, cout, 1))
            p[f"res{i}_{j}_b2"] = b_init((cout,))
            p[f"res{i}_{j}_ws"] = w_init((cout, cout, 1))
            p[f"res{i}_{j}_bs"] = b_init((cout,))
    final_in = ch // 2 ** len(cfg["upsample_scales"])
    p["final_w"] = w_init((cfg["out_channels"], final_in, ks))
    p["final_b"] = b_init((cfg["out_channels"],))
    return p


# ----------------------------------------------------------------------------
# One-time weight re-layout (hoisted out of the forward path)
# ----------------------------------------------------------------------------
def prepare_params(p, cfg):
    # TODO(synk): upsample_scale == 1 (plain Conv1d branch of the module) not
    # implemented; the configured scales are all >= 2.
    assert all(s >= 2 for s in cfg["upsample_scales"])

    def flat(w):                      # (Cout, Cin, K) -> (Cout, K*Cin), tap-major
        cout, cin, k = w.shape
        return jnp.transpose(w, (0, 2, 1)).reshape(cout, k * cin)

    prep = {}
    prep["conv0_wf"] = flat(p["conv0_w"])
    prep["conv0_b"] = p["conv0_b"].reshape(-1, 1)
    for i, s in enumerate(cfg["upsample_scales"]):
        w = p[f"up{i}_w"]                                   # (Cin, Cout, 2s)
        w_eq = jnp.transpose(w[:, :, ::-1], (1, 0, 2))      # (Cout, Cin, 2s) flipped
        plan = _polyphase_plan(s)
        prep[f"up{i}_wp"] = jnp.stack(
            [jnp.concatenate([w_eq[:, :, k0], w_eq[:, :, k0 + s]], axis=1)
             for (k0, _) in plan], axis=0)                  # (s, Cout, 2*Cin)
        prep[f"up{i}_b"] = p[f"up{i}_b"].reshape(-1, 1)
        for j in range(cfg["stacks"]):
            prep[f"res{i}_{j}_w1f"] = flat(p[f"res{i}_{j}_w1"])
            prep[f"res{i}_{j}_b1"] = p[f"res{i}_{j}_b1"].reshape(-1, 1)
            # fuse 1x1 out-conv + 1x1 skip-conv + residual add: W_c @ [h ; x]
            prep[f"res{i}_{j}_wc"] = jnp.concatenate(
                [p[f"res{i}_{j}_w2"][:, :, 0], p[f"res{i}_{j}_ws"][:, :, 0]], axis=1)
            prep[f"res{i}_{j}_bc"] = (p[f"res{i}_{j}_b2"]
                                      + p[f"res{i}_{j}_bs"]).reshape(-1, 1)
    prep["final_wf"] = flat(p["final_w"])
    prep["final_b"] = p["final_b"].reshape(-1, 1)
    return prep


# ----------------------------------------------------------------------------
# Fully fused forward kernel
# ----------------------------------------------------------------------------
def _make_fused_kernel(cfg, names, B, T_in):
    ks = cfg["kernel_size"]
    scales = cfg["upsample_scales"]
    stacks = cfg["stacks"]
    skk = cfg["stack_kernel_size"]
    pad0 = (ks - 1) // 2

    def reflect_pad(x, p):
        if p == 0:
            return x
        T = x.shape[1]
        left = [x[:, k:k + 1] for k in range(p, 0, -1)]
        right = [x[:, T - 2 - k:T - 1 - k] for k in range(p)]
        return jnp.concatenate(left + [x] + right, axis=1)

    def conv_fused(xs, W, b2, K, dil, T_out):
        """All batches + all taps in one MXU matmul:
        (Cout, K*Cin) @ (K*Cin, B*T_out)."""
        cols = []
        for x in xs:
            if K == 1:
                cols.append(x[:, :T_out])
            else:
                cols.append(jnp.concatenate(
                    [x[:, k * dil:k * dil + T_out] for k in range(K)], axis=0))
        X = cols[0] if len(cols) == 1 else jnp.concatenate(cols, axis=1)
        Y = jnp.dot(W, X, preferred_element_type=jnp.float32) + b2
        return [Y[:, i * T_out:(i + 1) * T_out] for i in range(len(xs))]

    def kernel(*refs):
        c_ref, o_ref = refs[0], refs[-1]
        pr = dict(zip(names, refs[1:-1]))

        xs = [c_ref[bb].astype(jnp.float32) for bb in range(B)]   # list of (Cin, T)
        T = T_in

        # --- initial: ReflectionPad1d + Conv1d -------------------------------
        xs = [reflect_pad(v, pad0) for v in xs]
        xs = conv_fused(xs, pr["conv0_wf"][...], pr["conv0_b"][...], ks, 1, T)

        for i, s in enumerate(scales):
            # --- LeakyReLU + ConvTranspose1d (polyphase, no zero-insertion) --
            xs = [_leaky(v) for v in xs]
            C = xs[0].shape[0]
            b_up = pr[f"up{i}_b"][...]
            plan = _polyphase_plan(s)
            phase_out = []                                   # [phase][batch]
            for r, (k0, q0) in enumerate(plan):
                L, R = max(0, -q0), max(0, q0 + 1)
                xp = []
                for v in xs:
                    parts = []
                    if L:
                        parts.append(jnp.zeros((C, L), jnp.float32))
                    parts.append(v)
                    if R:
                        parts.append(jnp.zeros((C, R), jnp.float32))
                    xp.append(jnp.concatenate(parts, axis=1)
                              if len(parts) > 1 else v)
                off = q0 + L                                 # == 0 here
                shifted = [v[:, off:] for v in xp]
                w_r = pr[f"up{i}_wp"][r]                     # (Cout, 2*Cin)
                phase_out.append(conv_fused(shifted, w_r, b_up, 2, 1, T))
            # interleave phases along time with iota-built selection matmuls
            rows = jax.lax.broadcasted_iota(jnp.int32, (T, s * T), 0)
            colsI = jax.lax.broadcasted_iota(jnp.int32, (T, s * T), 1)
            Us = [(colsI == s * rows + r).astype(jnp.float32) for r in range(s)]
            new_xs = []
            for bb in range(B):
                acc = jnp.dot(phase_out[0][bb], Us[0],
                              preferred_element_type=jnp.float32)
                for r in range(1, s):
                    acc = acc + jnp.dot(phase_out[r][bb], Us[r],
                                        preferred_element_type=jnp.float32)
                new_xs.append(acc)
            xs = new_xs
            T = s * T

            # --- residual stacks --------------------------------------------
            for j in range(stacks):
                d = skk ** j
                pd = (skk - 1) // 2 * d
                h = [reflect_pad(_leaky(v), pd) for v in xs]
                h = conv_fused(h, pr[f"res{i}_{j}_w1f"][...],
                               pr[f"res{i}_{j}_b1"][...], skk, d, T)
                h = [_leaky(v) for v in h]
                # fused 1x1 out-conv + 1x1 skip-conv + residual add
                cat = [jnp.concatenate([h[bb], xs[bb]], axis=0) for bb in range(B)]
                xs = conv_fused(cat, pr[f"res{i}_{j}_wc"][...],
                                pr[f"res{i}_{j}_bc"][...], 1, 1, T)

        # --- final: LeakyReLU + ReflectionPad1d + Conv1d + Tanh --------------
        xs = [reflect_pad(_leaky(v), pad0) for v in xs]
        xs = conv_fused(xs, pr["final_wf"][...], pr["final_b"][...], ks, 1, T)
        for bb in range(B):
            o_ref[bb] = jnp.tanh(xs[bb]).astype(o_ref.dtype)

    return kernel


def melgan_forward_pallas(c, prep, cfg):
    """c: (B, in_channels, T) float32, prep: output of prepare_params."""
    B, _, T_in = c.shape
    T_out = T_in
    for s in cfg["upsample_scales"]:
        T_out *= s
    names = list(prep.keys())
    vals = [prep[n] for n in names]
    kernel = _make_fused_kernel(cfg, names, B, T_in)
    vmem_spec = pl.BlockSpec(memory_space=pltpu.MemorySpace.VMEM)
    return pl.pallas_call(
        kernel,
        out_shape=jax.ShapeDtypeStruct((B, cfg["out_channels"], T_out), jnp.float32),
        in_specs=[vmem_spec] * (1 + len(vals)),
        out_specs=vmem_spec,
    )(c, *vals)


# ----------------------------------------------------------------------------
# Pure-JAX reference (lax convs) for correctness check
# ----------------------------------------------------------------------------
def _lax_conv1d(x, w, b, dilation=1):
    y = jax.lax.conv_general_dilated(
        x, w, window_strides=(1,), padding="VALID",
        rhs_dilation=(dilation,), dimension_numbers=("NCH", "OIH", "NCH"))
    return y + b.reshape(1, -1, 1)


def melgan_forward_ref(c, p, cfg):
    ks = cfg["kernel_size"]
    pad0 = (ks - 1) // 2
    x = jnp.pad(c, ((0, 0), (0, 0), (pad0, pad0)), mode="reflect")
    x = _lax_conv1d(x, p["conv0_w"], p["conv0_b"])
    for i, s in enumerate(cfg["upsample_scales"]):
        x = _leaky(x)
        B, Cin, T = x.shape
        K = 2 * s
        padding = s // 2 + s % 2
        op = s % 2
        x_up = jnp.zeros((B, Cin, (T - 1) * s + 1), x.dtype).at[:, :, ::s].set(x)
        x_pad = jnp.pad(x_up, ((0, 0), (0, 0), (K - 1 - padding, K - 1 - padding + op)))
        w_eq = jnp.transpose(p[f"up{i}_w"][:, :, ::-1], (1, 0, 2))
        x = _lax_conv1d(x_pad, w_eq, p[f"up{i}_b"])
        for j in range(cfg["stacks"]):
            kk = cfg["stack_kernel_size"]
            d = kk ** j
            padr = (kk - 1) // 2 * d
            h = _leaky(x)
            hp = jnp.pad(h, ((0, 0), (0, 0), (padr, padr)), mode="reflect")
            h = _lax_conv1d(hp, p[f"res{i}_{j}_w1"], p[f"res{i}_{j}_b1"], dilation=d)
            h = _leaky(h)
            h = _lax_conv1d(h, p[f"res{i}_{j}_w2"], p[f"res{i}_{j}_b2"])
            skip = _lax_conv1d(x, p[f"res{i}_{j}_ws"], p[f"res{i}_{j}_bs"])
            x = h + skip
    x = _leaky(x)
    x = jnp.pad(x, ((0, 0), (0, 0), (pad0, pad0)), mode="reflect")
    x = _lax_conv1d(x, p["final_w"], p["final_b"])
    return jnp.tanh(x)


if __name__ == "__main__":
    key = jax.random.PRNGKey(0)
    k_in, k_par = jax.random.split(key)

    B, T_in = 2, 8
    c = jax.random.normal(k_in, (B, CFG["in_channels"], T_in), jnp.float32)
    params = init_params(k_par, CFG)
    prep = prepare_params(params, CFG)        # one-time weight re-layout

    out = jax.block_until_ready(melgan_forward_pallas(c, prep, CFG))

    # shape check: (B, out_channels, T * prod(upsample_scales))
    T_exp = T_in
    for s in CFG["upsample_scales"]:
        T_exp *= s
    assert out.shape == (B, CFG["out_channels"], T_exp), out.shape
    assert bool(jnp.all(jnp.isfinite(out)))

    ref = jax.block_until_ready(melgan_forward_ref(c, params, CFG))
    assert jnp.allclose(out, ref, rtol=1e-4, atol=1e-4), float(jnp.max(jnp.abs(out - ref)))

    print("KERNEL_OK")
</pallas_src>

<mosaic_0001>
module attributes {stable_mosaic.version = 11 : i64} {
  func.func @kernel(%arg0: memref<2x16x8xf32, #tpu.memory_space<vmem>>, %arg1: memref<32x112xf32, #tpu.memory_space<vmem>>, %arg2: memref<32x1xf32, #tpu.memory_space<vmem>>, %arg3: memref<2x16x64xf32, #tpu.memory_space<vmem>>, %arg4: memref<16x1xf32, #tpu.memory_space<vmem>>, %arg5: memref<16x48xf32, #tpu.memory_space<vmem>>, %arg6: memref<16x1xf32, #tpu.memory_space<vmem>>, %arg7: memref<16x32xf32, #tpu.memory_space<vmem>>, %arg8: memref<16x1xf32, #tpu.memory_space<vmem>>, %arg9: memref<16x48xf32, #tpu.memory_space<vmem>>, %arg10: memref<16x1xf32, #tpu.memory_space<vmem>>, %arg11: memref<16x32xf32, #tpu.memory_space<vmem>>, %arg12: memref<16x1xf32, #tpu.memory_space<vmem>>, %arg13: memref<2x8x32xf32, #tpu.memory_space<vmem>>, %arg14: memref<8x1xf32, #tpu.memory_space<vmem>>, %arg15: memref<8x24xf32, #tpu.memory_space<vmem>>, %arg16: memref<8x1xf32, #tpu.memory_space<vmem>>, %arg17: memref<8x16xf32, #tpu.memory_space<vmem>>, %arg18: memref<8x1xf32, #tpu.memory_space<vmem>>, %arg19: memref<8x24xf32, #tpu.memory_space<vmem>>, %arg20: memref<8x1xf32, #tpu.memory_space<vmem>>, %arg21: memref<8x16xf32, #tpu.memory_space<vmem>>, %arg22: memref<8x1xf32, #tpu.memory_space<vmem>>, %arg23: memref<1x56xf32, #tpu.memory_space<vmem>>, %arg24: memref<1x1xf32, #tpu.memory_space<vmem>>, %arg25: memref<2x1x32xf32, #tpu.memory_space<vmem>>) attributes {dimension_semantics = [], scalar_prefetch = 0 : i64, scratch_operands = 0 : i64, tpu.core_type = #tpu.core_type<tc>} {
    %c0 = arith.constant 0 : index
    %c0_0 = arith.constant 0 : index
    %c0_1 = arith.constant 0 : index
    %0 = vector.load %arg0[%c0, %c0_0, %c0_1] : memref<2x16x8xf32, #tpu.memory_space<vmem>>, vector<1x16x8xf32>
    %1 = vector.shape_cast %0 : vector<1x16x8xf32> to vector<16x8xf32>
    %c1 = arith.constant 1 : index
    %c0_2 = arith.constant 0 : index
    %c0_3 = arith.constant 0 : index
    %2 = vector.load %arg0[%c1, %c0_2, %c0_3] : memref<2x16x8xf32, #tpu.memory_space<vmem>>, vector<1x16x8xf32>
    %3 = vector.shape_cast %2 : vector<1x16x8xf32> to vector<16x8xf32>
    %4 = vector.extract_strided_slice %1 {offsets = [0, 3], sizes = [16, 1], strides = [1, 1]} : vector<16x8xf32> to vector<16x1xf32>
    %5 = vector.extract_strided_slice %1 {offsets = [0, 2], sizes = [16, 1], strides = [1, 1]} : vector<16x8xf32> to vector<16x1xf32>
    %6 = vector.extract_strided_slice %1 {offsets = [0, 1], sizes = [16, 1], strides = [1, 1]} : vector<16x8xf32> to vector<16x1xf32>
    %7 = vector.extract_strided_slice %1 {offsets = [0, 6], sizes = [16, 1], strides = [1, 1]} : vector<16x8xf32> to vector<16x1xf32>
    %8 = vector.extract_strided_slice %1 {offsets = [0, 5], sizes = [16, 1], strides = [1, 1]} : vector<16x8xf32> to vector<16x1xf32>
    %9 = vector.extract_strided_slice %1 {offsets = [0, 4], sizes = [16, 1], strides = [1, 1]} : vector<16x8xf32> to vector<16x1xf32>
    %10 = tpu.concatenate %4, %5, %6, %1, %7, %8, %9 in 1 : vector<16x1xf32>, vector<16x1xf32>, vector<16x1xf32>, vector<16x8xf32>, vector<16x1xf32>, vector<16x1xf32>, vector<16x1xf32> -> vector<16x14xf32>
    %11 = vector.extract_strided_slice %3 {offsets = [0, 3], sizes = [16, 1], strides = [1, 1]} : vector<16x8xf32> to vector<16x1xf32>
    %12 = vector.extract_strided_slice %3 {offsets = [0, 2], sizes = [16, 1], strides = [1, 1]} : vector<16x8xf32> to vector<16x1xf32>
    %13 = vector.extract_strided_slice %3 {offsets = [0, 1], sizes = [16, 1], strides = [1, 1]} : vector<16x8xf32> to vector<16x1xf32>
    %14 = vector.extract_strided_slice %3 {offsets = [0, 6], sizes = [16, 1], strides = [1, 1]} : vector<16x8xf32> to vector<16x1xf32>
    %15 = vector.extract_strided_slice %3 {offsets = [0, 5], sizes = [16, 1], strides = [1, 1]} : vector<16x8xf32> to vector<16x1xf32>
    %16 = vector.extract_strided_slice %3 {offsets = [0, 4], sizes = [16, 1], strides = [1, 1]} : vector<16x8xf32> to vector<16x1xf32>
    %17 = tpu.concatenate %11, %12, %13, %3, %14, %15, %16 in 1 : vector<16x1xf32>, vector<16x1xf32>, vector<16x1xf32>, vector<16x8xf32>, vector<16x1xf32>, vector<16x1xf32>, vector<16x1xf32> -> vector<16x14xf32>
    %c0_4 = arith.constant 0 : index
    %c0_5 = arith.constant 0 : index
    %18 = vector.load %arg1[%c0_4, %c0_5] : memref<32x112xf32, #tpu.memory_space<vmem>>, vector<32x112xf32>
    %c0_6 = arith.constant 0 : index
    %c0_7 = arith.constant 0 : index
    %19 = vector.load %arg2[%c0_6, %c0_7] : memref<32x1xf32, #tpu.memory_space<vmem>>, vector<32x1xf32>
    %20 = vector.extract_strided_slice %10 {offsets = [0, 0], sizes = [16, 8], strides = [1, 1]} : vector<16x14xf32> to vector<16x8xf32>
    %21 = vector.extract_strided_slice %10 {offsets = [0, 1], sizes = [16, 8], strides = [1, 1]} : vector<16x14xf32> to vector<16x8xf32>
    %22 = vector.extract_strided_slice %10 {offsets = [0, 2], sizes = [16, 8], strides = [1, 1]} : vector<16x14xf32> to vector<16x8xf32>
    %23 = vector.extract_strided_slice %10 {offsets = [0, 3], sizes = [16, 8], strides = [1, 1]} : vector<16x14xf32> to vector<16x8xf32>
    %24 = vector.extract_strided_slice %10 {offsets = [0, 4], sizes = [16, 8], strides = [1, 1]} : vector<16x14xf32> to vector<16x8xf32>
    %25 = vector.extract_strided_slice %10 {offsets = [0, 5], sizes = [16, 8], strides = [1, 1]} : vector<16x14xf32> to vector<16x8xf32>
    %26 = vector.extract_strided_slice %10 {offsets = [0, 6], sizes = [16, 8], strides = [1, 1]} : vector<16x14xf32> to vector<16x8xf32>
    %27 = tpu.concatenate %20, %21, %22, %23, %24, %25, %26 in 0 : vector<16x8xf32>, vector<16x8xf32>, vector<16x8xf32>, vector<16x8xf32>, vector<16x8xf32>, vector<16x8xf32>, vector<16x8xf32> -> vector<112x8xf32>
    %28 = vector.extract_strided_slice %17 {offsets = [0, 0], sizes = [16, 8], strides = [1, 1]} : vector<16x14xf32> to vector<16x8xf32>
    %29 = vector.extract_strided_slice %17 {offsets = [0, 1], sizes = [16, 8], strides = [1, 1]} : vector<16x14xf32> to vector<16x8xf32>
    %30 = vector.extract_strided_slice %17 {offsets = [0, 2], sizes = [16, 8], strides = [1, 1]} : vector<16x14xf32> to vector<16x8xf32>
    %31 = vector.extract_strided_slice %17 {offsets = [0, 3], sizes = [16, 8], strides = [1, 1]} : vector<16x14xf32> to vector<16x8xf32>
    %32 = vector.extract_strided_slice %17 {offsets = [0, 4], sizes = [16, 8], strides = [1, 1]} : vector<16x14xf32> to vector<16x8xf32>
    %33 = vector.extract_strided_slice %17 {offsets = [0, 5], sizes = [16, 8], strides = [1, 1]} : vector<16x14xf32> to vector<16x8xf32>
    %34 = vector.extract_strided_slice %17 {offsets = [0, 6], sizes = [16, 8], strides = [1, 1]} : vector<16x14xf32> to vector<16x8xf32>
    %35 = tpu.concatenate %28, %29, %30, %31, %32, %33, %34 in 0 : vector<16x8xf32>, vector<16x8xf32>, vector<16x8xf32>, vector<16x8xf32>, vector<16x8xf32>, vector<16x8xf32>, vector<16x8xf32> -> vector<112x8xf32>
    %36 = tpu.concatenate %27, %35 in 1 : vector<112x8xf32>, vector<112x8xf32> -> vector<112x16xf32>
    %cst = arith.constant dense<0.000000e+00> : vector<32x16xf32>
    %37 = tpu.matmul %18, %36, %cst {dimension_numbers = #tpu.dot_dimension_numbers<[1], [0], [0], [1], [0, 0, 1, 1], [], []>} : vector<32x112xf32>, vector<112x16xf32>, vector<32x16xf32> -> vector<32x16xf32>
    %38 = vector.broadcast %19 : vector<32x1xf32> to vector<32x16xf32>
    %39 = arith.addf %37, %38 : vector<32x16xf32>
    %40 = vector.extract_strided_slice %39 {offsets = [0, 0], sizes = [32, 8], strides = [1, 1]} : vector<32x16xf32> to vector<32x8xf32>
    %41 = vector.extract_strided_slice %39 {offsets = [0, 8], sizes = [32, 8], strides = [1, 1]} : vector<32x16xf32> to vector<32x8xf32>
    %cst_8 = arith.constant 0.000000e+00 : f32
    %42 = vector.broadcast %cst_8 : f32 to vector<32x8xf32>
    %43 = arith.cmpf oge, %40, %42 : vector<32x8xf32>
    %cst_9 = arith.constant 2.000000e-01 : f32
    %44 = vector.broadcast %cst_9 : f32 to vector<32x8xf32>
    %45 = arith.mulf %44, %40 : vector<32x8xf32>
    %46 = arith.select %43, %40, %45 : vector<32x8xi1>, vector<32x8xf32>
    %cst_10 = arith.constant 0.000000e+00 : f32
    %47 = vector.broadcast %cst_10 : f32 to vector<32x8xf32>
    %48 = arith.cmpf oge, %41, %47 : vector<32x8xf32>
    %cst_11 = arith.constant 2.000000e-01 : f32
    %49 = vector.broadcast %cst_11 : f32 to vector<32x8xf32>
    %50 = arith.mulf %49, %41 : vector<32x8xf32>
    %51 = arith.select %48, %41, %50 : vector<32x8xi1>, vector<32x8xf32>
    %c0_12 = arith.constant 0 : index
    %c0_13 = arith.constant 0 : index
    %52 = vector.load %arg4[%c0_12, %c0_13] : memref<16x1xf32, #tpu.memory_space<vmem>>, vector<16x1xf32>
    %cst_14 = arith.constant 0.000000e+00 : f32
    %53 = vector.broadcast %cst_14 : f32 to vector<32x1xf32>
    %54 = tpu.concatenate %53, %46 in 1 : vector<32x1xf32>, vector<32x8xf32> -> vector<32x9xf32>
    %cst_15 = arith.constant 0.000000e+00 : f32
    %55 = vector.broadcast %cst_15 : f32 to vector<32x1xf32>
    %56 = tpu.concatenate %55, %51 in 1 : vector<32x1xf32>, vector<32x8xf32> -> vector<32x9xf32>
    %c0_16 = arith.constant 0 : index
    %c0_17 = arith.constant 0 : index
    %c0_18 = arith.constant 0 : index
    %57 = vector.load %arg3[%c0_16, %c0_17, %c0_18] : memref<2x16x64xf32, #tpu.memory_space<vmem>>, vector<1x16x64xf32>
    %58 = vector.shape_cast %57 : vector<1x16x64xf32> to vector<16x64xf32>
    %59 = vector.extract_strided_slice %54 {offsets = [0, 0], sizes = [32, 8], strides = [1, 1]} : vector<32x9xf32> to vector<32x8xf32>
    %60 = vector.extract_strided_slice %54 {offsets = [0, 1], sizes = [32, 8], strides = [1, 1]} : vector<32x9xf32> to vector<32x8xf32>
    %61 = tpu.concatenate %59, %60 in 0 : vector<32x8xf32>, vector<32x8xf32> -> vector<64x8xf32>
    %62 = vector.extract_strided_slice %56 {offsets = [0, 0], sizes = [32, 8], strides = [1, 1]} : vector<32x9xf32> to vector<32x8xf32>
    %63 = vector.extract_strided_slice %56 {offsets = [0, 1], sizes = [32, 8], strides = [1, 1]} : vector<32x9xf32> to vector<32x8xf32>
    %64 = tpu.concatenate %62, %63 in 0 : vector<32x8xf32>, vector<32x8xf32> -> vector<64x8xf32>
    %65 = tpu.concatenate %61, %64 in 1 : vector<64x8xf32>, vector<64x8xf32> -> vector<64x16xf32>
    %cst_19 = arith.constant dense<0.000000e+00> : vector<16x16xf32>
    %66 = tpu.matmul %58, %65, %cst_19 {dimension_numbers = #tpu.dot_dimension_numbers<[1], [0], [0], [1], [0, 0, 1, 1], [], []>} : vector<16x64xf32>, vector<64x16xf32>, vector<16x16xf32> -> vector<16x16xf32>
    %67 = vector.broadcast %52 : vector<16x1xf32> to vector<16x16xf32>
    %68 = arith.addf %66, %67 : vector<16x16xf32>
    %69 = vector.extract_strided_slice %68 {offsets = [0, 0], sizes = [16, 8], strides = [1, 1]} : vector<16x16xf32> to vector<16x8xf32>
    %70 = vector.extract_strided_slice %68 {offsets = [0, 8], sizes = [16, 8], strides = [1, 1]} : vector<16x16xf32> to vector<16x8xf32>
    %cst_20 = arith.constant 0.000000e+00 : f32
    %71 = vector.broadcast %cst_20 : f32 to vector<32x1xf32>
    %72 = tpu.concatenate %46, %71 in 1 : vector<32x8xf32>, vector<32x1xf32> -> vector<32x9xf32>
    %cst_21 = arith.constant 0.000000e+00 : f32
    %73 = vector.broadcast %cst_21 : f32 to vector<32x1xf32>
    %74 = tpu.concatenate %51, %73 in 1 : vector<32x8xf32>, vector<32x1xf32> -> vector<32x9xf32>
    %c1_22 = arith.constant 1 : index
    %c0_23 = arith.constant 0 : index
    %c0_24 = arith.constant 0 : index
    %75 = vector.load %arg3[%c1_22, %c0_23, %c0_24] : memref<2x16x64xf32, #tpu.memory_space<vmem>>, vector<1x16x64xf32>
    %76 = vector.shape_cast %75 : vector<1x16x64xf32> to vector<16x64xf32>
    %77 = vector.extract_strided_slice %72 {offsets = [0, 0], sizes = [32, 8], strides = [1, 1]} : vector<32x9xf32> to vector<32x8xf32>
    %78 = vector.extract_strided_slice %72 {offsets = [0, 1], sizes = [32, 8], strides = [1, 1]} : vector<32x9xf32> to vector<32x8xf32>
    %79 = tpu.concatenate %77, %78 in 0 : vector<32x8xf32>, vector<32x8xf32> -> vector<64x8xf32>
    %80 = vector.extract_strided_slice %74 {offsets = [0, 0], sizes = [32, 8], strides = [1, 1]} : vector<32x9xf32> to vector<32x8xf32>
    %81 = vector.extract_strided_slice %74 {offsets = [0, 1], sizes = [32, 8], strides = [1, 1]} : vector<32x9xf32> to vector<32x8xf32>
    %82 = tpu.concatenate %80, %81 in 0 : vector<32x8xf32>, vector<32x8xf32> -> vector<64x8xf32>
    %83 = tpu.concatenate %79, %82 in 1 : vector<64x8xf32>, vector<64x8xf32> -> vector<64x16xf32>
    %cst_25 = arith.constant dense<0.000000e+00> : vector<16x16xf32>
    %84 = tpu.matmul %76, %83, %cst_25 {dimension_numbers = #tpu.dot_dimension_numbers<[1], [0], [0], [1], [0, 0, 1, 1], [], []>} : vector<16x64xf32>, vector<64x16xf32>, vector<16x16xf32> -> vector<16x16xf32>
    %85 = vector.broadcast %52 : vector<16x1xf32> to vector<16x16xf32>
    %86 = arith.addf %84, %85 : vector<16x16xf32>
    %87 = vector.extract_strided_slice %86 {offsets = [0, 0], sizes = [16, 8], strides = [1, 1]} : vector<16x16xf32> to vector<16x8xf32>
    %88 = vector.extract_strided_slice %86 {offsets = [0, 8], sizes = [16, 8], strides = [1, 1]} : vector<16x16xf32> to vector<16x8xf32>
    %89 = tpu.iota {dimensions = array<i32: 0>} : vector<8x16xi32>
    %90 = tpu.iota {dimensions = array<i32: 1>} : vector<8x16xi32>
    %c2_i32 = arith.constant 2 : i32
    %91 = vector.broadcast %c2_i32 : i32 to vector<8x16xi32>
    %92 = arith.muli %91, %89 : vector<8x16xi32>
    %c0_i32 = arith.constant 0 : i32
    %93 = vector.broadcast %c0_i32 : i32 to vector<8x16xi32>
    %94 = arith.addi %92, %93 : vector<8x16xi32>
    %95 = arith.cmpi eq, %90, %94 : vector<8x16xi32>
    %96 = arith.extui %95 : vector<8x16xi1> to vector<8x16xi32>
    %97 = arith.sitofp %96 : vector<8x16xi32> to vector<8x16xf32>
    %c2_i32_26 = arith.constant 2 : i32
    %98 = vector.broadcast %c2_i32_26 : i32 to vector<8x16xi32>
    %99 = arith.muli %98, %89 : vector<8x16xi32>
    %c1_i32 = arith.constant 1 : i32
    %100 = vector.broadcast %c1_i32 : i32 to vector<8x16xi32>
    %101 = arith.addi %99, %100 : vector<8x16xi32>
    %102 = arith.cmpi eq, %90, %101 : vector<8x16xi32>
    %103 = arith.extui %102 : vector<8x16xi1> to vector<8x16xi32>
    %104 = arith.sitofp %103 : vector<8x16xi32> to vector<8x16xf32>
    %cst_27 = arith.constant dense<0.000000e+00> : vector<16x16xf32>
    %105 = tpu.matmul %69, %97, %cst_27 {dimension_numbers = #tpu.dot_dimension_numbers<[1], [0], [0], [1], [0, 0, 1, 1], [], []>} : vector<16x8xf32>, vector<8x16xf32>, vector<16x16xf32> -> vector<16x16xf32>
    %cst_28 = arith.constant dense<0.000000e+00> : vector<16x16xf32>
    %106 = tpu.matmul %87, %104, %cst_28 {dimension_numbers = #tpu.dot_dimension_numbers<[1], [0], [0], [1], [0, 0, 1, 1], [], []>} : vector<16x8xf32>, vector<8x16xf32>, vector<16x16xf32> -> vector<16x16xf32>
    %107 = arith.addf %105, %106 : vector<16x16xf32>
    %cst_29 = arith.constant dense<0.000000e+00> : vector<16x16xf32>
    %108 = tpu.matmul %70, %97, %cst_29 {dimension_numbers = #tpu.dot_dimension_numbers<[1], [0], [0], [1], [0, 0, 1, 1], [], []>} : vector<16x8xf32>, vector<8x16xf32>, vector<16x16xf32> -> vector<16x16xf32>
    %cst_30 = arith.constant dense<0.000000e+00> : vector<16x16xf32>
    %109 = tpu.matmul %88, %104, %cst_30 {dimension_numbers = #tpu.dot_dimension_numbers<[1], [0], [0], [1], [0, 0, 1, 1], [], []>} : vector<16x8xf32>, vector<8x16xf32>, vector<16x16xf32> -> vector<16x16xf32>
    %110 = arith.addf %108, %109 : vector<16x16xf32>
    %cst_31 = arith.constant 0.000000e+00 : f32
    %111 = vector.broadcast %cst_31 : f32 to vector<16x16xf32>
    %112 = arith.cmpf oge, %107, %111 : vector<16x16xf32>
    %cst_32 = arith.constant 2.000000e-01 : f32
    %113 = vector.broadcast %cst_32 : f32 to vector<16x16xf32>
    %114 = arith.mulf %113, %107 : vector<16x16xf32>
    %115 = arith.select %112, %107, %114 : vector<16x16xi1>, vector<16x16xf32>
    %116 = vector.extract_strided_slice %115 {offsets = [0, 1], sizes = [16, 1], strides = [1, 1]} : vector<16x16xf32> to vector<16x1xf32>
    %117 = vector.extract_strided_slice %115 {offsets = [0, 14], sizes = [16, 1], strides = [1, 1]} : vector<16x16xf32> to vector<16x1xf32>
    %118 = tpu.concatenate %116, %115, %117 in 1 : vector<16x1xf32>, vector<16x16xf32>, vector<16x1xf32> -> vector<16x18xf32>
    %cst_33 = arith.constant 0.000000e+00 : f32
    %119 = vector.broadcast %cst_33 : f32 to vector<16x16xf32>
    %120 = arith.cmpf oge, %110, %119 : vector<16x16xf32>
    %cst_34 = arith.constant 2.000000e-01 : f32
    %121 = vector.broadcast %cst_34 : f32 to vector<16x16xf32>
    %122 = arith.mulf %121, %110 : vector<16x16xf32>
    %123 = arith.select %120, %110, %122 : vector<16x16xi1>, vector<16x16xf32>
    %124 = vector.extract_strided_slice %123 {offsets = [0, 1], sizes = [16, 1], strides = [1, 1]} : vector<16x16xf32> to vector<16x1xf32>
    %125 = vector.extract_strided_slice %123 {offsets = [0, 14], sizes = [16, 1], strides = [1, 1]} : vector<16x16xf32> to vector<16x1xf32>
    %126 = tpu.concatenate %124, %123, %125 in 1 : vector<16x1xf32>, vector<16x16xf32>, vector<16x1xf32> -> vector<16x18xf32>
    %c0_35 = arith.constant 0 : index
    %c0_36 = arith.constant 0 : index
    %127 = vector.load %arg5[%c0_35, %c0_36] : memref<16x48xf32, #tpu.memory_space<vmem>>, vector<16x48xf32>
    %c0_37 = arith.constant 0 : index
    %c0_38 = arith.constant 0 : index
    %128 = vector.load %arg6[%c0_37, %c0_38] : memref<16x1xf32, #tpu.memory_space<vmem>>, vector<16x1xf32>
    %129 = vector.extract_strided_slice %118 {offsets = [0, 0], sizes = [16, 16], strides = [1, 1]} : vector<16x18xf32> to vector<16x16xf32>
    %130 = vector.extract_strided_slice %118 {offsets = [0, 1], sizes = [16, 16], strides = [1, 1]} : vector<16x18xf32> to vector<16x16xf32>
    %131 = vector.extract_strided_slice %118 {offsets = [0, 2], sizes = [16, 16], strides = [1, 1]} : vector<16x18xf32> to vector<16x16xf32>
    %132 = tpu.concatenate %129, %130, %131 in 0 : vector<16x16xf32>, vector<16x16xf32>, vector<16x16xf32> -> vector<48x16xf32>
    %133 = vector.extract_strided_slice %126 {offsets = [0, 0], sizes = [16, 16], strides = [1, 1]} : vector<16x18xf32> to vector<16x16xf32>
    %134 = vector.extract_strided_slice %126 {offsets = [0, 1], sizes = [16, 16], strides = [1, 1]} : vector<16x18xf32> to vector<16x16xf32>
    %135 = vector.extract_strided_slice %126 {offsets = [0, 2], sizes = [16, 16], strides = [1, 1]} : vector<16x18xf32> to vector<16x16xf32>
    %136 = tpu.concatenate %133, %134, %135 in 0 : vector<16x16xf32>, vector<16x16xf32>, vector<16x16xf32> -> vector<48x16xf32>
    %137 = tpu.concatenate %132, %136 in 1 : vector<48x16xf32>, vector<48x16xf32> -> vector<48x32xf32>
    %cst_39 = arith.constant dense<0.000000e+00> : vector<16x32xf32>
    %138 = tpu.matmul %127, %137, %cst_39 {dimension_numbers = #tpu.dot_dimension_numbers<[1], [0], [0], [1], [0, 0, 1, 1], [], []>} : vector<16x48xf32>, vector<48x32xf32>, vector<16x32xf32> -> vector<16x32xf32>
    %139 = vector.broadcast %128 : vector<16x1xf32> to vector<16x32xf32>
    %140 = arith.addf %138, %139 : vector<16x32xf32>
    %141 = vector.extract_strided_slice %140 {offsets = [0, 0], sizes = [16, 16], strides = [1, 1]} : vector<16x32xf32> to vector<16x16xf32>
    %142 = vector.extract_strided_slice %140 {offsets = [0, 16], sizes = [16, 16], strides = [1, 1]} : vector<16x32xf32> to vector<16x16xf32>
    %cst_40 = arith.constant 0.000000e+00 : f32
    %143 = vector.broadcast %cst_40 : f32 to vector<16x16xf32>
    %144 = arith.cmpf oge, %141, %143 : vector<16x16xf32>
    %cst_41 = arith.constant 2.000000e-01 : f32
    %145 = vector.broadcast %cst_41 : f32 to vector<16x16xf32>
    %146 = arith.mulf %145, %141 : vector<16x16xf32>
    %147 = arith.select %144, %141, %146 : vector<16x16xi1>, vector<16x16xf32>
    %cst_42 = arith.constant 0.000000e+00 : f32
    %148 = vector.broadcast %cst_42 : f32 to vector<16x16xf32>
    %149 = arith.cmpf oge, %142, %148 : vector<16x16xf32>
    %cst_43 = arith.constant 2.000000e-01 : f32
    %150 = vector.broadcast %cst_43 : f32 to vector<16x16xf32>
    %151 = arith.mulf %150, %142 : vector<16x16xf32>
    %152 = arith.select %149, %142, %151 : vector<16x16xi1>, vector<16x16xf32>
    %153 = tpu.concatenate %147, %107 in 0 : vector<16x16xf32>, vector<16x16xf32> -> vector<32x16xf32>
    %154 = tpu.concatenate %152, %110 in 0 : vector<16x16xf32>, vector<16x16xf32> -> vector<32x16xf32>
    %c0_44 = arith.constant 0 : index
    %c0_45 = arith.constant 0 : index
    %155 = vector.load %arg7[%c0_44, %c0_45] : memref<16x32xf32, #tpu.memory_space<vmem>>, vector<16x32xf32>
    %c0_46 = arith.constant 0 : index
    %c0_47 = arith.constant 0 : index
    %156 = vector.load %arg8[%c0_46, %c0_47] : memref<16x1xf32, #tpu.memory_space<vmem>>, vector<16x1xf32>
    %157 = tpu.concatenate %153, %154 in 1 : vector<32x16xf32>, vector<32x16xf32> -> vector<32x32xf32>
    %cst_48 = arith.constant dense<0.000000e+00> : vector<16x32xf32>
    %158 = tpu.matmul %155, %157, %cst_48 {dimension_numbers = #tpu.dot_dimension_numbers<[1], [0], [0], [1], [0, 0, 1, 1], [], []>} : vector<16x32xf32>, vector<32x32xf32>, vector<16x32xf32> -> vector<16x32xf32>
    %159 = vector.broadcast %156 : vector<16x1xf32> to vector<16x32xf32>
    %160 = arith.addf %158, %159 : vector<16x32xf32>
    %161 = vector.extract_strided_slice %160 {offsets = [0, 0], sizes = [16, 16], strides = [1, 1]} : vector<16x32xf32> to vector<16x16xf32>
    %162 = vector.extract_strided_slice %160 {offsets = [0, 16], sizes = [16, 16], strides = [1, 1]} : vector<16x32xf32> to vector<16x16xf32>
    %cst_49 = arith.constant 0.000000e+00 : f32
    %163 = vector.broadcast %cst_49 : f32 to vector<16x16xf32>
    %164 = arith.cmpf oge, %161, %163 : vector<16x16xf32>
    %cst_50 = arith.constant 2.000000e-01 : f32
    %165 = vector.broadcast %cst_50 : f32 to vector<16x16xf32>
    %166 = arith.mulf %165, %161 : vector<16x16xf32>
    %167 = arith.select %164, %161, %166 : vector<16x16xi1>, vector<16x16xf32>
    %168 = vector.extract_strided_slice %167 {offsets = [0, 3], sizes = [16, 1], strides = [1, 1]} : vector<16x16xf32> to vector<16x1xf32>
    %169 = vector.extract_strided_slice %167 {offsets = [0, 2], sizes = [16, 1], strides = [1, 1]} : vector<16x16xf32> to vector<16x1xf32>
    %170 = vector.extract_strided_slice %167 {offsets = [0, 1], sizes = [16, 1], strides = [1, 1]} : vector<16x16xf32> to vector<16x1xf32>
    %171 = vector.extract_strided_slice %167 {offsets = [0, 14], sizes = [16, 1], strides = [1, 1]} : vector<16x16xf32> to vector<16x1xf32>
    %172 = vector.extract_strided_slice %167 {offsets = [0, 13], sizes = [16, 1], strides = [1, 1]} : vector<16x16xf32> to vector<16x1xf32>
    %173 = vector.extract_strided_slice %167 {offsets = [0, 12], sizes = [16, 1], strides = [1, 1]} : vector<16x16xf32> to vector<16x1xf32>
    %174 = tpu.concatenate %168, %169, %170, %167, %171, %172, %173 in 1 : vector<16x1xf32>, vector<16x1xf32>, vector<16x1xf32>, vector<16x16xf32>, vector<16x1xf32>, vector<16x1xf32>, vector<16x1xf32> -> vector<16x22xf32>
    %cst_51 = arith.constant 0.000000e+00 : f32
    %175 = vector.broadcast %cst_51 : f32 to vector<16x16xf32>
    %176 = arith.cmpf oge, %162, %175 : vector<16x16xf32>
    %cst_52 = arith.constant 2.000000e-01 : f32
    %177 = vector.broadcast %cst_52 : f32 to vector<16x16xf32>
    %178 = arith.mulf %177, %162 : vector<16x16xf32>
    %179 = arith.select %176, %162, %178 : vector<16x16xi1>, vector<16x16xf32>
    %180 = vector.extract_strided_slice %179 {offsets = [0, 3], sizes = [16, 1], strides = [1, 1]} : vector<16x16xf32> to vector<16x1xf32>
    %181 = vector.extract_strided_slice %179 {offsets = [0, 2], sizes = [16, 1], strides = [1, 1]} : vector<16x16xf32> to vector<16x1xf32>
    %182 = vector.extract_strided_slice %179 {offsets = [0, 1], sizes = [16, 1], strides = [1, 1]} : vector<16x16xf32> to vector<16x1xf32>
    %183 = vector.extract_strided_slice %179 {offsets = [0, 14], sizes = [16, 1], strides = [1, 1]} : vector<16x16xf32> to vector<16x1xf32>
    %184 = vector.extract_strided_slice %179 {offsets = [0, 13], sizes = [16, 1], strides = [1, 1]} : vector<16x16xf32> to vector<16x1xf32>
    %185 = vector.extract_strided_slice %179 {offsets = [0, 12], sizes = [16, 1], strides = [1, 1]} : vector<16x16xf32> to vector<16x1xf32>
    %186 = tpu.concatenate %180, %181, %182, %179, %183, %184, %185 in 1 : vector<16x1xf32>, vector<16x1xf32>, vector<16x1xf32>, vector<16x16xf32>, vector<16x1xf32>, vector<16x1xf32>, vector<16x1xf32> -> vector<16x22xf32>
    %c0_53 = arith.constant 0 : index
    %c0_54 = arith.constant 0 : index
    %187 = vector.load %arg9[%c0_53, %c0_54] : memref<16x48xf32, #tpu.memory_space<vmem>>, vector<16x48xf32>
    %c0_55 = arith.constant 0 : index
    %c0_56 = arith.constant 0 : index
    %188 = vector.load %arg10[%c0_55, %c0_56] : memref<16x1xf32, #tpu.memory_space<vmem>>, vector<16x1xf32>
    %189 = vector.extract_strided_slice %174 {offsets = [0, 0], sizes = [16, 16], strides = [1, 1]} : vector<16x22xf32> to vector<16x16xf32>
    %190 = vector.extract_strided_slice %174 {offsets = [0, 3], sizes = [16, 16], strides = [1, 1]} : vector<16x22xf32> to vector<16x16xf32>
    %191 = vector.extract_strided_slice %174 {offsets = [0, 6], sizes = [16, 16], strides = [1, 1]} : vector<16x22xf32> to vector<16x16xf32>
    %192 = tpu.concatenate %189, %190, %191 in 0 : vector<16x16xf32>, vector<16x16xf32>, vector<16x16xf32> -> vector<48x16xf32>
    %193 = vector.extract_strided_slice %186 {offsets = [0, 0], sizes = [16, 16], strides = [1, 1]} : vector<16x22xf32> to vector<16x16xf32>
    %194 = vector.extract_strided_slice %186 {offsets = [0, 3], sizes = [16, 16], strides = [1, 1]} : vector<16x22xf32> to vector<16x16xf32>
    %195 = vector.extract_strided_slice %186 {offsets = [0, 6], sizes = [16, 16], strides = [1, 1]} : vector<16x22xf32> to vector<16x16xf32>
    %196 = tpu.concatenate %193, %194, %195 in 0 : vector<16x16xf32>, vector<16x16xf32>, vector<16x16xf32> -> vector<48x16xf32>
    %197 = tpu.concatenate %192, %196 in 1 : vector<48x16xf32>, vector<48x16xf32> -> vector<48x32xf32>
    %cst_57 = arith.constant dense<0.000000e+00> : vector<16x32xf32>
    %198 = tpu.matmul %187, %197, %cst_57 {dimension_numbers = #tpu.dot_dimension_numbers<[1], [0], [0], [1], [0, 0, 1, 1], [], []>} : vector<16x48xf32>, vector<48x32xf32>, vector<16x32xf32> -> vector<16x32xf32>
    %199 = vector.broadcast %188 : vector<16x1xf32> to vector<16x32xf32>
    %200 = arith.addf %198, %199 : vector<16x32xf32>
    %201 = vector.extract_strided_slice %200 {offsets = [0, 0], sizes = [16, 16], strides = [1, 1]} : vector<16x32xf32> to vector<16x16xf32>
    %202 = vector.extract_strided_slice %200 {offsets = [0, 16], sizes = [16, 16], strides = [1, 1]} : vector<16x32xf32> to vector<16x16xf32>
    %cst_58 = arith.constant 0.000000e+00 : f32
    %203 = vector.broadcast %cst_58 : f32 to vector<16x16xf32>
    %204 = arith.cmpf oge, %201, %203 : vector<16x16xf32>
    %cst_59 = arith.constant 2.000000e-01 : f32
    %205 = vector.broadcast %cst_59 : f32 to vector<16x16xf32>
    %206 = arith.mulf %205, %201 : vector<16x16xf32>
    %207 = arith.select %204, %201, %206 : vector<16x16xi1>, vector<16x16xf32>
    %cst_60 = arith.constant 0.000000e+00 : f32
    %208 = vector.broadcast %cst_60 : f32 to vector<16x16xf32>
    %209 = arith.cmpf oge, %202, %208 : vector<16x16xf32>
    %cst_61 = arith.constant 2.000000e-01 : f32
    %210 = vector.broadcast %cst_61 : f32 to vector<16x16xf32>
    %211 = arith.mulf %210, %202 : vector<16x16xf32>
    %212 = arith.select %209, %202, %211 : vector<16x16xi1>, vector<16x16xf32>
    %213 = tpu.concatenate %207, %161 in 0 : vector<16x16xf32>, vector<16x16xf32> -> vector<32x16xf32>
    %214 = tpu.concatenate %212, %162 in 0 : vector<16x16xf32>, vector<16x16xf32> -> vector<32x16xf32>
    %c0_62 = arith.constant 0 : index
    %c0_63 = arith.constant 0 : index
    %215 = vector.load %arg11[%c0_62, %c0_63] : memref<16x32xf32, #tpu.memory_space<vmem>>, vector<16x32xf32>
    %c0_64 = arith.constant 0 : index
    %c0_65 = arith.constant 0 : index
    %216 = vector.load %arg12[%c0_64, %c0_65] : memref<16x1xf32, #tpu.memory_space<vmem>>, vector<16x1xf32>
    %217 = tpu.concatenate %213, %214 in 1 : vector<32x16xf32>, vector<32x16xf32> -> vector<32x32xf32>
    %cst_66 = arith.constant dense<0.000000e+00> : vector<16x32xf32>
    %218 = tpu.matmul %215, %217, %cst_66 {dimension_numbers = #tpu.dot_dimension_numbers<[1], [0], [0], [1], [0, 0, 1, 1], [], []>} : vector<16x32xf32>, vector<32x32xf32>, vector<16x32xf32> -> vector<16x32xf32>
    %219 = vector.broadcast %216 : vector<16x1xf32> to vector<16x32xf32>
    %220 = arith.addf %218, %219 : vector<16x32xf32>
    %221 = vector.extract_strided_slice %220 {offsets = [0, 0], sizes = [16, 16], strides = [1, 1]} : vector<16x32xf32> to vector<16x16xf32>
    %222 = vector.extract_strided_slice %220 {offsets = [0, 16], sizes = [16, 16], strides = [1, 1]} : vector<16x32xf32> to vector<16x16xf32>
    %cst_67 = arith.constant 0.000000e+00 : f32
    %223 = vector.broadcast %cst_67 : f32 to vector<16x16xf32>
    %224 = arith.cmpf oge, %221, %223 : vector<16x16xf32>
    %cst_68 = arith.constant 2.000000e-01 : f32
    %225 = vector.broadcast %cst_68 : f32 to vector<16x16xf32>
    %226 = arith.mulf %225, %221 : vector<16x16xf32>
    %227 = arith.select %224, %221, %226 : vector<16x16xi1>, vector<16x16xf32>
    %cst_69 = arith.constant 0.000000e+00 : f32
    %228 = vector.broadcast %cst_69 : f32 to vector<16x16xf32>
    %229 = arith.cmpf oge, %222, %228 : vector<16x16xf32>
    %cst_70 = arith.constant 2.000000e-01 : f32
    %230 = vector.broadcast %cst_70 : f32 to vector<16x16xf32>
    %231 = arith.mulf %230, %222 : vector<16x16xf32>
    %232 = arith.select %229, %222, %231 : vector<16x16xi1>, vector<16x16xf32>
    %c0_71 = arith.constant 0 : index
    %c0_72 = arith.constant 0 : index
    %233 = vector.load %arg14[%c0_71, %c0_72] : memref<8x1xf32, #tpu.memory_space<vmem>>, vector<8x1xf32>
    %cst_73 = arith.constant 0.000000e+00 : f32
    %234 = vector.broadcast %cst_73 : f32 to vector<16x1xf32>
    %235 = tpu.concatenate %234, %227 in 1 : vector<16x1xf32>, vector<16x16xf32> -> vector<16x17xf32>
    %cst_74 = arith.constant 0.000000e+00 : f32
    %236 = vector.broadcast %cst_74 : f32 to vector<16x1xf32>
    %237 = tpu.concatenate %236, %232 in 1 : vector<16x1xf32>, vector<16x16xf32> -> vector<16x17xf32>
    %c0_75 = arith.constant 0 : index
    %c0_76 = arith.constant 0 : index
    %c0_77 = arith.constant 0 : index
    %238 = vector.load %arg13[%c0_75, %c0_76, %c0_77] : memref<2x8x32xf32, #tpu.memory_space<vmem>>, vector<1x8x32xf32>
    %239 = vector.shape_cast %238 : vector<1x8x32xf32> to vector<8x32xf32>
    %240 = vector.extract_strided_slice %235 {offsets = [0, 0], sizes = [16, 16], strides = [1, 1]} : vector<16x17xf32> to vector<16x16xf32>
    %241 = vector.extract_strided_slice %235 {offsets = [0, 1], sizes = [16, 16], strides = [1, 1]} : vector<16x17xf32> to vector<16x16xf32>
    %242 = tpu.concatenate %240, %241 in 0 : vector<16x16xf32>, vector<16x16xf32> -> vector<32x16xf32>
    %243 = vector.extract_strided_slice %237 {offsets = [0, 0], sizes = [16, 16], strides = [1, 1]} : vector<16x17xf32> to vector<16x16xf32>
    %244 = vector.extract_strided_slice %237 {offsets = [0, 1], sizes = [16, 16], strides = [1, 1]} : vector<16x17xf32> to vector<16x16xf32>
    %245 = tpu.concatenate %243, %244 in 0 : vector<16x16xf32>, vector<16x16xf32> -> vector<32x16xf32>
    %246 = tpu.concatenate %242, %245 in 1 : vector<32x16xf32>, vector<32x16xf32> -> vector<32x32xf32>
    %cst_78 = arith.constant dense<0.000000e+00> : vector<8x32xf32>
    %247 = tpu.matmul %239, %246, %cst_78 {dimension_numbers = #tpu.dot_dimension_numbers<[1], [0], [0], [1], [0, 0, 1, 1], [], []>} : vector<8x32xf32>, vector<32x32xf32>, vector<8x32xf32> -> vector<8x32xf32>
    %248 = vector.broadcast %233 : vector<8x1xf32> to vector<8x32xf32>
    %249 = arith.addf %247, %248 : vector<8x32xf32>
    %250 = vector.extract_strided_slice %249 {offsets = [0, 0], sizes = [8, 16], strides = [1, 1]} : vector<8x32xf32> to vector<8x16xf32>
    %251 = vector.extract_strided_slice %249 {offsets = [0, 16], sizes = [8, 16], strides = [1, 1]} : vector<8x32xf32> to vector<8x16xf32>
    %cst_79 = arith.constant 0.000000e+00 : f32
    %252 = vector.broadcast %cst_79 : f32 to vector<16x1xf32>
    %253 = tpu.concatenate %227, %252 in 1 : vector<16x16xf32>, vector<16x1xf32> -> vector<16x17xf32>
    %cst_80 = arith.constant 0.000000e+00 : f32
    %254 = vector.broadcast %cst_80 : f32 to vector<16x1xf32>
    %255 = tpu.concatenate %232, %254 in 1 : vector<16x16xf32>, vector<16x1xf32> -> vector<16x17xf32>
    %c1_81 = arith.constant 1 : index
    %c0_82 = arith.constant 0 : index
    %c0_83 = arith.constant 0 : index
    %256 = vector.load %arg13[%c1_81, %c0_82, %c0_83] : memref<2x8x32xf32, #tpu.memory_space<vmem>>, vector<1x8x32xf32>
    %257 = vector.shape_cast %256 : vector<1x8x32xf32> to vector<8x32xf32>
    %258 = vector.extract_strided_slice %253 {offsets = [0, 0], sizes = [16, 16], strides = [1, 1]} : vector<16x17xf32> to vector<16x16xf32>
    %259 = vector.extract_strided_slice %253 {offsets = [0, 1], sizes = [16, 16], strides = [1, 1]} : vector<16x17xf32> to vector<16x16xf32>
    %260 = tpu.concatenate %258, %259 in 0 : vector<16x16xf32>, vector<16x16xf32> -> vector<32x16xf32>
    %261 = vector.extract_strided_slice %255 {offsets = [0, 0], sizes = [16, 16], strides = [1, 1]} : vector<16x17xf32> to vector<16x16xf32>
    %262 = vector.extract_strided_slice %255 {offsets = [0, 1], sizes = [16, 16], strides = [1, 1]} : vector<16x17xf32> to vector<16x16xf32>
    %263 = tpu.concatenate %261, %262 in 0 : vector<16x16xf32>, vector<16x16xf32> -> vector<32x16xf32>
    %264 = tpu.concatenate %260, %263 in 1 : vector<32x16xf32>, vector<32x16xf32> -> vector<32x32xf32>
    %cst_84 = arith.constant dense<0.000000e+00> : vector<8x32xf32>
    %265 = tpu.matmul %257, %264, %cst_84 {dimension_numbers = #tpu.dot_dimension_numbers<[1], [0], [0], [1], [0, 0, 1, 1], [], []>} : vector<8x32xf32>, vector<32x32xf32>, vector<8x32xf32> -> vector<8x32xf32>
    %266 = vector.broadcast %233 : vector<8x1xf32> to vector<8x32xf32>
    %267 = arith.addf %265, %266 : vector<8x32xf32>
    %268 = vector.extract_strided_slice %267 {offsets = [0, 0], sizes = [8, 16], strides = [1, 1]} : vector<8x32xf32> to vector<8x16xf32>
    %269 = vector.extract_strided_slice %267 {offsets = [0, 16], sizes = [8, 16], strides = [1, 1]} : vector<8x32xf32> to vector<8x16xf32>
    %270 = tpu.iota {dimensions = array<i32: 0>} : vector<16x32xi32>
    %271 = tpu.iota {dimensions = array<i32: 1>} : vector<16x32xi32>
    %c2_i32_85 = arith.constant 2 : i32
    %272 = vector.broadcast %c2_i32_85 : i32 to vector<16x32xi32>
    %273 = arith.muli %272, %270 : vector<16x32xi32>
    %c0_i32_86 = arith.constant 0 : i32
    %274 = vector.broadcast %c0_i32_86 : i32 to vector<16x32xi32>
    %275 = arith.addi %273, %274 : vector<16x32xi32>
    %276 = arith.cmpi eq, %271, %275 : vector<16x32xi32>
    %277 = arith.extui %276 : vector<16x32xi1> to vector<16x32xi32>
    %278 = arith.sitofp %277 : vector<16x32xi32> to vector<16x32xf32>
    %c2_i32_87 = arith.constant 2 : i32
    %279 = vector.broadcast %c2_i32_87 : i32 to vector<16x32xi32>
    %280 = arith.muli %279, %270 : vector<16x32xi32>
    %c1_i32_88 = arith.constant 1 : i32
    %281 = vector.broadcast %c1_i32_88 : i32 to vector<16x32xi32>
    %282 = arith.addi %280, %281 : vector<16x32xi32>
    %283 = arith.cmpi eq, %271, %282 : vector<16x32xi32>
    %284 = arith.extui %283 : vector<16x32xi1> to vector<16x32xi32>
    %285 = arith.sitofp %284 : vector<16x32xi32> to vector<16x32xf32>
    %cst_89 = arith.constant dense<0.000000e+00> : vector<8x32xf32>
    %286 = tpu.matmul %250, %278, %cst_89 {dimension_numbers = #tpu.dot_dimension_numbers<[1], [0], [0], [1], [0, 0, 1, 1], [], []>} : vector<8x16xf32>, vector<16x32xf32>, vector<8x32xf32> -> vector<8x32xf32>
    %cst_90 = arith.constant dense<0.000000e+00> : vector<8x32xf32>
    %287 = tpu.matmul %268, %285, %cst_90 {dimension_numbers = #tpu.dot_dimension_numbers<[1], [0], [0], [1], [0, 0, 1, 1], [], []>} : vector<8x16xf32>, vector<16x32xf32>, vector<8x32xf32> -> vector<8x32xf32>
    %288 = arith.addf %286, %287 : vector<8x32xf32>
    %cst_91 = arith.constant dense<0.000000e+00> : vector<8x32xf32>
    %289 = tpu.matmul %251, %278, %cst_91 {dimension_numbers = #tpu.dot_dimension_numbers<[1], [0], [0], [1], [0, 0, 1, 1], [], []>} : vector<8x16xf32>, vector<16x32xf32>, vector<8x32xf32> -> vector<8x32xf32>
    %cst_92 = arith.constant dense<0.000000e+00> : vector<8x32xf32>
    %290 = tpu.matmul %269, %285, %cst_92 {dimension_numbers = #tpu.dot_dimension_numbers<[1], [0], [0], [1], [0, 0, 1, 1], [], []>} : vector<8x16xf32>, vector<16x32xf32>, vector<8x32xf32> -> vector<8x32xf32>
    %291 = arith.addf %289, %290 : vector<8x32xf32>
    %cst_93 = arith.constant 0.000000e+00 : f32
    %292 = vector.broadcast %cst_93 : f32 to vector<8x32xf32>
    %293 = arith.cmpf oge, %288, %292 : vector<8x32xf32>
    %cst_94 = arith.constant 2.000000e-01 : f32
    %294 = vector.broadcast %cst_94 : f32 to vector<8x32xf32>
    %295 = arith.mulf %294, %288 : vector<8x32xf32>
    %296 = arith.select %293, %288, %295 : vector<8x32xi1>, vector<8x32xf32>
    %297 = vector.extract_strided_slice %296 {offsets = [0, 1], sizes = [8, 1], strides = [1, 1]} : vector<8x32xf32> to vector<8x1xf32>
    %298 = vector.extract_strided_slice %296 {offsets = [0, 30], sizes = [8, 1], strides = [1, 1]} : vector<8x32xf32> to vector<8x1xf32>
    %299 = tpu.concatenate %297, %296, %298 in 1 : vector<8x1xf32>, vector<8x32xf32>, vector<8x1xf32> -> vector<8x34xf32>
    %cst_95 = arith.constant 0.000000e+00 : f32
    %300 = vector.broadcast %cst_95 : f32 to vector<8x32xf32>
    %301 = arith.cmpf oge, %291, %300 : vector<8x32xf32>
    %cst_96 = arith.constant 2.000000e-01 : f32
    %302 = vector.broadcast %cst_96 : f32 to vector<8x32xf32>
    %303 = arith.mulf %302, %291 : vector<8x32xf32>
    %304 = arith.select %301, %291, %303 : vector<8x32xi1>, vector<8x32xf32>
    %305 = vector.extract_strided_slice %304 {offsets = [0, 1], sizes = [8, 1], strides = [1, 1]} : vector<8x32xf32> to vector<8x1xf32>
    %306 = vector.extract_strided_slice %304 {offsets = [0, 30], sizes = [8, 1], strides = [1, 1]} : vector<8x32xf32> to vector<8x1xf32>
    %307 = tpu.concatenate %305, %304, %306 in 1 : vector<8x1xf32>, vector<8x32xf32>, vector<8x1xf32> -> vector<8x34xf32>
    %c0_97 = arith.constant 0 : index
    %c0_98 = arith.constant 0 : index
    %308 = vector.load %arg15[%c0_97, %c0_98] : memref<8x24xf32, #tpu.memory_space<vmem>>, vector<8x24xf32>
    %c0_99 = arith.constant 0 : index
    %c0_100 = arith.constant 0 : index
    %309 = vector.load %arg16[%c0_99, %c0_100] : memref<8x1xf32, #tpu.memory_space<vmem>>, vector<8x1xf32>
    %310 = vector.extract_strided_slice %299 {offsets = [0, 0], sizes = [8, 32], strides = [1, 1]} : vector<8x34xf32> to vector<8x32xf32>
    %311 = vector.extract_strided_slice %299 {offsets = [0, 1], sizes = [8, 32], strides = [1, 1]} : vector<8x34xf32> to vector<8x32xf32>
    %312 = vector.extract_strided_slice %299 {offsets = [0, 2], sizes = [8, 32], strides = [1, 1]} : vector<8x34xf32> to vector<8x32xf32>
    %313 = tpu.concatenate %310, %311, %312 in 0 : vector<8x32xf32>, vector<8x32xf32>, vector<8x32xf32> -> vector<24x32xf32>
    %314 = vector.extract_strided_slice %307 {offsets = [0, 0], sizes = [8, 32], strides = [1, 1]} : vector<8x34xf32> to vector<8x32xf32>
    %315 = vector.extract_strided_slice %307 {offsets = [0, 1], sizes = [8, 32], strides = [1, 1]} : vector<8x34xf32> to vector<8x32xf32>
    %316 = vector.extract_strided_slice %307 {offsets = [0, 2], sizes = [8, 32], strides = [1, 1]} : vector<8x34xf32> to vector<8x32xf32>
    %317 = tpu.concatenate %314, %315, %316 in 0 : vector<8x32xf32>, vector<8x32xf32>, vector<8x32xf32> -> vector<24x32xf32>
    %318 = tpu.concatenate %313, %317 in 1 : vector<24x32xf32>, vector<24x32xf32> -> vector<24x64xf32>
    %cst_101 = arith.constant dense<0.000000e+00> : vector<8x64xf32>
    %319 = tpu.matmul %308, %318, %cst_101 {dimension_numbers = #tpu.dot_dimension_numbers<[1], [0], [0], [1], [0, 0, 1, 1], [], []>} : vector<8x24xf32>, vector<24x64xf32>, vector<8x64xf32> -> vector<8x64xf32>
    %320 = vector.broadcast %309 : vector<8x1xf32> to vector<8x64xf32>
    %321 = arith.addf %319, %320 : vector<8x64xf32>
    %322 = vector.extract_strided_slice %321 {offsets = [0, 0], sizes = [8, 32], strides = [1, 1]} : vector<8x64xf32> to vector<8x32xf32>
    %323 = vector.extract_strided_slice %321 {offsets = [0, 32], sizes = [8, 32], strides = [1, 1]} : vector<8x64xf32> to vector<8x32xf32>
    %cst_102 = arith.constant 0.000000e+00 : f32
    %324 = vector.broadcast %cst_102 : f32 to vector<8x32xf32>
    %325 = arith.cmpf oge, %322, %324 : vector<8x32xf32>
    %cst_103 = arith.constant 2.000000e-01 : f32
    %326 = vector.broadcast %cst_103 : f32 to vector<8x32xf32>
    %327 = arith.mulf %326, %322 : vector<8x32xf32>
    %328 = arith.select %325, %322, %327 : vector<8x32xi1>, vector<8x32xf32>
    %cst_104 = arith.constant 0.000000e+00 : f32
    %329 = vector.broadcast %cst_104 : f32 to vector<8x32xf32>
    %330 = arith.cmpf oge, %323, %329 : vector<8x32xf32>
    %cst_105 = arith.constant 2.000000e-01 : f32
    %331 = vector.broadcast %cst_105 : f32 to vector<8x32xf32>
    %332 = arith.mulf %331, %323 : vector<8x32xf32>
    %333 = arith.select %330, %323, %332 : vector<8x32xi1>, vector<8x32xf32>
    %334 = tpu.concatenate %328, %288 in 0 : vector<8x32xf32>, vector<8x32xf32> -> vector<16x32xf32>
    %335 = tpu.concatenate %333, %291 in 0 : vector<8x32xf32>, vector<8x32xf32> -> vector<16x32xf32>
    %c0_106 = arith.constant 0 : index
    %c0_107 = arith.constant 0 : index
    %336 = vector.load %arg17[%c0_106, %c0_107] : memref<8x16xf32, #tpu.memory_space<vmem>>, vector<8x16xf32>
    %c0_108 = arith.constant 0 : index
    %c0_109 = arith.constant 0 : index
    %337 = vector.load %arg18[%c0_108, %c0_109] : memref<8x1xf32, #tpu.memory_space<vmem>>, vector<8x1xf32>
    %338 = tpu.concatenate %334, %335 in 1 : vector<16x32xf32>, vector<16x32xf32> -> vector<16x64xf32>
    %cst_110 = arith.constant dense<0.000000e+00> : vector<8x64xf32>
    %339 = tpu.matmul %336, %338, %cst_110 {dimension_numbers = #tpu.dot_dimension_numbers<[1], [0], [0], [1], [0, 0, 1, 1], [], []>} : vector<8x16xf32>, vector<16x64xf32>, vector<8x64xf32> -> vector<8x64xf32>
    %340 = vector.broadcast %337 : vector<8x1xf32> to vector<8x64xf32>
    %341 = arith.addf %339, %340 : vector<8x64xf32>
    %342 = vector.extract_strided_slice %341 {offsets = [0, 0], sizes = [8, 32], strides = [1, 1]} : vector<8x64xf32> to vector<8x32xf32>
    %343 = vector.extract_strided_slice %341 {offsets = [0, 32], sizes = [8, 32], strides = [1, 1]} : vector<8x64xf32> to vector<8x32xf32>
    %cst_111 = arith.constant 0.000000e+00 : f32
    %344 = vector.broadcast %cst_111 : f32 to vector<8x32xf32>
    %345 = arith.cmpf oge, %342, %344 : vector<8x32xf32>
    %cst_112 = arith.constant 2.000000e-01 : f32
    %346 = vector.broadcast %cst_112 : f32 to vector<8x32xf32>
    %347 = arith.mulf %346, %342 : vector<8x32xf32>
    %348 = arith.select %345, %342, %347 : vector<8x32xi1>, vector<8x32xf32>
    %349 = vector.extract_strided_slice %348 {offsets = [0, 3], sizes = [8, 1], strides = [1, 1]} : vector<8x32xf32> to vector<8x1xf32>
    %350 = vector.extract_strided_slice %348 {offsets = [0, 2], sizes = [8, 1], strides = [1, 1]} : vector<8x32xf32> to vector<8x1xf32>
    %351 = vector.extract_strided_slice %348 {offsets = [0, 1], sizes = [8, 1], strides = [1, 1]} : vector<8x32xf32> to vector<8x1xf32>
    %352 = vector.extract_strided_slice %348 {offsets = [0, 30], sizes = [8, 1], strides = [1, 1]} : vector<8x32xf32> to vector<8x1xf32>
    %353 = vector.extract_strided_slice %348 {offsets = [0, 29], sizes = [8, 1], strides = [1, 1]} : vector<8x32xf32> to vector<8x1xf32>
    %354 = vector.extract_strided_slice %348 {offsets = [0, 28], sizes = [8, 1], strides = [1, 1]} : vector<8x32xf32> to vector<8x1xf32>
    %355 = tpu.concatenate %349, %350, %351, %348, %352, %353, %354 in 1 : vector<8x1xf32>, vector<8x1xf32>, vector<8x1xf32>, vector<8x32xf32>, vector<8x1xf32>, vector<8x1xf32>, vector<8x1xf32> -> vector<8x38xf32>
    %cst_113 = arith.constant 0.000000e+00 : f32
    %356 = vector.broadcast %cst_113 : f32 to vector<8x32xf32>
    %357 = arith.cmpf oge, %343, %356 : vector<8x32xf32>
    %cst_114 = arith.constant 2.000000e-01 : f32
    %358 = vector.broadcast %cst_114 : f32 to vector<8x32xf32>
    %359 = arith.mulf %358, %343 : vector<8x32xf32>
    %360 = arith.select %357, %343, %359 : vector<8x32xi1>, vector<8x32xf32>
    %361 = vector.extract_strided_slice %360 {offsets = [0, 3], sizes = [8, 1], strides = [1, 1]} : vector<8x32xf32> to vector<8x1xf32>
    %362 = vector.extract_strided_slice %360 {offsets = [0, 2], sizes = [8, 1], strides = [1, 1]} : vector<8x32xf32> to vector<8x1xf32>
    %363 = vector.extract_strided_slice %360 {offsets = [0, 1], sizes = [8, 1], strides = [1, 1]} : vector<8x32xf32> to vector<8x1xf32>
    %364 = vector.extract_strided_slice %360 {offsets = [0, 30], sizes = [8, 1], strides = [1, 1]} : vector<8x32xf32> to vector<8x1xf32>
    %365 = vector.extract_strided_slice %360 {offsets = [0, 29], sizes = [8, 1], strides = [1, 1]} : vector<8x32xf32> to vector<8x1xf32>
    %366 = vector.extract_strided_slice %360 {offsets = [0, 28], sizes = [8, 1], strides = [1, 1]} : vector<8x32xf32> to vector<8x1xf32>
    %367 = tpu.concatenate %361, %362, %363, %360, %364, %365, %366 in 1 : vector<8x1xf32>, vector<8x1xf32>, vector<8x1xf32>, vector<8x32xf32>, vector<8x1xf32>, vector<8x1xf32>, vector<8x1xf32> -> vector<8x38xf32>
    %c0_115 = arith.constant 0 : index
    %c0_116 = arith.constant 0 : index
    %368 = vector.load %arg19[%c0_115, %c0_116] : memref<8x24xf32, #tpu.memory_space<vmem>>, vector<8x24xf32>
    %c0_117 = arith.constant 0 : index
    %c0_118 = arith.constant 0 : index
    %369 = vector.load %arg20[%c0_117, %c0_118] : memref<8x1xf32, #tpu.memory_space<vmem>>, vector<8x1xf32>
    %370 = vector.extract_strided_slice %355 {offsets = [0, 0], sizes = [8, 32], strides = [1, 1]} : vector<8x38xf32> to vector<8x32xf32>
    %371 = vector.extract_strided_slice %355 {offsets = [0, 3], sizes = [8, 32], strides = [1, 1]} : vector<8x38xf32> to vector<8x32xf32>
    %372 = vector.extract_strided_slice %355 {offsets = [0, 6], sizes = [8, 32], strides = [1, 1]} : vector<8x38xf32> to vector<8x32xf32>
    %373 = tpu.concatenate %370, %371, %372 in 0 : vector<8x32xf32>, vector<8x32xf32>, vector<8x32xf32> -> vector<24x32xf32>
    %374 = vector.extract_strided_slice %367 {offsets = [0, 0], sizes = [8, 32], strides = [1, 1]} : vector<8x38xf32> to vector<8x32xf32>
    %375 = vector.extract_strided_slice %367 {offsets = [0, 3], sizes = [8, 32], strides = [1, 1]} : vector<8x38xf32> to vector<8x32xf32>
    %376 = vector.extract_strided_slice %367 {offsets = [0, 6], sizes = [8, 32], strides = [1, 1]} : vector<8x38xf32> to vector<8x32xf32>
    %377 = tpu.concatenate %374, %375, %376 in 0 : vector<8x32xf32>, vector<8x32xf32>, vector<8x32xf32> -> vector<24x32xf32>
    %378 = tpu.concatenate %373, %377 in 1 : vector<24x32xf32>, vector<24x32xf32> -> vector<24x64xf32>
    %cst_119 = arith.constant dense<0.000000e+00> : vector<8x64xf32>
    %379 = tpu.matmul %368, %378, %cst_119 {dimension_numbers = #tpu.dot_dimension_numbers<[1], [0], [0], [1], [0, 0, 1, 1], [], []>} : vector<8x24xf32>, vector<24x64xf32>, vector<8x64xf32> -> vector<8x64xf32>
    %380 = vector.broadcast %369 : vector<8x1xf32> to vector<8x64xf32>
    %381 = arith.addf %379, %380 : vector<8x64xf32>
    %382 = vector.extract_strided_slice %381 {offsets = [0, 0], sizes = [8, 32], strides = [1, 1]} : vector<8x64xf32> to vector<8x32xf32>
    %383 = vector.extract_strided_slice %381 {offsets = [0, 32], sizes = [8, 32], strides = [1, 1]} : vector<8x64xf32> to vector<8x32xf32>
    %cst_120 = arith.constant 0.000000e+00 : f32
    %384 = vector.broadcast %cst_120 : f32 to vector<8x32xf32>
    %385 = arith.cmpf oge, %382, %384 : vector<8x32xf32>
    %cst_121 = arith.constant 2.000000e-01 : f32
    %386 = vector.broadcast %cst_121 : f32 to vector<8x32xf32>
    %387 = arith.mulf %386, %382 : vector<8x32xf32>
    %388 = arith.select %385, %382, %387 : vector<8x32xi1>, vector<8x32xf32>
    %cst_122 = arith.constant 0.000000e+00 : f32
    %389 = vector.broadcast %cst_122 : f32 to vector<8x32xf32>
    %390 = arith.cmpf oge, %383, %389 : vector<8x32xf32>
    %cst_123 = arith.constant 2.000000e-01 : f32
    %391 = vector.broadcast %cst_123 : f32 to vector<8x32xf32>
    %392 = arith.mulf %391, %383 : vector<8x32xf32>
    %393 = arith.select %390, %383, %392 : vector<8x32xi1>, vector<8x32xf32>
    %394 = tpu.concatenate %388, %342 in 0 : vector<8x32xf32>, vector<8x32xf32> -> vector<16x32xf32>
    %395 = tpu.concatenate %393, %343 in 0 : vector<8x32xf32>, vector<8x32xf32> -> vector<16x32xf32>
    %c0_124 = arith.constant 0 : index
    %c0_125 = arith.constant 0 : index
    %396 = vector.load %arg21[%c0_124, %c0_125] : memref<8x16xf32, #tpu.memory_space<vmem>>, vector<8x16xf32>
    %c0_126 = arith.constant 0 : index
    %c0_127 = arith.constant 0 : index
    %397 = vector.load %arg22[%c0_126, %c0_127] : memref<8x1xf32, #tpu.memory_space<vmem>>, vector<8x1xf32>
    %398 = tpu.concatenate %394, %395 in 1 : vector<16x32xf32>, vector<16x32xf32> -> vector<16x64xf32>
    %cst_128 = arith.constant dense<0.000000e+00> : vector<8x64xf32>
    %399 = tpu.matmul %396, %398, %cst_128 {dimension_numbers = #tpu.dot_dimension_numbers<[1], [0], [0], [1], [0, 0, 1, 1], [], []>} : vector<8x16xf32>, vector<16x64xf32>, vector<8x64xf32> -> vector<8x64xf32>
    %400 = vector.broadcast %397 : vector<8x1xf32> to vector<8x64xf32>
    %401 = arith.addf %399, %400 : vector<8x64xf32>
    %402 = vector.extract_strided_slice %401 {offsets = [0, 0], sizes = [8, 32], strides = [1, 1]} : vector<8x64xf32> to vector<8x32xf32>
    %403 = vector.extract_strided_slice %401 {offsets = [0, 32], sizes = [8, 32], strides = [1, 1]} : vector<8x64xf32> to vector<8x32xf32>
    %cst_129 = arith.constant 0.000000e+00 : f32
    %404 = vector.broadcast %cst_129 : f32 to vector<8x32xf32>
    %405 = arith.cmpf oge, %402, %404 : vector<8x32xf32>
    %cst_130 = arith.constant 2.000000e-01 : f32
    %406 = vector.broadcast %cst_130 : f32 to vector<8x32xf32>
    %407 = arith.mulf %406, %402 : vector<8x32xf32>
    %408 = arith.select %405, %402, %407 : vector<8x32xi1>, vector<8x32xf32>
    %409 = vector.extract_strided_slice %408 {offsets = [0, 3], sizes = [8, 1], strides = [1, 1]} : vector<8x32xf32> to vector<8x1xf32>
    %410 = vector.extract_strided_slice %408 {offsets = [0, 2], sizes = [8, 1], strides = [1, 1]} : vector<8x32xf32> to vector<8x1xf32>
    %411 = vector.extract_strided_slice %408 {offsets = [0, 1], sizes = [8, 1], strides = [1, 1]} : vector<8x32xf32> to vector<8x1xf32>
    %412 = vector.extract_strided_slice %408 {offsets = [0, 30], sizes = [8, 1], strides = [1, 1]} : vector<8x32xf32> to vector<8x1xf32>
    %413 = vector.extract_strided_slice %408 {offsets = [0, 29], sizes = [8, 1], strides = [1, 1]} : vector<8x32xf32> to vector<8x1xf32>
    %414 = vector.extract_strided_slice %408 {offsets = [0, 28], sizes = [8, 1], strides = [1, 1]} : vector<8x32xf32> to vector<8x1xf32>
    %415 = tpu.concatenate %409, %410, %411, %408, %412, %413, %414 in 1 : vector<8x1xf32>, vector<8x1xf32>, vector<8x1xf32>, vector<8x32xf32>, vector<8x1xf32>, vector<8x1xf32>, vector<8x1xf32> -> vector<8x38xf32>
    %cst_131 = arith.constant 0.000000e+00 : f32
    %416 = vector.broadcast %cst_131 : f32 to vector<8x32xf32>
    %417 = arith.cmpf oge, %403, %416 : vector<8x32xf32>
    %cst_132 = arith.constant 2.000000e-01 : f32
    %418 = vector.broadcast %cst_132 : f32 to vector<8x32xf32>
    %419 = arith.mulf %418, %403 : vector<8x32xf32>
    %420 = arith.select %417, %403, %419 : vector<8x32xi1>, vector<8x32xf32>
    %421 = vector.extract_strided_slice %420 {offsets = [0, 3], sizes = [8, 1], strides = [1, 1]} : vector<8x32xf32> to vector<8x1xf32>
    %422 = vector.extract_strided_slice %420 {offsets = [0, 2], sizes = [8, 1], strides = [1, 1]} : vector<8x32xf32> to vector<8x1xf32>
    %423 = vector.extract_strided_slice %420 {offsets = [0, 1], sizes = [8, 1], strides = [1, 1]} : vector<8x32xf32> to vector<8x1xf32>
    %424 = vector.extract_strided_slice %420 {offsets = [0, 30], sizes = [8, 1], strides = [1, 1]} : vector<8x32xf32> to vector<8x1xf32>
    %425 = vector.extract_strided_slice %420 {offsets = [0, 29], sizes = [8, 1], strides = [1, 1]} : vector<8x32xf32> to vector<8x1xf32>
    %426 = vector.extract_strided_slice %420 {offsets = [0, 28], sizes = [8, 1], strides = [1, 1]} : vector<8x32xf32> to vector<8x1xf32>
    %427 = tpu.concatenate %421, %422, %423, %420, %424, %425, %426 in 1 : vector<8x1xf32>, vector<8x1xf32>, vector<8x1xf32>, vector<8x32xf32>, vector<8x1xf32>, vector<8x1xf32>, vector<8x1xf32> -> vector<8x38xf32>
    %c0_133 = arith.constant 0 : index
    %c0_134 = arith.constant 0 : index
    %428 = vector.load %arg23[%c0_133, %c0_134] : memref<1x56xf32, #tpu.memory_space<vmem>>, vector<1x56xf32>
    %c0_135 = arith.constant 0 : index
    %c0_136 = arith.constant 0 : index
    %429 = vector.load %arg24[%c0_135, %c0_136] : memref<1x1xf32, #tpu.memory_space<vmem>>, vector<1x1xf32>
    %430 = vector.extract_strided_slice %415 {offsets = [0, 0], sizes = [8, 32], strides = [1, 1]} : vector<8x38xf32> to vector<8x32xf32>
    %431 = vector.extract_strided_slice %415 {offsets = [0, 1], sizes = [8, 32], strides = [1, 1]} : vector<8x38xf32> to vector<8x32xf32>
    %432 = vector.extract_strided_slice %415 {offsets = [0, 2], sizes = [8, 32], strides = [1, 1]} : vector<8x38xf32> to vector<8x32xf32>
    %433 = vector.extract_strided_slice %415 {offsets = [0, 3], sizes = [8, 32], strides = [1, 1]} : vector<8x38xf32> to vector<8x32xf32>
    %434 = vector.extract_strided_slice %415 {offsets = [0, 4], sizes = [8, 32], strides = [1, 1]} : vector<8x38xf32> to vector<8x32xf32>
    %435 = vector.extract_strided_slice %415 {offsets = [0, 5], sizes = [8, 32], strides = [1, 1]} : vector<8x38xf32> to vector<8x32xf32>
    %436 = vector.extract_strided_slice %415 {offsets = [0, 6], sizes = [8, 32], strides = [1, 1]} : vector<8x38xf32> to vector<8x32xf32>
    %437 = tpu.concatenate %430, %431, %432, %433, %434, %435, %436 in 0 : vector<8x32xf32>, vector<8x32xf32>, vector<8x32xf32>, vector<8x32xf32>, vector<8x32xf32>, vector<8x32xf32>, vector<8x32xf32> -> vector<56x32xf32>
    %438 = vector.extract_strided_slice %427 {offsets = [0, 0], sizes = [8, 32], strides = [1, 1]} : vector<8x38xf32> to vector<8x32xf32>
    %439 = vector.extract_strided_slice %427 {offsets = [0, 1], sizes = [8, 32], strides = [1, 1]} : vector<8x38xf32> to vector<8x32xf32>
    %440 = vector.extract_strided_slice %427 {offsets = [0, 2], sizes = [8, 32], strides = [1, 1]} : vector<8x38xf32> to vector<8x32xf32>
    %441 = vector.extract_strided_slice %427 {offsets = [0, 3], sizes = [8, 32], strides = [1, 1]} : vector<8x38xf32> to vector<8x32xf32>
    %442 = vector.extract_strided_slice %427 {offsets = [0, 4], sizes = [8, 32], strides = [1, 1]} : vector<8x38xf32> to vector<8x32xf32>
    %443 = vector.extract_strided_slice %427 {offsets = [0, 5], sizes = [8, 32], strides = [1, 1]} : vector<8x38xf32> to vector<8x32xf32>
    %444 = vector.extract_strided_slice %427 {offsets = [0, 6], sizes = [8, 32], strides = [1, 1]} : vector<8x38xf32> to vector<8x32xf32>
    %445 = tpu.concatenate %438, %439, %440, %441, %442, %443, %444 in 0 : vector<8x32xf32>, vector<8x32xf32>, vector<8x32xf32>, vector<8x32xf32>, vector<8x32xf32>, vector<8x32xf32>, vector<8x32xf32> -> vector<56x32xf32>
    %446 = tpu.concatenate %437, %445 in 1 : vector<56x32xf32>, vector<56x32xf32> -> vector<56x64xf32>
    %cst_137 = arith.constant dense<0.000000e+00> : vector<1x64xf32>
    %447 = tpu.matmul %428, %446, %cst_137 {dimension_numbers = #tpu.dot_dimension_numbers<[1], [0], [0], [1], [0, 0, 1, 1], [], []>} : vector<1x56xf32>, vector<56x64xf32>, vector<1x64xf32> -> vector<1x64xf32>
    %448 = vector.broadcast %429 : vector<1x1xf32> to vector<1x64xf32>
    %449 = arith.addf %447, %448 : vector<1x64xf32>
    %450 = vector.extract_strided_slice %449 {offsets = [0, 0], sizes = [1, 32], strides = [1, 1]} : vector<1x64xf32> to vector<1x32xf32>
    %451 = vector.extract_strided_slice %449 {offsets = [0, 32], sizes = [1, 32], strides = [1, 1]} : vector<1x64xf32> to vector<1x32xf32>
    %452 = math.tanh %450 : vector<1x32xf32>
    %c0_138 = arith.constant 0 : index
    %c0_139 = arith.constant 0 : index
    %c0_140 = arith.constant 0 : index
    %453 = vector.load %arg25[%c0_138, %c0_139, %c0_140] : memref<2x1x32xf32, #tpu.memory_space<vmem>>, vector<1x1x32xf32>
    %454 = vector.shape_cast %453 : vector<1x1x32xf32> to vector<1x32xf32>
    %455 = vector.shape_cast %452 : vector<1x32xf32> to vector<1x1x32xf32>
    tpu.vector_store %arg25[%c0_138, %c0_139, %c0_140], %455 {strides = array<i32>} : memref<2x1x32xf32, #tpu.memory_space<vmem>>, vector<1x1x32xf32>,
    %456 = math.tanh %451 : vector<1x32xf32>
    %c1_141 = arith.constant 1 : index
    %c0_142 = arith.constant 0 : index
    %c0_143 = arith.constant 0 : index
    %457 = vector.load %arg25[%c1_141, %c0_142, %c0_143] : memref<2x1x32xf32, #tpu.memory_space<vmem>>, vector<1x1x32xf32>
    %458 = vector.shape_cast %457 : vector<1x1x32xf32> to vector<1x32xf32>
    %459 = vector.shape_cast %456 : vector<1x32xf32> to vector<1x1x32xf32>
    tpu.vector_store %arg25[%c1_141, %c0_142, %c0_143], %459 {strides = array<i32>} : memref<2x1x32xf32, #tpu.memory_space<vmem>>, vector<1x1x32xf32>,
    return
  }
}

</mosaic_0001>

<llo_original>
// kernel: tpu_custom_call.1
$region0: #{tpu_custom_call.1}
  #allocation0 [shape = 'u32[]', space=smem, size = 0x4, offset = 0x4, fixed_abs, tag = 'smem constant byte address 0x4 - core index']
  #allocation1 [shape = 'u32[144,128]{1,0:T(1,128)}', space=vmem, size = 0x12000, scoped, tag = 'internal scratch']
  #allocation2 [shape = 'f32[1,1]{1,0:T(1,128)S(1)}', space=vmem, size = 0x200, scoped, tag = 'scoped memory for tpu_custom_call.1']
  %s0 = inlined_call_operand.vmem [shape: f32[2,16,8], index: 0, kind: input, shape index: {}]
  %s1 = inlined_call_operand.vmem [shape: f32[32,112], index: 1, kind: input, shape index: {}]
  %s2 = inlined_call_operand.vmem [shape: f32[32,1], index: 2, kind: input, shape index: {}]
  %s3 = inlined_call_operand.vmem [shape: f32[2,16,64], index: 3, kind: input, shape index: {}]
  %s4 = inlined_call_operand.vmem [shape: f32[16,1], index: 4, kind: input, shape index: {}]
  %s5 = inlined_call_operand.vmem [shape: f32[16,48], index: 5, kind: input, shape index: {}]
  %s6 = inlined_call_operand.vmem [shape: f32[16,1], index: 6, kind: input, shape index: {}]
  %s7 = inlined_call_operand.vmem [shape: f32[16,32], index: 7, kind: input, shape index: {}]
  %s8 = inlined_call_operand.vmem [shape: f32[16,1], index: 8, kind: input, shape index: {}]
  %s9 = inlined_call_operand.vmem [shape: f32[16,48], index: 9, kind: input, shape index: {}]
  %s10 = inlined_call_operand.vmem [shape: f32[16,1], index: 10, kind: input, shape index: {}]
  %s11 = inlined_call_operand.vmem [shape: f32[16,32], index: 11, kind: input, shape index: {}]
  %s12 = inlined_call_operand.vmem [shape: f32[16,1], index: 12, kind: input, shape index: {}]
  %s13 = inlined_call_operand.vmem [shape: f32[2,8,32], index: 13, kind: input, shape index: {}]
  %s14 = inlined_call_operand.vmem [shape: f32[8,1], index: 14, kind: input, shape index: {}]
  %s15 = inlined_call_operand.vmem [shape: f32[8,24], index: 15, kind: input, shape index: {}]
  %s16 = inlined_call_operand.vmem [shape: f32[8,1], index: 16, kind: input, shape index: {}]
  %s17 = inlined_call_operand.vmem [shape: f32[8,16], index: 17, kind: input, shape index: {}]
  %s18 = inlined_call_operand.vmem [shape: f32[8,1], index: 18, kind: input, shape index: {}]
  %s19 = inlined_call_operand.vmem [shape: f32[8,24], index: 19, kind: input, shape index: {}]
  %s20 = inlined_call_operand.vmem [shape: f32[8,1], index: 20, kind: input, shape index: {}]
  %s21 = inlined_call_operand.vmem [shape: f32[8,16], index: 21, kind: input, shape index: {}]
  %s22 = inlined_call_operand.vmem [shape: f32[8,1], index: 22, kind: input, shape index: {}]
  %s23 = inlined_call_operand.vmem [shape: f32[1,56], index: 23, kind: input, shape index: {}]
  %s24 = inlined_call_operand.<no memory space> [shape: f32[1,1], index: 24, kind: input, shape index: {}]
  %s25 = inlined_call_operand.hbm [shape: f32[2,1,32], index: 25, kind: output, shape index: {}]
  %s26 = sld [smem:[#allocation0]]
  $region110: #{tpu_custom_call.1} parent=0
    _
  %s28 = ssub.s32 1, %s26
  %s29 = scalar_select 0, %s28, %s26
  %v30 = vstv %s24
  %31 = vst [vmem:[#allocation2] sm:$0x1] %v30
  $region1: #{tpu_custom_call.1} parent=0
    #allocation3 [shape = 'u8[1024]{0}', space=vmem, size = 0x400, scoped, tag = 'output window, operand 0, single buffered']
    #allocation4 [shape = 's32[1]{0}', space=sflag, size = 0x4, scoped, tag = 'scoped memory for tpu_custom_call.1']
    %32 = vsyncpa [#allocation4], 0
    // Predicated region
    $region2: #{tpu_custom_call.1} parent=1 // pred_check
      _
    $region3: #{tpu_custom_call.1} parent=1 // pred_check_branch
      %34 = sbr.rel (0) target = $region5
    $region4: #{tpu_custom_call.1} parent=1 // pred_region
      _
    $region5: #{tpu_custom_call.1} parent=1 // pred_fallthru
      _
    // Predicated region
    $region6: #{tpu_custom_call.1} parent=1 // pred_check
      _
    $region7: #{tpu_custom_call.1} parent=1 // pred_check_branch
      %36 = sbr.rel (0) target = $region9
    $region8: #{tpu_custom_call.1} parent=1 // pred_region
      _
    $region9: #{tpu_custom_call.1} parent=1 // pred_fallthru
      _
    // Predicated region
    $region10: #{tpu_custom_call.1} parent=1 // pred_check
      _
    $region11: #{tpu_custom_call.1} parent=1 // pred_check_branch
      %38 = sbr.rel (0) target = $region13
    $region12: #{tpu_custom_call.1} parent=1 // pred_region
      _
    $region13: #{tpu_custom_call.1} parent=1 // pred_fallthru
      _
    // Predicated region
    $region14: #{tpu_custom_call.1} parent=1 // pred_check
      _
    $region15: #{tpu_custom_call.1} parent=1 // pred_check_branch
      %40 = sbr.rel (0) target = $region17
    $region16: #{tpu_custom_call.1} parent=1 // pred_region
      _
    $region17: #{tpu_custom_call.1} parent=1 // pred_fallthru
      _
    // Predicated region
    $region18: #{tpu_custom_call.1} parent=1 // pred_check
      _
    $region19: #{tpu_custom_call.1} parent=1 // pred_check_branch
      %42 = sbr.rel (0) target = $region21
    $region20: #{tpu_custom_call.1} parent=1 // pred_region
      _
    $region21: #{tpu_custom_call.1} parent=1 // pred_fallthru
      _
    // Predicated region
    $region22: #{tpu_custom_call.1} parent=1 // pred_check
      _
    $region23: #{tpu_custom_call.1} parent=1 // pred_check_branch
      %44 = sbr.rel (0) target = $region25
    $region24: #{tpu_custom_call.1} parent=1 // pred_region
      _
    $region25: #{tpu_custom_call.1} parent=1 // pred_fallthru
      _
    // Predicated region
    $region26: #{tpu_custom_call.1} parent=1 // pred_check
      _
    $region27: #{tpu_custom_call.1} parent=1 // pred_check_branch
      %46 = sbr.rel (0) target = $region29
    $region28: #{tpu_custom_call.1} parent=1 // pred_region
      _
    $region29: #{tpu_custom_call.1} parent=1 // pred_fallthru
      _
    // Predicated region
    $region30: #{tpu_custom_call.1} parent=1 // pred_check
      _
    $region31: #{tpu_custom_call.1} parent=1 // pred_check_branch
      %48 = sbr.rel (0) target = $region33
    $region32: #{tpu_custom_call.1} parent=1 // pred_region
      _
    $region33: #{tpu_custom_call.1} parent=1 // pred_fallthru
      _
    // Predicated region
    $region34: #{tpu_custom_call.1} parent=1 // pred_check
      _
    $region35: #{tpu_custom_call.1} parent=1 // pred_check_branch
      %50 = sbr.rel (0) target = $region37
    $region36: #{tpu_custom_call.1} parent=1 // pred_region
      _
    $region37: #{tpu_custom_call.1} parent=1 // pred_fallthru
      _
    // Predicated region
    $region38: #{tpu_custom_call.1} parent=1 // pred_check
      _
    $region39: #{tpu_custom_call.1} parent=1 // pred_check_branch
      %52 = sbr.rel (0) target = $region41
    $region40: #{tpu_custom_call.1} parent=1 // pred_region
      _
    $region41: #{tpu_custom_call.1} parent=1 // pred_fallthru
      _
    // Predicated region
    $region42: #{tpu_custom_call.1} parent=1 // pred_check
      _
    $region43: #{tpu_custom_call.1} parent=1 // pred_check_branch
      %54 = sbr.rel (0) target = $region45
    $region44: #{tpu_custom_call.1} parent=1 // pred_region
      _
    $region45: #{tpu_custom_call.1} parent=1 // pred_fallthru
      _
    // Predicated region
    $region46: #{tpu_custom_call.1} parent=1 // pred_check
      _
    $region47: #{tpu_custom_call.1} parent=1 // pred_check_branch
      %56 = sbr.rel (0) target = $region49
    $region48: #{tpu_custom_call.1} parent=1 // pred_region
      _
    $region49: #{tpu_custom_call.1} parent=1 // pred_fallthru
      _
    // Predicated region
    $region50: #{tpu_custom_call.1} parent=1 // pred_check
      _
    $region51: #{tpu_custom_call.1} parent=1 // pred_check_branch
      %58 = sbr.rel (0) target = $region53
    $region52: #{tpu_custom_call.1} parent=1 // pred_region
      _
    $region53: #{tpu_custom_call.1} parent=1 // pred_fallthru
      _
    // Predicated region
    $region54: #{tpu_custom_call.1} parent=1 // pred_check
      _
    $region55: #{tpu_custom_call.1} parent=1 // pred_check_branch
      %60 = sbr.rel (0) target = $region57
    $region56: #{tpu_custom_call.1} parent=1 // pred_region
      _
    $region57: #{tpu_custom_call.1} parent=1 // pred_fallthru
      _
    // Predicated region
    $region58: #{tpu_custom_call.1} parent=1 // pred_check
      _
    $region59: #{tpu_custom_call.1} parent=1 // pred_check_branch
      %62 = sbr.rel (0) target = $region61
    $region60: #{tpu_custom_call.1} parent=1 // pred_region
      _
    $region61: #{tpu_custom_call.1} parent=1 // pred_fallthru
      _
    // Predicated region
    $region62: #{tpu_custom_call.1} parent=1 // pred_check
      _
    $region63: #{tpu_custom_call.1} parent=1 // pred_check_branch
      %64 = sbr.rel (0) target = $region65
    $region64: #{tpu_custom_call.1} parent=1 // pred_region
      _
    $region65: #{tpu_custom_call.1} parent=1 // pred_fallthru
      _
    // Predicated region
    $region66: #{tpu_custom_call.1} parent=1 // pred_check
      _
    $region67: #{tpu_custom_call.1} parent=1 // pred_check_branch
      %66 = sbr.rel (0) target = $region69
    $region68: #{tpu_custom_call.1} parent=1 // pred_region
      _
    $region69: #{tpu_custom_call.1} parent=1 // pred_fallthru
      _
    // Predicated region
    $region70: #{tpu_custom_call.1} parent=1 // pred_check
      _
    $region71: #{tpu_custom_call.1} parent=1 // pred_check_branch
      %68 = sbr.rel (0) target = $region73
    $region72: #{tpu_custom_call.1} parent=1 // pred_region
      _
    $region73: #{tpu_custom_call.1} parent=1 // pred_fallthru
      _
    // Predicated region
    $region74: #{tpu_custom_call.1} parent=1 // pred_check
      _
    $region75: #{tpu_custom_call.1} parent=1 // pred_check_branch
      %70 = sbr.rel (0) target = $region77
    $region76: #{tpu_custom_call.1} parent=1 // pred_region
      _
    $region77: #{tpu_custom_call.1} parent=1 // pred_fallthru
      _
    // Predicated region
    $region78: #{tpu_custom_call.1} parent=1 // pred_check
      _
    $region79: #{tpu_custom_call.1} parent=1 // pred_check_branch
      %72 = sbr.rel (0) target = $region81
    $region80: #{tpu_custom_call.1} parent=1 // pred_region
      _
    $region81: #{tpu_custom_call.1} parent=1 // pred_fallthru
      _
    // Predicated region
    $region82: #{tpu_custom_call.1} parent=1 // pred_check
      _
    $region83: #{tpu_custom_call.1} parent=1 // pred_check_branch
      %74 = sbr.rel (0) target = $region85
    $region84: #{tpu_custom_call.1} parent=1 // pred_region
      _
    $region85: #{tpu_custom_call.1} parent=1 // pred_fallthru
      _
    // Predicated region
    $region86: #{tpu_custom_call.1} parent=1 // pred_check
      _
    $region87: #{tpu_custom_call.1} parent=1 // pred_check_branch
      %76 = sbr.rel (0) target = $region89
    $region88: #{tpu_custom_call.1} parent=1 // pred_region
      _
    $region89: #{tpu_custom_call.1} parent=1 // pred_fallthru
      _
    // Predicated region
    $region90: #{tpu_custom_call.1} parent=1 // pred_check
      _
    $region91: #{tpu_custom_call.1} parent=1 // pred_check_branch
      %78 = sbr.rel (0) target = $region93
    $region92: #{tpu_custom_call.1} parent=1 // pred_region
      _
    $region93: #{tpu_custom_call.1} parent=1 // pred_fallthru
      _
    // Predicated region
    $region94: #{tpu_custom_call.1} parent=1 // pred_check
      _
    $region95: #{tpu_custom_call.1} parent=1 // pred_check_branch
      %80 = sbr.rel (0) target = $region97
    $region96: #{tpu_custom_call.1} parent=1 // pred_region
      _
    $region97: #{tpu_custom_call.1} parent=1 // pred_fallthru
      _
    // Predicated region
    $region98: #{tpu_custom_call.1} parent=1 // pred_check
      _
    $region99: #{tpu_custom_call.1} parent=1 // pred_check_branch
      %82 = sbr.rel (0) target = $region101
    $region100: #{tpu_custom_call.1} parent=1 // pred_region
      _
    $region101: #{tpu_custom_call.1} parent=1 // pred_fallthru
      _
    %v83 = vld [vmem:[%s0] sm:$0xff]
    %v84 = vld [vmem:[%s0 + $0x8] sm:$0xff]
    %s85 = scalar_lea.vmem %s0, 16
    %v86 = vld [vmem:[%s85] sm:$0xff]
    %v87 = vld [vmem:[%s85 + $0x8] sm:$0xff]
    %90 = vrot.lane.b32.xlu0 %v83, 125
    %v91 = vpop.permute.xlu0 %90
    %92 = vrot.lane.b32.xlu0 %v84, 125
    %v93 = vpop.permute.xlu0 %92
    %96 = vrot.lane.b32.xlu0 %v83, 127
    %v97 = vpop.permute.xlu0 %96
    %98 = vrot.lane.b32.xlu0 %v84, 127
    %v99 = vpop.permute.xlu0 %98
    %102 = vrot.lane.b32.xlu0 %v83, 1
    %v103 = vpop.permute.xlu0 %102
    %104 = vrot.lane.b32.xlu0 %v84, 1
    %v105 = vpop.permute.xlu0 %104
    %108 = vrot.lane.b32.xlu0 %v83, 3
    %v109 = vpop.permute.xlu0 %108
    %110 = vrot.lane.b32.xlu0 %v84, 3
    %v111 = vpop.permute.xlu0 %110
    %114 = vrot.lane.b32.xlu0 %v83, 5
    %v115 = vpop.permute.xlu0 %114
    %116 = vrot.lane.b32.xlu0 %v84, 5
    %v117 = vpop.permute.xlu0 %116
    %120 = vrot.lane.b32.xlu0 %v83, 7
    %v121 = vpop.permute.xlu0 %120
    %122 = vrot.lane.b32.xlu0 %v84, 7
    %v123 = vpop.permute.xlu0 %122
    %126 = vrot.lane.b32.xlu0 %v83, 9
    %v127 = vpop.permute.xlu0 %126
    %128 = vrot.lane.b32.xlu0 %v84, 9
    %v129 = vpop.permute.xlu0 %128
    %vm132 = vcmask 7168
    %v133 = vsel %vm132, %v91, %v97
    %v134 = vsel %vm132, %v93, %v99
    %vm135 = vcmask 15360
    %v136 = vsel %vm135, %v133, %v103
    %v137 = vsel %vm135, %v134, %v105
    %vm138 = vcmask 23552
    %v139 = vsel %vm138, %v136, %v109
    %v140 = vsel %vm138, %v137, %v111
    %vm141 = vcmask 89088
    %v142 = vsel %vm141, %v139, %v115
    %v143 = vsel %vm141, %v140, %v117
    %vm144 = vcmask 97280
    %v145 = vsel %vm144, %v142, %v121
    %v146 = vsel %vm144, %v143, %v123
    %vm147 = vcmask 105472
    %v148 = vsel %vm147, %v145, %v127
    %v149 = vsel %vm147, %v146, %v129
    %152 = vrot.lane.b32.xlu0 %v86, 125
    %v153 = vpop.permute.xlu0 %152
    %154 = vrot.lane.b32.xlu0 %v87, 125
    %v155 = vpop.permute.xlu0 %154
    %158 = vrot.lane.b32.xlu0 %v86, 127
    %v159 = vpop.permute.xlu0 %158
    %160 = vrot.lane.b32.xlu0 %v87, 127
    %v161 = vpop.permute.xlu0 %160
    %164 = vrot.lane.b32.xlu0 %v86, 1
    %v165 = vpop.permute.xlu0 %164
    %166 = vrot.lane.b32.xlu0 %v87, 1
    %v167 = vpop.permute.xlu0 %166
    %170 = vrot.lane.b32.xlu0 %v86, 3
    %v171 = vpop.permute.xlu0 %170
    %172 = vrot.lane.b32.xlu0 %v87, 3
    %v173 = vpop.permute.xlu0 %172
    %176 = vrot.lane.b32.xlu0 %v86, 5
    %v177 = vpop.permute.xlu0 %176
    %178 = vrot.lane.b32.xlu0 %v87, 5
    %v179 = vpop.permute.xlu0 %178
    %182 = vrot.lane.b32.xlu0 %v86, 7
    %v183 = vpop.permute.xlu0 %182
    %184 = vrot.lane.b32.xlu0 %v87, 7
    %v185 = vpop.permute.xlu0 %184
    %188 = vrot.lane.b32.xlu0 %v86, 9
    %v189 = vpop.permute.xlu0 %188
    %190 = vrot.lane.b32.xlu0 %v87, 9
    %v191 = vpop.permute.xlu0 %190
    %v194 = vsel %vm132, %v153, %v159
    %v195 = vsel %vm132, %v155, %v161
    %v196 = vsel %vm135, %v194, %v165
    %v197 = vsel %vm135, %v195, %v167
    %v198 = vsel %vm138, %v196, %v171
    %v199 = vsel %vm138, %v197, %v173
    %v200 = vsel %vm141, %v198, %v177
    %v201 = vsel %vm141, %v199, %v179
    %v202 = vsel %vm144, %v200, %v183
    %v203 = vsel %vm144, %v201, %v185
    %v204 = vsel %vm147, %v202, %v189
    %v205 = vsel %vm147, %v203, %v191
    %v206 = vld [vmem:[%s1] sm:$0xff]
    %v207 = vld [vmem:[%s1 + $0x8] sm:$0xff]
    %v208 = vld [vmem:[%s1 + $0x10] sm:$0xff]
    %v209 = vld [vmem:[%s1 + $0x18] sm:$0xff]
    %v210 = vld [vmem:[%s2] sm:$0xff]
    %v211 = vld [vmem:[%s2 + $0x8] sm:$0xff]
    %v212 = vld [vmem:[%s2 + $0x10] sm:$0xff]
    %v213 = vld [vmem:[%s2 + $0x18] sm:$0xff]
    %216 = vrot.lane.b32.xlu0 %v148, 127
    %v217 = vpop.permute.xlu0 %216
    %218 = vrot.lane.b32.xlu0 %v149, 127
    %v219 = vpop.permute.xlu0 %218
    %222 = vrot.lane.b32.xlu0 %v148, 126
    %v223 = vpop.permute.xlu0 %222
    %224 = vrot.lane.b32.xlu0 %v149, 126
    %v225 = vpop.permute.xlu0 %224
    %228 = vrot.lane.b32.xlu0 %v148, 125
    %v229 = vpop.permute.xlu0 %228
    %230 = vrot.lane.b32.xlu0 %v149, 125
    %v231 = vpop.permute.xlu0 %230
    %234 = vrot.lane.b32.xlu0 %v148, 124
    %v235 = vpop.permute.xlu0 %234
    %236 = vrot.lane.b32.xlu0 %v149, 124
    %v237 = vpop.permute.xlu0 %236
    %240 = vrot.lane.b32.xlu0 %v148, 123
    %v241 = vpop.permute.xlu0 %240
    %242 = vrot.lane.b32.xlu0 %v149, 123
    %v243 = vpop.permute.xlu0 %242
    %246 = vrot.lane.b32.xlu0 %v148, 122
    %v247 = vpop.permute.xlu0 %246
    %248 = vrot.lane.b32.xlu0 %v149, 122
    %v249 = vpop.permute.xlu0 %248
    %254 = vrot.lane.b32.xlu0 %v204, 127
    %v255 = vpop.permute.xlu0 %254
    %256 = vrot.lane.b32.xlu0 %v205, 127
    %v257 = vpop.permute.xlu0 %256
    %258 = vrot.lane.b32.xlu0 %v204, 126
    %v259 = vpop.permute.xlu0 %258
    %260 = vrot.lane.b32.xlu0 %v205, 126
    %v261 = vpop.permute.xlu0 %260
    %262 = vrot.lane.b32.xlu0 %v204, 125
    %v263 = vpop.permute.xlu0 %262
    %264 = vrot.lane.b32.xlu0 %v205, 125
    %v265 = vpop.permute.xlu0 %264
    %266 = vrot.lane.b32.xlu0 %v204, 124
    %v267 = vpop.permute.xlu0 %266
    %268 = vrot.lane.b32.xlu0 %v205, 124
    %v269 = vpop.permute.xlu0 %268
    %270 = vrot.lane.b32.xlu0 %v204, 123
    %v271 = vpop.permute.xlu0 %270
    %272 = vrot.lane.b32.xlu0 %v205, 123
    %v273 = vpop.permute.xlu0 %272
    %274 = vrot.lane.b32.xlu0 %v204, 122
    %v275 = vpop.permute.xlu0 %274
    %276 = vrot.lane.b32.xlu0 %v205, 122
    %v277 = vpop.permute.xlu0 %276
    %278 = vrot.lane.b32.xlu0 %v204, 8
    %v279 = vpop.permute.xlu0 %278
    %280 = vrot.lane.b32.xlu0 %v205, 8
    %v281 = vpop.permute.xlu0 %280
    %282 = vrot.lane.b32.xlu0 %v255, 8
    %v283 = vpop.permute.xlu0 %282
    %284 = vrot.lane.b32.xlu0 %v257, 8
    %v285 = vpop.permute.xlu0 %284
    %286 = vrot.lane.b32.xlu0 %v259, 8
    %v287 = vpop.permute.xlu0 %286
    %288 = vrot.lane.b32.xlu0 %v261, 8
    %v289 = vpop.permute.xlu0 %288
    %290 = vrot.lane.b32.xlu0 %v263, 8
    %v291 = vpop.permute.xlu0 %290
    %292 = vrot.lane.b32.xlu0 %v265, 8
    %v293 = vpop.permute.xlu0 %292
    %294 = vrot.lane.b32.xlu0 %v267, 8
    %v295 = vpop.permute.xlu0 %294
    %296 = vrot.lane.b32.xlu0 %v269, 8
    %v297 = vpop.permute.xlu0 %296
    %298 = vrot.lane.b32.xlu0 %v271, 8
    %v299 = vpop.permute.xlu0 %298
    %300 = vrot.lane.b32.xlu0 %v273, 8
    %v301 = vpop.permute.xlu0 %300
    %302 = vrot.lane.b32.xlu0 %v275, 8
    %v303 = vpop.permute.xlu0 %302
    %304 = vrot.lane.b32.xlu0 %v277, 8
    %v305 = vpop.permute.xlu0 %304
    %vm320 = vcmask 64512
    %v321 = vsel %vm320, %v148, %v279
    %v322 = vsel %vm320, %v149, %v281
    %v323 = vsel %vm320, %v217, %v283
    %v324 = vsel %vm320, %v219, %v285
    %v325 = vsel %vm320, %v223, %v287
    %v326 = vsel %vm320, %v225, %v289
    %v327 = vsel %vm320, %v229, %v291
    %v328 = vsel %vm320, %v231, %v293
    %v329 = vsel %vm320, %v235, %v295
    %v330 = vsel %vm320, %v237, %v297
    %v331 = vsel %vm320, %v241, %v299
    %v332 = vsel %vm320, %v243, %v301
    %v333 = vsel %vm320, %v247, %v303
    %v334 = vsel %vm320, %v249, %v305
    %336 = vset.pattern.permute.xlu0 0
    %337 = vperm.xlu0 %336, %v210
    %v338 = vpop.permute.xlu0 %337
    %341 = vset.pattern.permute.xlu0 0
    %342 = vperm.xlu0 %341, %v211
    %v343 = vpop.permute.xlu0 %342
    %346 = vset.pattern.permute.xlu0 0
    %347 = vperm.xlu0 %346, %v212
    %v348 = vpop.permute.xlu0 %347
    %351 = vset.pattern.permute.xlu0 0
    %352 = vperm.xlu0 %351, %v213
    %v353 = vpop.permute.xlu0 %352
    %vm355 = vcmask 916480
    %v357 = vsel %vm355, %v206, 0
    %v360 = vsel %vm355, %v207, 0
    %v363 = vsel %vm355, %v208, 0
    %v366 = vsel %vm355, %v209, 0
    %368 = vmatprep.subr.mxu0 0.0
    %369 = vmatpush1.msra.mxu0 %v321
    %370 = vmatprep.subr.mxu0 0.0
    %371 = vmatpush1.msra.mxu0 %v322
    %372 = vmatprep.subr.mxu0 0.0
    %373 = vmatpush1.msra.mxu0 %v323
    %374 = vmatprep.subr.mxu0 0.0
    %375 = vmatpush1.msra.mxu0 %v324
    %376 = vmatprep.subr.mxu0 0.0
    %377 = vmatpush1.msra.mxu0 %v325
    %378 = vmatprep.subr.mxu0 0.0
    %379 = vmatpush1.msra.mxu0 %v326
    %380 = vmatprep.subr.mxu0 0.0
    %381 = vmatpush1.msra.mxu0 %v327
    %382 = vmatprep.subr.mxu0 0.0
    %383 = vmatpush1.msra.mxu0 %v328
    %384 = vmatprep.subr.mxu0 0.0
    %385 = vmatpush1.msra.mxu0 %v329
    %386 = vmatprep.subr.mxu0 0.0
    %387 = vmatpush1.msra.mxu0 %v330
    %388 = vmatprep.subr.mxu0 0.0
    %389 = vmatpush1.msra.mxu0 %v331
    %390 = vmatprep.subr.mxu0 0.0
    %391 = vmatpush1.msra.mxu0 %v332
    %392 = vmatprep.subr.mxu0 0.0
    %393 = vmatpush1.msra.mxu0 %v333
    %394 = vmatprep.subr.mxu0 0.0
    %395 = vmatpush1.msra.mxu0 %v334
    %396 = vmatprep.subr.mxu0 0.0
    %397 = vmatpush1.msra.mxu0 0.0
    %398 = vmatprep.subr.mxu0 0.0
    %399 = vmatpush1.msra.mxu0 0.0
    %400 = vmatprep.subr.mxu0 0.0
    %401 = vmatpush1.msra.mxu0 0.0
    %402 = vmatprep.subr.mxu0 0.0
    %403 = vmatpush1.msra.mxu0 0.0
    %404 = vmatprep.subr.mxu0 0.0
    %405 = vmatpush1.msra.mxu0 0.0
    %406 = vmatprep.subr.mxu0 0.0
    %407 = vmatpush1.msra.mxu0 0.0
    %408 = vmatprep.subr.mxu0 0.0
    %409 = vmatpush1.msra.mxu0 0.0
    %410 = vmatprep.subr.mxu0 0.0
    %411 = vmatpush1.msra.mxu0 0.0
    %412 = vmatprep.subr.mxu0 0.0
    %413 = vmatpush1.msra.mxu0 0.0
    %414 = vmatprep.subr.mxu0 0.0
    %415 = vmatpush1.msra.mxu0 0.0
    %416 = vmatprep.subr.mxu0 0.0
    %417 = vmatpush1.msra.mxu0 0.0
    %418 = vmatprep.subr.mxu0 0.0
    %419 = vmatpush1.msra.mxu0 0.0
    %420 = vmatprep.subr.mxu0 0.0
    %421 = vmatpush1.msra.mxu0 0.0
    %422 = vmatprep.subr.mxu0 0.0
    %423 = vmatpush1.msra.mxu0 0.0
    %424 = vmatprep.subr.mxu0 0.0
    %425 = vmatpush1.msra.mxu0 0.0
    %426 = vmatprep.subr.mxu0 0.0
    %427 = vmatpush1.msra.mxu0 0.0
    %428 = vmatprep.subr.mxu0 0.0
    %429 = vmatpush1.msra.mxu0 0.0
    %430 = vmatprep.subr.mxu0 0.0
    %431 = vmatpush1.msra.mxu0 0.0
    %432 = vmatprep.mubr.f32.mxu0 0.0
    %433 = vmatmul.mubr.f32.gmra.mrb[0].mxu0 %v357
    %v434 = vpop.f32.mrb[0].mxu0
    %v435 = vadd.f32 %v338, %v434
    %v436 = vpop.f32.mrb[0].mxu0
    %437 = vmatprep.mubr.f32.mxu0 0.0
    %438 = vmatmul.mubr.f32.gmra.mrb[0].mxu0 %v360
    %v439 = vpop.f32.mrb[0].mxu0
    %v440 = vadd.f32 %v343, %v439
    %v441 = vpop.f32.mrb[0].mxu0
    %442 = vmatprep.mubr.f32.mxu0 0.0
    %443 = vmatmul.mubr.f32.gmra.mrb[0].mxu0 %v363
    %v444 = vpop.f32.mrb[0].mxu0
    %v445 = vadd.f32 %v348, %v444
    %v446 = vpop.f32.mrb[0].mxu0
    %447 = vmatprep.mubr.f32.mxu0 0.0
    %448 = vmatmul.mubr.f32.gmra.mrb[0].mxu0 %v366
    %v449 = vpop.f32.mrb[0].mxu0
    %v450 = vadd.f32 %v353, %v449
    %v451 = vpop.f32.mrb[0].mxu0
    %452 = vdwg.mxu0
    %vm453 = vcmp.ge.f32.partialorder %v435, 0.0
    %vm454 = vcmp.ge.f32.partialorder %v440, 0.0
    %vm455 = vcmp.ge.f32.partialorder %v445, 0.0
    %vm456 = vcmp.ge.f32.partialorder %v450, 0.0
    %v457 = vmul.f32 %v435, 0.2
    %v458 = vmul.f32 %v440, 0.2
    %v459 = vmul.f32 %v445, 0.2
    %v460 = vmul.f32 %v450, 0.2
    %v461 = vsel %vm453, %v435, %v457
    %v462 = vsel %vm454, %v440, %v458
    %v463 = vsel %vm455, %v445, %v459
    %v464 = vsel %vm456, %v450, %v460
    %v465 = vld [vmem:[%s4] sm:$0xff]
    %v466 = vld [vmem:[%s4 + $0x8] sm:$0xff]
    %471 = vrot.lane.b32.xlu0 %v461, 1
    %v472 = vpop.permute.xlu0 %471
    %473 = vrot.lane.b32.xlu0 %v462, 1
    %v474 = vpop.permute.xlu0 %473
    %475 = vrot.lane.b32.xlu0 %v463, 1
    %v476 = vpop.permute.xlu0 %475
    %477 = vrot.lane.b32.xlu0 %v464, 1
    %v478 = vpop.permute.xlu0 %477
    %v483 = vsel %vm132, 0.0, %v472
    %v484 = vsel %vm132, 0.0, %v474
    %v485 = vsel %vm132, 0.0, %v476
    %v486 = vsel %vm132, 0.0, %v478
    %487 = vrot.lane.b32.xlu0 %v461, 121
    %v488 = vpop.permute.xlu0 %487
    %489 = vrot.lane.b32.xlu0 %v462, 121
    %v490 = vpop.permute.xlu0 %489
    %491 = vrot.lane.b32.xlu0 %v463, 121
    %v492 = vpop.permute.xlu0 %491
    %493 = vrot.lane.b32.xlu0 %v464, 121
    %v494 = vpop.permute.xlu0 %493
    %v499 = vsel %vm132, 0.0, %v488
    %v500 = vsel %vm132, 0.0, %v490
    %v501 = vsel %vm132, 0.0, %v492
    %v502 = vsel %vm132, 0.0, %v494
    %v503 = vld [vmem:[%s3] sm:$0xff]
    %v504 = vld [vmem:[%s3 + $0x8] sm:$0xff]
    %509 = vrot.lane.b32.xlu0 %v483, 127
    %v510 = vpop.permute.xlu0 %509
    %511 = vrot.lane.b32.xlu0 %v484, 127
    %v512 = vpop.permute.xlu0 %511
    %513 = vrot.lane.b32.xlu0 %v485, 127
    %v514 = vpop.permute.xlu0 %513
    %515 = vrot.lane.b32.xlu0 %v486, 127
    %v516 = vpop.permute.xlu0 %515
    %525 = vrot.lane.b32.xlu0 %v499, 127
    %v526 = vpop.permute.xlu0 %525
    %527 = vrot.lane.b32.xlu0 %v500, 127
    %v528 = vpop.permute.xlu0 %527
    %529 = vrot.lane.b32.xlu0 %v501, 127
    %v530 = vpop.permute.xlu0 %529
    %531 = vrot.lane.b32.xlu0 %v502, 127
    %v532 = vpop.permute.xlu0 %531
    %533 = vrot.lane.b32.xlu0 %v499, 8
    %v534 = vpop.permute.xlu0 %533
    %535 = vrot.lane.b32.xlu0 %v500, 8
    %v536 = vpop.permute.xlu0 %535
    %537 = vrot.lane.b32.xlu0 %v501, 8
    %v538 = vpop.permute.xlu0 %537
    %539 = vrot.lane.b32.xlu0 %v502, 8
    %v540 = vpop.permute.xlu0 %539
    %541 = vrot.lane.b32.xlu0 %v526, 8
    %v542 = vpop.permute.xlu0 %541
    %543 = vrot.lane.b32.xlu0 %v528, 8
    %v544 = vpop.permute.xlu0 %543
    %545 = vrot.lane.b32.xlu0 %v530, 8
    %v546 = vpop.permute.xlu0 %545
    %547 = vrot.lane.b32.xlu0 %v532, 8
    %v548 = vpop.permute.xlu0 %547
    %v557 = vsel %vm320, %v483, %v534
    %v558 = vsel %vm320, %v484, %v536
    %v559 = vsel %vm320, %v485, %v538
    %v560 = vsel %vm320, %v486, %v540
    %v561 = vsel %vm320, %v510, %v542
    %v562 = vsel %vm320, %v512, %v544
    %v563 = vsel %vm320, %v514, %v546
    %v564 = vsel %vm320, %v516, %v548
    %566 = vset.pattern.permute.xlu0 0
    %567 = vperm.xlu0 %566, %v465
    %v568 = vpop.permute.xlu0 %567
    %571 = vset.pattern.permute.xlu0 0
    %572 = vperm.xlu0 %571, %v466
    %v573 = vpop.permute.xlu0 %572
    %vm575 = vcmask 523264
    %v577 = vsel %vm575, %v503, 0
    %v580 = vsel %vm575, %v504, 0
    %582 = vmatprep.subr.mxu0 0.0
    %583 = vmatpush1.msra.mxu0 %v557
    %584 = vmatprep.subr.mxu0 0.0
    %585 = vmatpush1.msra.mxu0 %v558
    %586 = vmatprep.subr.mxu0 0.0
    %587 = vmatpush1.msra.mxu0 %v559
    %588 = vmatprep.subr.mxu0 0.0
    %589 = vmatpush1.msra.mxu0 %v560
    %590 = vmatprep.subr.mxu0 0.0
    %591 = vmatpush1.msra.mxu0 %v561
    %592 = vmatprep.subr.mxu0 0.0
    %593 = vmatpush1.msra.mxu0 %v562
    %594 = vmatprep.subr.mxu0 0.0
    %595 = vmatpush1.msra.mxu0 %v563
    %596 = vmatprep.subr.mxu0 0.0
    %597 = vmatpush1.msra.mxu0 %v564
    %598 = vmatprep.subr.mxu0 0.0
    %599 = vmatpush1.msra.mxu0 0.0
    %600 = vmatprep.subr.mxu0 0.0
    %601 = vmatpush1.msra.mxu0 0.0
    %602 = vmatprep.subr.mxu0 0.0
    %603 = vmatpush1.msra.mxu0 0.0
    %604 = vmatprep.subr.mxu0 0.0
    %605 = vmatpush1.msra.mxu0 0.0
    %606 = vmatprep.subr.mxu0 0.0
    %607 = vmatpush1.msra.mxu0 0.0
    %608 = vmatprep.subr.mxu0 0.0
    %609 = vmatpush1.msra.mxu0 0.0
    %610 = vmatprep.subr.mxu0 0.0
    %611 = vmatpush1.msra.mxu0 0.0
    %612 = vmatprep.subr.mxu0 0.0
    %613 = vmatpush1.msra.mxu0 0.0
    %614 = vmatprep.subr.mxu0 0.0
    %615 = vmatpush1.msra.mxu0 0.0
    %616 = vmatprep.subr.mxu0 0.0
    %617 = vmatpush1.msra.mxu0 0.0
    %618 = vmatprep.subr.mxu0 0.0
    %619 = vmatpush1.msra.mxu0 0.0
    %620 = vmatprep.subr.mxu0 0.0
    %621 = vmatpush1.msra.mxu0 0.0
    %622 = vmatprep.subr.mxu0 0.0
    %623 = vmatpush1.msra.mxu0 0.0
    %624 = vmatprep.subr.mxu0 0.0
    %625 = vmatpush1.msra.mxu0 0.0
    %626 = vmatprep.subr.mxu0 0.0
    %627 = vmatpush1.msra.mxu0 0.0
    %628 = vmatprep.subr.mxu0 0.0
    %629 = vmatpush1.msra.mxu0 0.0
    %630 = vmatprep.subr.mxu0 0.0
    %631 = vmatpush1.msra.mxu0 0.0
    %632 = vmatprep.subr.mxu0 0.0
    %633 = vmatpush1.msra.mxu0 0.0
    %634 = vmatprep.subr.mxu0 0.0
    %635 = vmatpush1.msra.mxu0 0.0
    %636 = vmatprep.subr.mxu0 0.0
    %637 = vmatpush1.msra.mxu0 0.0
    %638 = vmatprep.subr.mxu0 0.0
    %639 = vmatpush1.msra.mxu0 0.0
    %640 = vmatprep.subr.mxu0 0.0
    %641 = vmatpush1.msra.mxu0 0.0
    %642 = vmatprep.subr.mxu0 0.0
    %643 = vmatpush1.msra.mxu0 0.0
    %644 = vmatprep.subr.mxu0 0.0
    %645 = vmatpush1.msra.mxu0 0.0
    %646 = vmatprep.mubr.f32.mxu0 0.0
    %647 = vmatmul.mubr.f32.gmra.mrb[0].mxu0 %v577
    %v648 = vpop.f32.mrb[0].mxu0
    %v649 = vadd.f32 %v568, %v648
    %v650 = vpop.f32.mrb[0].mxu0
    %651 = vmatprep.mubr.f32.mxu0 0.0
    %652 = vmatmul.mubr.f32.gmra.mrb[0].mxu0 %v580
    %v653 = vpop.f32.mrb[0].mxu0
    %v654 = vadd.f32 %v573, %v653
    %v655 = vpop.f32.mrb[0].mxu0
    %656 = vdwg.mxu0
    %v657 = vsel %vm320, %v461, 0.0
    %v658 = vsel %vm320, %v462, 0.0
    %v659 = vsel %vm320, %v463, 0.0
    %v660 = vsel %vm320, %v464, 0.0
    %661 = vrot.lane.b32.xlu0 %v461, 120
    %v662 = vpop.permute.xlu0 %661
    %663 = vrot.lane.b32.xlu0 %v462, 120
    %v664 = vpop.permute.xlu0 %663
    %665 = vrot.lane.b32.xlu0 %v463, 120
    %v666 = vpop.permute.xlu0 %665
    %667 = vrot.lane.b32.xlu0 %v464, 120
    %v668 = vpop.permute.xlu0 %667
    %v673 = vsel %vm320, %v662, 0.0
    %v674 = vsel %vm320, %v664, 0.0
    %v675 = vsel %vm320, %v666, 0.0
    %v676 = vsel %vm320, %v668, 0.0
    %s677 = scalar_lea.vmem %s3, 16
    %v678 = vld [vmem:[%s677] sm:$0xff]
    %v679 = vld [vmem:[%s677 + $0x8] sm:$0xff]
    %684 = vrot.lane.b32.xlu0 %v657, 127
    %v685 = vpop.permute.xlu0 %684
    %686 = vrot.lane.b32.xlu0 %v658, 127
    %v687 = vpop.permute.xlu0 %686
    %688 = vrot.lane.b32.xlu0 %v659, 127
    %v689 = vpop.permute.xlu0 %688
    %690 = vrot.lane.b32.xlu0 %v660, 127
    %v691 = vpop.permute.xlu0 %690
    %700 = vrot.lane.b32.xlu0 %v673, 127
    %v701 = vpop.permute.xlu0 %700
    %702 = vrot.lane.b32.xlu0 %v674, 127
    %v703 = vpop.permute.xlu0 %702
    %704 = vrot.lane.b32.xlu0 %v675, 127
    %v705 = vpop.permute.xlu0 %704
    %706 = vrot.lane.b32.xlu0 %v676, 127
    %v707 = vpop.permute.xlu0 %706
    %708 = vrot.lane.b32.xlu0 %v673, 8
    %v709 = vpop.permute.xlu0 %708
    %710 = vrot.lane.b32.xlu0 %v674, 8
    %v711 = vpop.permute.xlu0 %710
    %712 = vrot.lane.b32.xlu0 %v675, 8
    %v713 = vpop.permute.xlu0 %712
    %714 = vrot.lane.b32.xlu0 %v676, 8
    %v715 = vpop.permute.xlu0 %714
    %716 = vrot.lane.b32.xlu0 %v701, 8
    %v717 = vpop.permute.xlu0 %716
    %718 = vrot.lane.b32.xlu0 %v703, 8
    %v719 = vpop.permute.xlu0 %718
    %720 = vrot.lane.b32.xlu0 %v705, 8
    %v721 = vpop.permute.xlu0 %720
    %722 = vrot.lane.b32.xlu0 %v707, 8
    %v723 = vpop.permute.xlu0 %722
    %v732 = vsel %vm320, %v657, %v709
    %v733 = vsel %vm320, %v658, %v711
    %v734 = vsel %vm320, %v659, %v713
    %v735 = vsel %vm320, %v660, %v715
    %v736 = vsel %vm320, %v685, %v717
    %v737 = vsel %vm320, %v687, %v719
    %v738 = vsel %vm320, %v689, %v721
    %v739 = vsel %vm320, %v691, %v723
    %v741 = vsel %vm575, %v678, 0
    %v744 = vsel %vm575, %v679, 0
    %746 = vmatprep.subr.mxu0 0.0
    %747 = vmatpush1.msra.mxu0 %v732
    %748 = vmatprep.subr.mxu0 0.0
    %749 = vmatpush1.msra.mxu0 %v733
    %750 = vmatprep.subr.mxu0 0.0
    %751 = vmatpush1.msra.mxu0 %v734
    %752 = vmatprep.subr.mxu0 0.0
    %753 = vmatpush1.msra.mxu0 %v735
    %754 = vmatprep.subr.mxu0 0.0
    %755 = vmatpush1.msra.mxu0 %v736
    %756 = vmatprep.subr.mxu0 0.0
    %757 = vmatpush1.msra.mxu0 %v737
    %758 = vmatprep.subr.mxu0 0.0
    %759 = vmatpush1.msra.mxu0 %v738
    %760 = vmatprep.subr.mxu0 0.0
    %761 = vmatpush1.msra.mxu0 %v739
    %762 = vmatprep.subr.mxu0 0.0
    %763 = vmatpush1.msra.mxu0 0.0
    %764 = vmatprep.subr.mxu0 0.0
    %765 = vmatpush1.msra.mxu0 0.0
    %766 = vmatprep.subr.mxu0 0.0
    %767 = vmatpush1.msra.mxu0 0.0
    %768 = vmatprep.subr.mxu0 0.0
    %769 = vmatpush1.msra.mxu0 0.0
    %770 = vmatprep.subr.mxu0 0.0
    %771 = vmatpush1.msra.mxu0 0.0
    %772 = vmatprep.subr.mxu0 0.0
    %773 = vmatpush1.msra.mxu0 0.0
    %774 = vmatprep.subr.mxu0 0.0
    %775 = vmatpush1.msra.mxu0 0.0
    %776 = vmatprep.subr.mxu0 0.0
    %777 = vmatpush1.msra.mxu0 0.0
    %778 = vmatprep.subr.mxu0 0.0
    %779 = vmatpush1.msra.mxu0 0.0
    %780 = vmatprep.subr.mxu0 0.0
    %781 = vmatpush1.msra.mxu0 0.0
    %782 = vmatprep.subr.mxu0 0.0
    %783 = vmatpush1.msra.mxu0 0.0
    %784 = vmatprep.subr.mxu0 0.0
    %785 = vmatpush1.msra.mxu0 0.0
    %786 = vmatprep.subr.mxu0 0.0
    %787 = vmatpush1.msra.mxu0 0.0
    %788 = vmatprep.subr.mxu0 0.0
    %789 = vmatpush1.msra.mxu0 0.0
    %790 = vmatprep.subr.mxu0 0.0
    %791 = vmatpush1.msra.mxu0 0.0
    %792 = vmatprep.subr.mxu0 0.0
    %793 = vmatpush1.msra.mxu0 0.0
    %794 = vmatprep.subr.mxu0 0.0
    %795 = vmatpush1.msra.mxu0 0.0
    %796 = vmatprep.subr.mxu0 0.0
    %797 = vmatpush1.msra.mxu0 0.0
    %798 = vmatprep.subr.mxu0 0.0
    %799 = vmatpush1.msra.mxu0 0.0
    %800 = vmatprep.subr.mxu0 0.0
    %801 = vmatpush1.msra.mxu0 0.0
    %802 = vmatprep.subr.mxu0 0.0
    %803 = vmatpush1.msra.mxu0 0.0
    %804 = vmatprep.subr.mxu0 0.0
    %805 = vmatpush1.msra.mxu0 0.0
    %806 = vmatprep.subr.mxu0 0.0
    %807 = vmatpush1.msra.mxu0 0.0
    %808 = vmatprep.subr.mxu0 0.0
    %809 = vmatpush1.msra.mxu0 0.0
    %810 = vmatprep.mubr.f32.mxu0 0.0
    %811 = vmatmul.mubr.f32.gmra.mrb[0].mxu0 %v741
    %v812 = vpop.f32.mrb[0].mxu0
    %v813 = vadd.f32 %v568, %v812
    %v814 = vpop.f32.mrb[0].mxu0
    %815 = vmatprep.mubr.f32.mxu0 0.0
    %816 = vmatmul.mubr.f32.gmra.mrb[0].mxu0 %v744
    %v817 = vpop.f32.mrb[0].mxu0
    %v818 = vadd.f32 %v573, %v817
    %v819 = vpop.f32.mrb[0].mxu0
    %820 = vdwg.mxu0
    %v821 = vlaneseq
    %v822 = vshrl.u32 %v821, 7
    %v823 = vlaneseq
    %v824 = vand.u32 %v823, 127
    %v825 = vmul.u32 %v822, 2
    %vm826 = vcmp.eq.s32.totalorder %v824, %v825
    %v827 = vsel %vm826, 1, 0
    %v828 = vcvt.s32.f32 %v827
    %v829 = vadd.s32 %v825, 1
    %vm830 = vcmp.eq.s32.totalorder %v824, %v829
    %v831 = vsel %vm830, 1, 0
    %v832 = vcvt.s32.f32 %v831
    %v834 = vsel %vm320, %v813, 0
    %v837 = vsel %vm320, %v818, 0
    %839 = vmatprep.subr.mxu0 0.0
    %840 = vmatpush1.msra.mxu0 %v832
    %841 = vmatprep.subr.mxu0 0.0
    %842 = vmatpush1.msra.mxu0 0.0
    %843 = vmatprep.subr.mxu0 0.0
    %844 = vmatpush1.msra.mxu0 0.0
    %845 = vmatprep.subr.mxu0 0.0
    %846 = vmatpush1.msra.mxu0 0.0
    %847 = vmatprep.subr.mxu0 0.0
    %848 = vmatpush1.msra.mxu0 0.0
    %849 = vmatprep.subr.mxu0 0.0
    %850 = vmatpush1.msra.mxu0 0.0
    %851 = vmatprep.subr.mxu0 0.0
    %852 = vmatpush1.msra.mxu0 0.0
    %853 = vmatprep.subr.mxu0 0.0
    %854 = vmatpush1.msra.mxu0 0.0
    %855 = vmatprep.subr.mxu0 0.0
    %856 = vmatpush1.msra.mxu0 0.0
    %857 = vmatprep.subr.mxu0 0.0
    %858 = vmatpush1.msra.mxu0 0.0
    %859 = vmatprep.subr.mxu0 0.0
    %860 = vmatpush1.msra.mxu0 0.0
    %861 = vmatprep.subr.mxu0 0.0
    %862 = vmatpush1.msra.mxu0 0.0
    %863 = vmatprep.subr.mxu0 0.0
    %864 = vmatpush1.msra.mxu0 0.0
    %865 = vmatprep.subr.mxu0 0.0
    %866 = vmatpush1.msra.mxu0 0.0
    %867 = vmatprep.subr.mxu0 0.0
    %868 = vmatpush1.msra.mxu0 0.0
    %869 = vmatprep.subr.mxu0 0.0
    %870 = vmatpush1.msra.mxu0 0.0
    %871 = vmatprep.subr.mxu0 0.0
    %872 = vmatpush1.msra.mxu0 0.0
    %873 = vmatprep.subr.mxu0 0.0
    %874 = vmatpush1.msra.mxu0 0.0
    %875 = vmatprep.subr.mxu0 0.0
    %876 = vmatpush1.msra.mxu0 0.0
    %877 = vmatprep.subr.mxu0 0.0
    %878 = vmatpush1.msra.mxu0 0.0
    %879 = vmatprep.subr.mxu0 0.0
    %880 = vmatpush1.msra.mxu0 0.0
    %881 = vmatprep.subr.mxu0 0.0
    %882 = vmatpush1.msra.mxu0 0.0
    %883 = vmatprep.subr.mxu0 0.0
    %884 = vmatpush1.msra.mxu0 0.0
    %885 = vmatprep.subr.mxu0 0.0
    %886 = vmatpush1.msra.mxu0 0.0
    %887 = vmatprep.subr.mxu0 0.0
    %888 = vmatpush1.msra.mxu0 0.0
    %889 = vmatprep.subr.mxu0 0.0
    %890 = vmatpush1.msra.mxu0 0.0
    %891 = vmatprep.subr.mxu0 0.0
    %892 = vmatpush1.msra.mxu0 0.0
    %893 = vmatprep.subr.mxu0 0.0
    %894 = vmatpush1.msra.mxu0 0.0
    %895 = vmatprep.subr.mxu0 0.0
    %896 = vmatpush1.msra.mxu0 0.0
    %897 = vmatprep.subr.mxu0 0.0
    %898 = vmatpush1.msra.mxu0 0.0
    %899 = vmatprep.subr.mxu0 0.0
    %900 = vmatpush1.msra.mxu0 0.0
    %901 = vmatprep.subr.mxu0 0.0
    %902 = vmatpush1.msra.mxu0 0.0
    %903 = vmatprep.mubr.f32.mxu0 0.0
    %904 = vmatmul.mubr.f32.gmra.mrb[0].mxu0 %v834
    %v905 = vpop.f32.mrb[0].mxu0
    %v906 = vadd.f32 0.0, %v905
    %v907 = vpop.f32.mrb[0].mxu0
    %908 = vmatprep.mubr.f32.mxu0 0.0
    %909 = vmatmul.mubr.f32.gmra.mrb[0].mxu0 %v837
    %v910 = vpop.f32.mrb[0].mxu0
    %v911 = vadd.f32 0.0, %v910
    %v912 = vpop.f32.mrb[0].mxu0
    %913 = vdwg.mxu0
    %v915 = vsel %vm320, %v649, 0
    %v918 = vsel %vm320, %v654, 0
    %920 = vmatprep.subr.mxu0 0.0
    %921 = vmatpush1.msra.mxu0 %v828
    %922 = vmatprep.subr.mxu0 0.0
    %923 = vmatpush1.msra.mxu0 0.0
    %924 = vmatprep.subr.mxu0 0.0
    %925 = vmatpush1.msra.mxu0 0.0
    %926 = vmatprep.subr.mxu0 0.0
    %927 = vmatpush1.msra.mxu0 0.0
    %928 = vmatprep.subr.mxu0 0.0
    %929 = vmatpush1.msra.mxu0 0.0
    %930 = vmatprep.subr.mxu0 0.0
    %931 = vmatpush1.msra.mxu0 0.0
    %932 = vmatprep.subr.mxu0 0.0
    %933 = vmatpush1.msra.mxu0 0.0
    %934 = vmatprep.subr.mxu0 0.0
    %935 = vmatpush1.msra.mxu0 0.0
    %936 = vmatprep.subr.mxu0 0.0
    %937 = vmatpush1.msra.mxu0 0.0
    %938 = vmatprep.subr.mxu0 0.0
    %939 = vmatpush1.msra.mxu0 0.0
    %940 = vmatprep.subr.mxu0 0.0
    %941 = vmatpush1.msra.mxu0 0.0
    %942 = vmatprep.subr.mxu0 0.0
    %943 = vmatpush1.msra.mxu0 0.0
    %944 = vmatprep.subr.mxu0 0.0
    %945 = vmatpush1.msra.mxu0 0.0
    %946 = vmatprep.subr.mxu0 0.0
    %947 = vmatpush1.msra.mxu0 0.0
    %948 = vmatprep.subr.mxu0 0.0
    %949 = vmatpush1.msra.mxu0 0.0
    %950 = vmatprep.subr.mxu0 0.0
    %951 = vmatpush1.msra.mxu0 0.0
    %952 = vmatprep.subr.mxu0 0.0
    %953 = vmatpush1.msra.mxu0 0.0
    %954 = vmatprep.subr.mxu0 0.0
    %955 = vmatpush1.msra.mxu0 0.0
    %956 = vmatprep.subr.mxu0 0.0
    %957 = vmatpush1.msra.mxu0 0.0
    %958 = vmatprep.subr.mxu0 0.0
    %959 = vmatpush1.msra.mxu0 0.0
    %960 = vmatprep.subr.mxu0 0.0
    %961 = vmatpush1.msra.mxu0 0.0
    %962 = vmatprep.subr.mxu0 0.0
    %963 = vmatpush1.msra.mxu0 0.0
    %964 = vmatprep.subr.mxu0 0.0
    %965 = vmatpush1.msra.mxu0 0.0
    %966 = vmatprep.subr.mxu0 0.0
    %967 = vmatpush1.msra.mxu0 0.0
    %968 = vmatprep.subr.mxu0 0.0
    %969 = vmatpush1.msra.mxu0 0.0
    %970 = vmatprep.subr.mxu0 0.0
    %971 = vmatpush1.msra.mxu0 0.0
    %972 = vmatprep.subr.mxu0 0.0
    %973 = vmatpush1.msra.mxu0 0.0
    %974 = vmatprep.subr.mxu0 0.0
    %975 = vmatpush1.msra.mxu0 0.0
    %976 = vmatprep.subr.mxu0 0.0
    %977 = vmatpush1.msra.mxu0 0.0
    %978 = vmatprep.subr.mxu0 0.0
    %979 = vmatpush1.msra.mxu0 0.0
    %980 = vmatprep.subr.mxu0 0.0
    %981 = vmatpush1.msra.mxu0 0.0
    %982 = vmatprep.subr.mxu0 0.0
    %983 = vmatpush1.msra.mxu0 0.0
    %984 = vmatprep.mubr.f32.mxu0 0.0
    %985 = vmatmul.mubr.f32.gmra.mrb[0].mxu0 %v915
    %v986 = vpop.f32.mrb[0].mxu0
    %v987 = vadd.f32 %v906, %v986
    %v988 = vpop.f32.mrb[0].mxu0
    %989 = vmatprep.mubr.f32.mxu0 0.0
    %990 = vmatmul.mubr.f32.gmra.mrb[0].mxu0 %v918
    %v991 = vpop.f32.mrb[0].mxu0
    %v992 = vadd.f32 %v911, %v991
    %v993 = vpop.f32.mrb[0].mxu0
    %994 = vdwg.mxu0
    %995 = vrot.lane.b32.xlu0 %v813, 120
    %v996 = vpop.permute.xlu0 %995
    %997 = vrot.lane.b32.xlu0 %v818, 120
    %v998 = vpop.permute.xlu0 %997
    %v999 = vsel %vm320, %v996, 0
    %v1001 = vsel %vm320, %v998, 0
    %1003 = vmatprep.subr.mxu0 0.0
    %1004 = vmatpush1.msra.mxu0 %v832
    %1005 = vmatprep.subr.mxu0 0.0
    %1006 = vmatpush1.msra.mxu0 0.0
    %1007 = vmatprep.subr.mxu0 0.0
    %1008 = vmatpush1.msra.mxu0 0.0
    %1009 = vmatprep.subr.mxu0 0.0
    %1010 = vmatpush1.msra.mxu0 0.0
    %1011 = vmatprep.subr.mxu0 0.0
    %1012 = vmatpush1.msra.mxu0 0.0
    %1013 = vmatprep.subr.mxu0 0.0
    %1014 = vmatpush1.msra.mxu0 0.0
    %1015 = vmatprep.subr.mxu0 0.0
    %1016 = vmatpush1.msra.mxu0 0.0
    %1017 = vmatprep.subr.mxu0 0.0
    %1018 = vmatpush1.msra.mxu0 0.0
    %1019 = vmatprep.subr.mxu0 0.0
    %1020 = vmatpush1.msra.mxu0 0.0
    %1021 = vmatprep.subr.mxu0 0.0
    %1022 = vmatpush1.msra.mxu0 0.0
    %1023 = vmatprep.subr.mxu0 0.0
    %1024 = vmatpush1.msra.mxu0 0.0
    %1025 = vmatprep.subr.mxu0 0.0
    %1026 = vmatpush1.msra.mxu0 0.0
    %1027 = vmatprep.subr.mxu0 0.0
    %1028 = vmatpush1.msra.mxu0 0.0
    %1029 = vmatprep.subr.mxu0 0.0
    %1030 = vmatpush1.msra.mxu0 0.0
    %1031 = vmatprep.subr.mxu0 0.0
    %1032 = vmatpush1.msra.mxu0 0.0
    %1033 = vmatprep.subr.mxu0 0.0
    %1034 = vmatpush1.msra.mxu0 0.0
    %1035 = vmatprep.subr.mxu0 0.0
    %1036 = vmatpush1.msra.mxu0 0.0
    %1037 = vmatprep.subr.mxu0 0.0
    %1038 = vmatpush1.msra.mxu0 0.0
    %1039 = vmatprep.subr.mxu0 0.0
    %1040 = vmatpush1.msra.mxu0 0.0
    %1041 = vmatprep.subr.mxu0 0.0
    %1042 = vmatpush1.msra.mxu0 0.0
    %1043 = vmatprep.subr.mxu0 0.0
    %1044 = vmatpush1.msra.mxu0 0.0
    %1045 = vmatprep.subr.mxu0 0.0
    %1046 = vmatpush1.msra.mxu0 0.0
    %1047 = vmatprep.subr.mxu0 0.0
    %1048 = vmatpush1.msra.mxu0 0.0
    %1049 = vmatprep.subr.mxu0 0.0
    %1050 = vmatpush1.msra.mxu0 0.0
    %1051 = vmatprep.subr.mxu0 0.0
    %1052 = vmatpush1.msra.mxu0 0.0
    %1053 = vmatprep.subr.mxu0 0.0
    %1054 = vmatpush1.msra.mxu0 0.0
    %1055 = vmatprep.subr.mxu0 0.0
    %1056 = vmatpush1.msra.mxu0 0.0
    %1057 = vmatprep.subr.mxu0 0.0
    %1058 = vmatpush1.msra.mxu0 0.0
    %1059 = vmatprep.subr.mxu0 0.0
    %1060 = vmatpush1.msra.mxu0 0.0
    %1061 = vmatprep.subr.mxu0 0.0
    %1062 = vmatpush1.msra.mxu0 0.0
    %1063 = vmatprep.subr.mxu0 0.0
    %1064 = vmatpush1.msra.mxu0 0.0
    %1065 = vmatprep.subr.mxu0 0.0
    %1066 = vmatpush1.msra.mxu0 0.0
    %1067 = vmatprep.mubr.f32.mxu0 0.0
    %1068 = vmatmul.mubr.f32.gmra.mrb[0].mxu0 %v999
    %v1069 = vpop.f32.mrb[0].mxu0
    %v1070 = vadd.f32 0.0, %v1069
    %v1071 = vpop.f32.mrb[0].mxu0
    %1072 = vmatprep.mubr.f32.mxu0 0.0
    %1073 = vmatmul.mubr.f32.gmra.mrb[0].mxu0 %v1001
    %v1074 = vpop.f32.mrb[0].mxu0
    %v1075 = vadd.f32 0.0, %v1074
    %v1076 = vpop.f32.mrb[0].mxu0
    %1077 = vdwg.mxu0
    %1078 = vrot.lane.b32.xlu0 %v649, 120
    %v1079 = vpop.permute.xlu0 %1078
    %1080 = vrot.lane.b32.xlu0 %v654, 120
    %v1081 = vpop.permute.xlu0 %1080
    %v1082 = vsel %vm320, %v1079, 0
    %v1084 = vsel %vm320, %v1081, 0
    %1086 = vmatprep.subr.mxu0 0.0
    %1087 = vmatpush1.msra.mxu0 %v828
    %1088 = vmatprep.subr.mxu0 0.0
    %1089 = vmatpush1.msra.mxu0 0.0
    %1090 = vmatprep.subr.mxu0 0.0
    %1091 = vmatpush1.msra.mxu0 0.0
    %1092 = vmatprep.subr.mxu0 0.0
    %1093 = vmatpush1.msra.mxu0 0.0
    %1094 = vmatprep.subr.mxu0 0.0
    %1095 = vmatpush1.msra.mxu0 0.0
    %1096 = vmatprep.subr.mxu0 0.0
    %1097 = vmatpush1.msra.mxu0 0.0
    %1098 = vmatprep.subr.mxu0 0.0
    %1099 = vmatpush1.msra.mxu0 0.0
    %1100 = vmatprep.subr.mxu0 0.0
    %1101 = vmatpush1.msra.mxu0 0.0
    %1102 = vmatprep.subr.mxu0 0.0
    %1103 = vmatpush1.msra.mxu0 0.0
    %1104 = vmatprep.subr.mxu0 0.0
    %1105 = vmatpush1.msra.mxu0 0.0
    %1106 = vmatprep.subr.mxu0 0.0
    %1107 = vmatpush1.msra.mxu0 0.0
    %1108 = vmatprep.subr.mxu0 0.0
    %1109 = vmatpush1.msra.mxu0 0.0
    %1110 = vmatprep.subr.mxu0 0.0
    %1111 = vmatpush1.msra.mxu0 0.0
    %1112 = vmatprep.subr.mxu0 0.0
    %1113 = vmatpush1.msra.mxu0 0.0
    %1114 = vmatprep.subr.mxu0 0.0
    %1115 = vmatpush1.msra.mxu0 0.0
    %1116 = vmatprep.subr.mxu0 0.0
    %1117 = vmatpush1.msra.mxu0 0.0
    %1118 = vmatprep.subr.mxu0 0.0
    %1119 = vmatpush1.msra.mxu0 0.0
    %1120 = vmatprep.subr.mxu0 0.0
    %1121 = vmatpush1.msra.mxu0 0.0
    %1122 = vmatprep.subr.mxu0 0.0
    %1123 = vmatpush1.msra.mxu0 0.0
    %1124 = vmatprep.subr.mxu0 0.0
    %1125 = vmatpush1.msra.mxu0 0.0
    %1126 = vmatprep.subr.mxu0 0.0
    %1127 = vmatpush1.msra.mxu0 0.0
    %1128 = vmatprep.subr.mxu0 0.0
    %1129 = vmatpush1.msra.mxu0 0.0
    %1130 = vmatprep.subr.mxu0 0.0
    %1131 = vmatpush1.msra.mxu0 0.0
    %1132 = vmatprep.subr.mxu0 0.0
    %1133 = vmatpush1.msra.mxu0 0.0
    %1134 = vmatprep.subr.mxu0 0.0
    %1135 = vmatpush1.msra.mxu0 0.0
    %1136 = vmatprep.subr.mxu0 0.0
    %1137 = vmatpush1.msra.mxu0 0.0
    %1138 = vmatprep.subr.mxu0 0.0
    %1139 = vmatpush1.msra.mxu0 0.0
    %1140 = vmatprep.subr.mxu0 0.0
    %1141 = vmatpush1.msra.mxu0 0.0
    %1142 = vmatprep.subr.mxu0 0.0
    %1143 = vmatpush1.msra.mxu0 0.0
    %1144 = vmatprep.subr.mxu0 0.0
    %1145 = vmatpush1.msra.mxu0 0.0
    %1146 = vmatprep.subr.mxu0 0.0
    %1147 = vmatpush1.msra.mxu0 0.0
    %1148 = vmatprep.subr.mxu0 0.0
    %1149 = vmatpush1.msra.mxu0 0.0
    %1150 = vmatprep.mubr.f32.mxu0 0.0
    %1151 = vmatmul.mubr.f32.gmra.mrb[0].mxu0 %v1082
    %v1152 = vpop.f32.mrb[0].mxu0
    %v1153 = vadd.f32 %v1070, %v1152
    %v1154 = vpop.f32.mrb[0].mxu0
    %1155 = vmatprep.mubr.f32.mxu0 0.0
    %1156 = vmatmul.mubr.f32.gmra.mrb[0].mxu0 %v1084
    %v1157 = vpop.f32.mrb[0].mxu0
    %v1158 = vadd.f32 %v1075, %v1157
    %v1159 = vpop.f32.mrb[0].mxu0
    %1160 = vdwg.mxu0
    %vm1161 = vcmp.ge.f32.partialorder %v987, 0.0
    %vm1162 = vcmp.ge.f32.partialorder %v992, 0.0
    %v1163 = vmul.f32 %v987, 0.2
    %v1164 = vmul.f32 %v992, 0.2
    %v1165 = vsel %vm1161, %v987, %v1163
    %v1166 = vsel %vm1162, %v992, %v1164
    %1169 = vrot.lane.b32.xlu0 %v1165, 127
    %v1170 = vpop.permute.xlu0 %1169
    %1171 = vrot.lane.b32.xlu0 %v1166, 127
    %v1172 = vpop.permute.xlu0 %1171
    %1175 = vrot.lane.b32.xlu0 %v1165, 1
    %v1176 = vpop.permute.xlu0 %1175
    %1177 = vrot.lane.b32.xlu0 %v1166, 1
    %v1178 = vpop.permute.xlu0 %1177
    %1181 = vrot.lane.b32.xlu0 %v1165, 3
    %v1182 = vpop.permute.xlu0 %1181
    %1183 = vrot.lane.b32.xlu0 %v1166, 3
    %v1184 = vpop.permute.xlu0 %1183
    %v1187 = vsel %vm132, %v1170, %v1176
    %v1188 = vsel %vm132, %v1172, %v1178
    %vm1189 = vcmask 138240
    %v1190 = vsel %vm1189, %v1187, %v1182
    %v1191 = vsel %vm1189, %v1188, %v1184
    %vm1192 = vcmp.ge.f32.partialorder %v1153, 0.0
    %vm1193 = vcmp.ge.f32.partialorder %v1158, 0.0
    %v1194 = vmul.f32 %v1153, 0.2
    %v1195 = vmul.f32 %v1158, 0.2
    %v1196 = vsel %vm1192, %v1153, %v1194
    %v1197 = vsel %vm1193, %v1158, %v1195
    %1200 = vrot.lane.b32.xlu0 %v1196, 127
    %v1201 = vpop.permute.xlu0 %1200
    %1202 = vrot.lane.b32.xlu0 %v1197, 127
    %v1203 = vpop.permute.xlu0 %1202
    %1206 = vrot.lane.b32.xlu0 %v1196, 1
    %v1207 = vpop.permute.xlu0 %1206
    %1208 = vrot.lane.b32.xlu0 %v1197, 1
    %v1209 = vpop.permute.xlu0 %1208
    %1212 = vrot.lane.b32.xlu0 %v1196, 3
    %v1213 = vpop.permute.xlu0 %1212
    %1214 = vrot.lane.b32.xlu0 %v1197, 3
    %v1215 = vpop.permute.xlu0 %1214
    %v1218 = vsel %vm132, %v1201, %v1207
    %v1219 = vsel %vm132, %v1203, %v1209
    %v1220 = vsel %vm1189, %v1218, %v1213
    %v1221 = vsel %vm1189, %v1219, %v1215
    %v1222 = vld [vmem:[%s5] sm:$0xff]
    %v1223 = vld [vmem:[%s5 + $0x8] sm:$0xff]
    %v1224 = vld [vmem:[%s6] sm:$0xff]
    %v1225 = vld [vmem:[%s6 + $0x8] sm:$0xff]
    %1228 = vrot.lane.b32.xlu0 %v1190, 127
    %v1229 = vpop.permute.xlu0 %1228
    %1230 = vrot.lane.b32.xlu0 %v1191, 127
    %v1231 = vpop.permute.xlu0 %1230
    %1234 = vrot.lane.b32.xlu0 %v1190, 126
    %v1235 = vpop.permute.xlu0 %1234
    %1236 = vrot.lane.b32.xlu0 %v1191, 126
    %v1237 = vpop.permute.xlu0 %1236
    %1242 = vrot.lane.b32.xlu0 %v1220, 127
    %v1243 = vpop.permute.xlu0 %1242
    %1244 = vrot.lane.b32.xlu0 %v1221, 127
    %v1245 = vpop.permute.xlu0 %1244
    %1246 = vrot.lane.b32.xlu0 %v1220, 126
    %v1247 = vpop.permute.xlu0 %1246
    %1248 = vrot.lane.b32.xlu0 %v1221, 126
    %v1249 = vpop.permute.xlu0 %1248
    %1250 = vrot.lane.b32.xlu0 %v1220, 16
    %v1251 = vpop.permute.xlu0 %1250
    %1252 = vrot.lane.b32.xlu0 %v1221, 16
    %v1253 = vpop.permute.xlu0 %1252
    %1254 = vrot.lane.b32.xlu0 %v1243, 16
    %v1255 = vpop.permute.xlu0 %1254
    %1256 = vrot.lane.b32.xlu0 %v1245, 16
    %v1257 = vpop.permute.xlu0 %1256
    %1258 = vrot.lane.b32.xlu0 %v1247, 16
    %v1259 = vpop.permute.xlu0 %1258
    %1260 = vrot.lane.b32.xlu0 %v1249, 16
    %v1261 = vpop.permute.xlu0 %1260
    %vm1268 = vcmask 130048
    %v1269 = vsel %vm1268, %v1190, %v1251
    %v1270 = vsel %vm1268, %v1191, %v1253
    %v1271 = vsel %vm1268, %v1229, %v1255
    %v1272 = vsel %vm1268, %v1231, %v1257
    %v1273 = vsel %vm1268, %v1235, %v1259
    %v1274 = vsel %vm1268, %v1237, %v1261
    %1276 = vset.pattern.permute.xlu0 0
    %1277 = vperm.xlu0 %1276, %v1224
    %v1278 = vpop.permute.xlu0 %1277
    %1281 = vset.pattern.permute.xlu0 0
    %1282 = vperm.xlu0 %1281, %v1225
    %v1283 = vpop.permute.xlu0 %1282
    %vm1285 = vcmask 392192
    %v1287 = vsel %vm1285, %v1222, 0
    %v1290 = vsel %vm1285, %v1223, 0
    %1292 = vmatprep.subr.mxu0 0.0
    %1293 = vmatpush1.msra.mxu0 %v1269
    %1294 = vmatprep.subr.mxu0 0.0
    %1295 = vmatpush1.msra.mxu0 %v1270
    %1296 = vmatprep.subr.mxu0 0.0
    %1297 = vmatpush1.msra.mxu0 %v1271
    %1298 = vmatprep.subr.mxu0 0.0
    %1299 = vmatpush1.msra.mxu0 %v1272
    %1300 = vmatprep.subr.mxu0 0.0
    %1301 = vmatpush1.msra.mxu0 %v1273
    %1302 = vmatprep.subr.mxu0 0.0
    %1303 = vmatpush1.msra.mxu0 %v1274
    %1304 = vmatprep.subr.mxu0 0.0
    %1305 = vmatpush1.msra.mxu0 0.0
    %1306 = vmatprep.subr.mxu0 0.0
    %1307 = vmatpush1.msra.mxu0 0.0
    %1308 = vmatprep.subr.mxu0 0.0
    %1309 = vmatpush1.msra.mxu0 0.0
    %1310 = vmatprep.subr.mxu0 0.0
    %1311 = vmatpush1.msra.mxu0 0.0
    %1312 = vmatprep.subr.mxu0 0.0
    %1313 = vmatpush1.msra.mxu0 0.0
    %1314 = vmatprep.subr.mxu0 0.0
    %1315 = vmatpush1.msra.mxu0 0.0
    %1316 = vmatprep.subr.mxu0 0.0
    %1317 = vmatpush1.msra.mxu0 0.0
    %1318 = vmatprep.subr.mxu0 0.0
    %1319 = vmatpush1.msra.mxu0 0.0
    %1320 = vmatprep.subr.mxu0 0.0
    %1321 = vmatpush1.msra.mxu0 0.0
    %1322 = vmatprep.subr.mxu0 0.0
    %1323 = vmatpush1.msra.mxu0 0.0
    %1324 = vmatprep.subr.mxu0 0.0
    %1325 = vmatpush1.msra.mxu0 0.0
    %1326 = vmatprep.subr.mxu0 0.0
    %1327 = vmatpush1.msra.mxu0 0.0
    %1328 = vmatprep.subr.mxu0 0.0
    %1329 = vmatpush1.msra.mxu0 0.0
    %1330 = vmatprep.subr.mxu0 0.0
    %1331 = vmatpush1.msra.mxu0 0.0
    %1332 = vmatprep.subr.mxu0 0.0
    %1333 = vmatpush1.msra.mxu0 0.0
    %1334 = vmatprep.subr.mxu0 0.0
    %1335 = vmatpush1.msra.mxu0 0.0
    %1336 = vmatprep.subr.mxu0 0.0
    %1337 = vmatpush1.msra.mxu0 0.0
    %1338 = vmatprep.subr.mxu0 0.0
    %1339 = vmatpush1.msra.mxu0 0.0
    %1340 = vmatprep.subr.mxu0 0.0
    %1341 = vmatpush1.msra.mxu0 0.0
    %1342 = vmatprep.subr.mxu0 0.0
    %1343 = vmatpush1.msra.mxu0 0.0
    %1344 = vmatprep.subr.mxu0 0.0
    %1345 = vmatpush1.msra.mxu0 0.0
    %1346 = vmatprep.subr.mxu0 0.0
    %1347 = vmatpush1.msra.mxu0 0.0
    %1348 = vmatprep.subr.mxu0 0.0
    %1349 = vmatpush1.msra.mxu0 0.0
    %1350 = vmatprep.subr.mxu0 0.0
    %1351 = vmatpush1.msra.mxu0 0.0
    %1352 = vmatprep.subr.mxu0 0.0
    %1353 = vmatpush1.msra.mxu0 0.0
    %1354 = vmatprep.subr.mxu0 0.0
    %1355 = vmatpush1.msra.mxu0 0.0
    %1356 = vmatprep.mubr.f32.mxu0 0.0
    %1357 = vmatmul.mubr.f32.gmra.mrb[0].mxu0 %v1287
    %v1358 = vpop.f32.mrb[0].mxu0
    %v1359 = vadd.f32 %v1278, %v1358
    %v1360 = vpop.f32.mrb[0].mxu0
    %1361 = vmatprep.mubr.f32.mxu0 0.0
    %1362 = vmatmul.mubr.f32.gmra.mrb[0].mxu0 %v1290
    %v1363 = vpop.f32.mrb[0].mxu0
    %v1364 = vadd.f32 %v1283, %v1363
    %v1365 = vpop.f32.mrb[0].mxu0
    %1366 = vdwg.mxu0
    %vm1367 = vcmp.ge.f32.partialorder %v1359, 0.0
    %vm1368 = vcmp.ge.f32.partialorder %v1364, 0.0
    %v1369 = vmul.f32 %v1359, 0.2
    %v1370 = vmul.f32 %v1364, 0.2
    %v1371 = vsel %vm1367, %v1359, %v1369
    %v1372 = vsel %vm1368, %v1364, %v1370
    %1375 = vrot.lane.b32.xlu0 %v1153, 16
    %v1376 = vpop.permute.xlu0 %1375
    %1377 = vrot.lane.b32.xlu0 %v1158, 16
    %v1378 = vpop.permute.xlu0 %1377
    %v1381 = vld [vmem:[%s7] sm:$0xff]
    %v1382 = vld [vmem:[%s7 + $0x8] sm:$0xff]
    %v1383 = vld [vmem:[%s8] sm:$0xff]
    %v1384 = vld [vmem:[%s8 + $0x8] sm:$0xff]
    %v1385 = vsel %vm1268, %v987, %v1376
    %v1386 = vsel %vm1268, %v992, %v1378
    %1388 = vset.pattern.permute.xlu0 0
    %1389 = vperm.xlu0 %1388, %v1383
    %v1390 = vpop.permute.xlu0 %1389
    %1393 = vset.pattern.permute.xlu0 0
    %1394 = vperm.xlu0 %1393, %v1384
    %v1395 = vpop.permute.xlu0 %1394
    %vm1397 = vcmask 261120
    %v1399 = vsel %vm1397, %v1381, 0
    %v1402 = vsel %vm1397, %v1382, 0
    %1404 = vmatprep.subr.mxu0 0.0
    %1405 = vmatpush1.msra.mxu0 %v1371
    %1406 = vmatprep.subr.mxu0 0.0
    %1407 = vmatpush1.msra.mxu0 %v1372
    %1408 = vmatprep.subr.mxu0 0.0
    %1409 = vmatpush1.msra.mxu0 %v1385
    %1410 = vmatprep.subr.mxu0 0.0
    %1411 = vmatpush1.msra.mxu0 %v1386
    %1412 = vmatprep.subr.mxu0 0.0
    %1413 = vmatpush1.msra.mxu0 0.0
    %1414 = vmatprep.subr.mxu0 0.0
    %1415 = vmatpush1.msra.mxu0 0.0
    %1416 = vmatprep.subr.mxu0 0.0
    %1417 = vmatpush1.msra.mxu0 0.0
    %1418 = vmatprep.subr.mxu0 0.0
    %1419 = vmatpush1.msra.mxu0 0.0
    %1420 = vmatprep.subr.mxu0 0.0
    %1421 = vmatpush1.msra.mxu0 0.0
    %1422 = vmatprep.subr.mxu0 0.0
    %1423 = vmatpush1.msra.mxu0 0.0
    %1424 = vmatprep.subr.mxu0 0.0
    %1425 = vmatpush1.msra.mxu0 0.0
    %1426 = vmatprep.subr.mxu0 0.0
    %1427 = vmatpush1.msra.mxu0 0.0
    %1428 = vmatprep.subr.mxu0 0.0
    %1429 = vmatpush1.msra.mxu0 0.0
    %1430 = vmatprep.subr.mxu0 0.0
    %1431 = vmatpush1.msra.mxu0 0.0
    %1432 = vmatprep.subr.mxu0 0.0
    %1433 = vmatpush1.msra.mxu0 0.0
    %1434 = vmatprep.subr.mxu0 0.0
    %1435 = vmatpush1.msra.mxu0 0.0
    %1436 = vmatprep.subr.mxu0 0.0
    %1437 = vmatpush1.msra.mxu0 0.0
    %1438 = vmatprep.subr.mxu0 0.0
    %1439 = vmatpush1.msra.mxu0 0.0
    %1440 = vmatprep.subr.mxu0 0.0
    %1441 = vmatpush1.msra.mxu0 0.0
    %1442 = vmatprep.subr.mxu0 0.0
    %1443 = vmatpush1.msra.mxu0 0.0
    %1444 = vmatprep.subr.mxu0 0.0
    %1445 = vmatpush1.msra.mxu0 0.0
    %1446 = vmatprep.subr.mxu0 0.0
    %1447 = vmatpush1.msra.mxu0 0.0
    %1448 = vmatprep.subr.mxu0 0.0
    %1449 = vmatpush1.msra.mxu0 0.0
    %1450 = vmatprep.subr.mxu0 0.0
    %1451 = vmatpush1.msra.mxu0 0.0
    %1452 = vmatprep.subr.mxu0 0.0
    %1453 = vmatpush1.msra.mxu0 0.0
    %1454 = vmatprep.subr.mxu0 0.0
    %1455 = vmatpush1.msra.mxu0 0.0
    %1456 = vmatprep.subr.mxu0 0.0
    %1457 = vmatpush1.msra.mxu0 0.0
    %1458 = vmatprep.subr.mxu0 0.0
    %1459 = vmatpush1.msra.mxu0 0.0
    %1460 = vmatprep.subr.mxu0 0.0
    %1461 = vmatpush1.msra.mxu0 0.0
    %1462 = vmatprep.subr.mxu0 0.0
    %1463 = vmatpush1.msra.mxu0 0.0
    %1464 = vmatprep.subr.mxu0 0.0
    %1465 = vmatpush1.msra.mxu0 0.0
    %1466 = vmatprep.subr.mxu0 0.0
    %1467 = vmatpush1.msra.mxu0 0.0
    %1468 = vmatprep.mubr.f32.mxu0 0.0
    %1469 = vmatmul.mubr.f32.gmra.mrb[0].mxu0 %v1399
    %v1470 = vpop.f32.mrb[0].mxu0
    %v1471 = vadd.f32 %v1390, %v1470
    %v1472 = vpop.f32.mrb[0].mxu0
    %1473 = vmatprep.mubr.f32.mxu0 0.0
    %1474 = vmatmul.mubr.f32.gmra.mrb[0].mxu0 %v1402
    %v1475 = vpop.f32.mrb[0].mxu0
    %v1476 = vadd.f32 %v1395, %v1475
    %v1477 = vpop.f32.mrb[0].mxu0
    %1478 = vdwg.mxu0
    %vm1479 = vcmp.ge.f32.partialorder %v1471, 0.0
    %vm1480 = vcmp.ge.f32.partialorder %v1476, 0.0
    %v1481 = vmul.f32 %v1471, 0.2
    %v1482 = vmul.f32 %v1476, 0.2
    %v1483 = vsel %vm1479, %v1471, %v1481
    %v1484 = vsel %vm1480, %v1476, %v1482
    %1487 = vrot.lane.b32.xlu0 %v1483, 125
    %v1488 = vpop.permute.xlu0 %1487
    %1489 = vrot.lane.b32.xlu0 %v1484, 125
    %v1490 = vpop.permute.xlu0 %1489
    %1493 = vrot.lane.b32.xlu0 %v1483, 127
    %v1494 = vpop.permute.xlu0 %1493
    %1495 = vrot.lane.b32.xlu0 %v1484, 127
    %v1496 = vpop.permute.xlu0 %1495
    %1499 = vrot.lane.b32.xlu0 %v1483, 1
    %v1500 = vpop.permute.xlu0 %1499
    %1501 = vrot.lane.b32.xlu0 %v1484, 1
    %v1502 = vpop.permute.xlu0 %1501
    %1505 = vrot.lane.b32.xlu0 %v1483, 3
    %v1506 = vpop.permute.xlu0 %1505
    %1507 = vrot.lane.b32.xlu0 %v1484, 3
    %v1508 = vpop.permute.xlu0 %1507
    %1511 = vrot.lane.b32.xlu0 %v1483, 5
    %v1512 = vpop.permute.xlu0 %1511
    %1513 = vrot.lane.b32.xlu0 %v1484, 5
    %v1514 = vpop.permute.xlu0 %1513
    %1517 = vrot.lane.b32.xlu0 %v1483, 7
    %v1518 = vpop.permute.xlu0 %1517
    %1519 = vrot.lane.b32.xlu0 %v1484, 7
    %v1520 = vpop.permute.xlu0 %1519
    %1523 = vrot.lane.b32.xlu0 %v1483, 9
    %v1524 = vpop.permute.xlu0 %1523
    %1525 = vrot.lane.b32.xlu0 %v1484, 9
    %v1526 = vpop.permute.xlu0 %1525
    %v1529 = vsel %vm132, %v1488, %v1494
    %v1530 = vsel %vm132, %v1490, %v1496
    %v1531 = vsel %vm135, %v1529, %v1500
    %v1532 = vsel %vm135, %v1530, %v1502
    %v1533 = vsel %vm138, %v1531, %v1506
    %v1534 = vsel %vm138, %v1532, %v1508
    %vm1535 = vcmask 154624
    %v1536 = vsel %vm1535, %v1533, %v1512
    %v1537 = vsel %vm1535, %v1534, %v1514
    %vm1538 = vcmask 162816
    %v1539 = vsel %vm1538, %v1536, %v1518
    %v1540 = vsel %vm1538, %v1537, %v1520
    %vm1541 = vcmask 171008
    %v1542 = vsel %vm1541, %v1539, %v1524
    %v1543 = vsel %vm1541, %v1540, %v1526
    %1544 = vrot.lane.b32.xlu0 %v1483, 109
    %v1545 = vpop.permute.xlu0 %1544
    %1546 = vrot.lane.b32.xlu0 %v1484, 109
    %v1547 = vpop.permute.xlu0 %1546
    %1550 = vrot.lane.b32.xlu0 %v1483, 111
    %v1551 = vpop.permute.xlu0 %1550
    %1552 = vrot.lane.b32.xlu0 %v1484, 111
    %v1553 = vpop.permute.xlu0 %1552
    %1556 = vrot.lane.b32.xlu0 %v1483, 113
    %v1557 = vpop.permute.xlu0 %1556
    %1558 = vrot.lane.b32.xlu0 %v1484, 113
    %v1559 = vpop.permute.xlu0 %1558
    %1562 = vrot.lane.b32.xlu0 %v1483, 115
    %v1563 = vpop.permute.xlu0 %1562
    %1564 = vrot.lane.b32.xlu0 %v1484, 115
    %v1565 = vpop.permute.xlu0 %1564
    %1568 = vrot.lane.b32.xlu0 %v1483, 117
    %v1569 = vpop.permute.xlu0 %1568
    %1570 = vrot.lane.b32.xlu0 %v1484, 117
    %v1571 = vpop.permute.xlu0 %1570
    %1574 = vrot.lane.b32.xlu0 %v1483, 119
    %v1575 = vpop.permute.xlu0 %1574
    %1576 = vrot.lane.b32.xlu0 %v1484, 119
    %v1577 = vpop.permute.xlu0 %1576
    %1580 = vrot.lane.b32.xlu0 %v1483, 121
    %v1581 = vpop.permute.xlu0 %1580
    %1582 = vrot.lane.b32.xlu0 %v1484, 121
    %v1583 = vpop.permute.xlu0 %1582
    %v1586 = vsel %vm132, %v1545, %v1551
    %v1587 = vsel %vm132, %v1547, %v1553
    %v1588 = vsel %vm135, %v1586, %v1557
    %v1589 = vsel %vm135, %v1587, %v1559
    %v1590 = vsel %vm138, %v1588, %v1563
    %v1591 = vsel %vm138, %v1589, %v1565
    %v1592 = vsel %vm1535, %v1590, %v1569
    %v1593 = vsel %vm1535, %v1591, %v1571
    %v1594 = vsel %vm1538, %v1592, %v1575
    %v1595 = vsel %vm1538, %v1593, %v1577
    %v1596 = vsel %vm1541, %v1594, %v1581
    %v1597 = vsel %vm1541, %v1595, %v1583
    %v1598 = vld [vmem:[%s9] sm:$0xff]
    %v1599 = vld [vmem:[%s9 + $0x8] sm:$0xff]
    %v1600 = vld [vmem:[%s10] sm:$0xff]
    %v1601 = vld [vmem:[%s10 + $0x8] sm:$0xff]
    %1604 = vrot.lane.b32.xlu0 %v1542, 125
    %v1605 = vpop.permute.xlu0 %1604
    %1606 = vrot.lane.b32.xlu0 %v1543, 125
    %v1607 = vpop.permute.xlu0 %1606
    %1610 = vrot.lane.b32.xlu0 %v1542, 122
    %v1611 = vpop.permute.xlu0 %1610
    %1612 = vrot.lane.b32.xlu0 %v1543, 122
    %v1613 = vpop.permute.xlu0 %1612
    %1618 = vrot.lane.b32.xlu0 %v1596, 125
    %v1619 = vpop.permute.xlu0 %1618
    %1620 = vrot.lane.b32.xlu0 %v1597, 125
    %v1621 = vpop.permute.xlu0 %1620
    %1622 = vrot.lane.b32.xlu0 %v1596, 122
    %v1623 = vpop.permute.xlu0 %1622
    %1624 = vrot.lane.b32.xlu0 %v1597, 122
    %v1625 = vpop.permute.xlu0 %1624
    %1626 = vrot.lane.b32.xlu0 %v1596, 16
    %v1627 = vpop.permute.xlu0 %1626
    %1628 = vrot.lane.b32.xlu0 %v1597, 16
    %v1629 = vpop.permute.xlu0 %1628
    %1630 = vrot.lane.b32.xlu0 %v1619, 16
    %v1631 = vpop.permute.xlu0 %1630
    %1632 = vrot.lane.b32.xlu0 %v1621, 16
    %v1633 = vpop.permute.xlu0 %1632
    %1634 = vrot.lane.b32.xlu0 %v1623, 16
    %v1635 = vpop.permute.xlu0 %1634
    %1636 = vrot.lane.b32.xlu0 %v1625, 16
    %v1637 = vpop.permute.xlu0 %1636
    %v1644 = vsel %vm1268, %v1542, %v1627
    %v1645 = vsel %vm1268, %v1543, %v1629
    %v1646 = vsel %vm1268, %v1605, %v1631
    %v1647 = vsel %vm1268, %v1607, %v1633
    %v1648 = vsel %vm1268, %v1611, %v1635
    %v1649 = vsel %vm1268, %v1613, %v1637
    %1651 = vset.pattern.permute.xlu0 0
    %1652 = vperm.xlu0 %1651, %v1600
    %v1653 = vpop.permute.xlu0 %1652
    %1656 = vset.pattern.permute.xlu0 0
    %1657 = vperm.xlu0 %1656, %v1601
    %v1658 = vpop.permute.xlu0 %1657
    %v1661 = vsel %vm1285, %v1598, 0
    %v1664 = vsel %vm1285, %v1599, 0
    %1666 = vmatprep.subr.mxu0 0.0
    %1667 = vmatpush1.msra.mxu0 %v1644
    %1668 = vmatprep.subr.mxu0 0.0
    %1669 = vmatpush1.msra.mxu0 %v1645
    %1670 = vmatprep.subr.mxu0 0.0
    %1671 = vmatpush1.msra.mxu0 %v1646
    %1672 = vmatprep.subr.mxu0 0.0
    %1673 = vmatpush1.msra.mxu0 %v1647
    %1674 = vmatprep.subr.mxu0 0.0
    %1675 = vmatpush1.msra.mxu0 %v1648
    %1676 = vmatprep.subr.mxu0 0.0
    %1677 = vmatpush1.msra.mxu0 %v1649
    %1678 = vmatprep.subr.mxu0 0.0
    %1679 = vmatpush1.msra.mxu0 0.0
    %1680 = vmatprep.subr.mxu0 0.0
    %1681 = vmatpush1.msra.mxu0 0.0
    %1682 = vmatprep.subr.mxu0 0.0
    %1683 = vmatpush1.msra.mxu0 0.0
    %1684 = vmatprep.subr.mxu0 0.0
    %1685 = vmatpush1.msra.mxu0 0.0
    %1686 = vmatprep.subr.mxu0 0.0
    %1687 = vmatpush1.msra.mxu0 0.0
    %1688 = vmatprep.subr.mxu0 0.0
    %1689 = vmatpush1.msra.mxu0 0.0
    %1690 = vmatprep.subr.mxu0 0.0
    %1691 = vmatpush1.msra.mxu0 0.0
    %1692 = vmatprep.subr.mxu0 0.0
    %1693 = vmatpush1.msra.mxu0 0.0
    %1694 = vmatprep.subr.mxu0 0.0
    %1695 = vmatpush1.msra.mxu0 0.0
    %1696 = vmatprep.subr.mxu0 0.0
    %1697 = vmatpush1.msra.mxu0 0.0
    %1698 = vmatprep.subr.mxu0 0.0
    %1699 = vmatpush1.msra.mxu0 0.0
    %1700 = vmatprep.subr.mxu0 0.0
    %1701 = vmatpush1.msra.mxu0 0.0
    %1702 = vmatprep.subr.mxu0 0.0
    %1703 = vmatpush1.msra.mxu0 0.0
    %1704 = vmatprep.subr.mxu0 0.0
    %1705 = vmatpush1.msra.mxu0 0.0
    %1706 = vmatprep.subr.mxu0 0.0
    %1707 = vmatpush1.msra.mxu0 0.0
    %1708 = vmatprep.subr.mxu0 0.0
    %1709 = vmatpush1.msra.mxu0 0.0
    %1710 = vmatprep.subr.mxu0 0.0
    %1711 = vmatpush1.msra.mxu0 0.0
    %1712 = vmatprep.subr.mxu0 0.0
    %1713 = vmatpush1.msra.mxu0 0.0
    %1714 = vmatprep.subr.mxu0 0.0
    %1715 = vmatpush1.msra.mxu0 0.0
    %1716 = vmatprep.subr.mxu0 0.0
    %1717 = vmatpush1.msra.mxu0 0.0
    %1718 = vmatprep.subr.mxu0 0.0
    %1719 = vmatpush1.msra.mxu0 0.0
    %1720 = vmatprep.subr.mxu0 0.0
    %1721 = vmatpush1.msra.mxu0 0.0
    %1722 = vmatprep.subr.mxu0 0.0
    %1723 = vmatpush1.msra.mxu0 0.0
    %1724 = vmatprep.subr.mxu0 0.0
    %1725 = vmatpush1.msra.mxu0 0.0
    %1726 = vmatprep.subr.mxu0 0.0
    %1727 = vmatpush1.msra.mxu0 0.0
    %1728 = vmatprep.subr.mxu0 0.0
    %1729 = vmatpush1.msra.mxu0 0.0
    %1730 = vmatprep.mubr.f32.mxu0 0.0
    %1731 = vmatmul.mubr.f32.gmra.mrb[0].mxu0 %v1661
    %v1732 = vpop.f32.mrb[0].mxu0
    %v1733 = vadd.f32 %v1653, %v1732
    %v1734 = vpop.f32.mrb[0].mxu0
    %1735 = vmatprep.mubr.f32.mxu0 0.0
    %1736 = vmatmul.mubr.f32.gmra.mrb[0].mxu0 %v1664
    %v1737 = vpop.f32.mrb[0].mxu0
    %v1738 = vadd.f32 %v1658, %v1737
    %v1739 = vpop.f32.mrb[0].mxu0
    %1740 = vdwg.mxu0
    %vm1741 = vcmp.ge.f32.partialorder %v1733, 0.0
    %vm1742 = vcmp.ge.f32.partialorder %v1738, 0.0
    %v1743 = vmul.f32 %v1733, 0.2
    %v1744 = vmul.f32 %v1738, 0.2
    %v1745 = vsel %vm1741, %v1733, %v1743
    %v1746 = vsel %vm1742, %v1738, %v1744
    %v1747 = vld [vmem:[%s11] sm:$0xff]
    %v1748 = vld [vmem:[%s11 + $0x8] sm:$0xff]
    %v1749 = vld [vmem:[%s12] sm:$0xff]
    %v1750 = vld [vmem:[%s12 + $0x8] sm:$0xff]
    %1752 = vset.pattern.permute.xlu0 0
    %1753 = vperm.xlu0 %1752, %v1749
    %v1754 = vpop.permute.xlu0 %1753
    %1757 = vset.pattern.permute.xlu0 0
    %1758 = vperm.xlu0 %1757, %v1750
    %v1759 = vpop.permute.xlu0 %1758
    %v1762 = vsel %vm1397, %v1747, 0
    %v1765 = vsel %vm1397, %v1748, 0
    %1767 = vmatprep.subr.mxu0 0.0
    %1768 = vmatpush1.msra.mxu0 %v1745
    %1769 = vmatprep.subr.mxu0 0.0
    %1770 = vmatpush1.msra.mxu0 %v1746
    %1771 = vmatprep.subr.mxu0 0.0
    %1772 = vmatpush1.msra.mxu0 %v1471
    %1773 = vmatprep.subr.mxu0 0.0
    %1774 = vmatpush1.msra.mxu0 %v1476
    %1775 = vmatprep.subr.mxu0 0.0
    %1776 = vmatpush1.msra.mxu0 0.0
    %1777 = vmatprep.subr.mxu0 0.0
    %1778 = vmatpush1.msra.mxu0 0.0
    %1779 = vmatprep.subr.mxu0 0.0
    %1780 = vmatpush1.msra.mxu0 0.0
    %1781 = vmatprep.subr.mxu0 0.0
    %1782 = vmatpush1.msra.mxu0 0.0
    %1783 = vmatprep.subr.mxu0 0.0
    %1784 = vmatpush1.msra.mxu0 0.0
    %1785 = vmatprep.subr.mxu0 0.0
    %1786 = vmatpush1.msra.mxu0 0.0
    %1787 = vmatprep.subr.mxu0 0.0
    %1788 = vmatpush1.msra.mxu0 0.0
    %1789 = vmatprep.subr.mxu0 0.0
    %1790 = vmatpush1.msra.mxu0 0.0
    %1791 = vmatprep.subr.mxu0 0.0
    %1792 = vmatpush1.msra.mxu0 0.0
    %1793 = vmatprep.subr.mxu0 0.0
    %1794 = vmatpush1.msra.mxu0 0.0
    %1795 = vmatprep.subr.mxu0 0.0
    %1796 = vmatpush1.msra.mxu0 0.0
    %1797 = vmatprep.subr.mxu0 0.0
    %1798 = vmatpush1.msra.mxu0 0.0
    %1799 = vmatprep.subr.mxu0 0.0
    %1800 = vmatpush1.msra.mxu0 0.0
    %1801 = vmatprep.subr.mxu0 0.0
    %1802 = vmatpush1.msra.mxu0 0.0
    %1803 = vmatprep.subr.mxu0 0.0
    %1804 = vmatpush1.msra.mxu0 0.0
    %1805 = vmatprep.subr.mxu0 0.0
    %1806 = vmatpush1.msra.mxu0 0.0
    %1807 = vmatprep.subr.mxu0 0.0
    %1808 = vmatpush1.msra.mxu0 0.0
    %1809 = vmatprep.subr.mxu0 0.0
    %1810 = vmatpush1.msra.mxu0 0.0
    %1811 = vmatprep.subr.mxu0 0.0
    %1812 = vmatpush1.msra.mxu0 0.0
    %1813 = vmatprep.subr.mxu0 0.0
    %1814 = vmatpush1.msra.mxu0 0.0
    %1815 = vmatprep.subr.mxu0 0.0
    %1816 = vmatpush1.msra.mxu0 0.0
    %1817 = vmatprep.subr.mxu0 0.0
    %1818 = vmatpush1.msra.mxu0 0.0
    %1819 = vmatprep.subr.mxu0 0.0
    %1820 = vmatpush1.msra.mxu0 0.0
    %1821 = vmatprep.subr.mxu0 0.0
    %1822 = vmatpush1.msra.mxu0 0.0
    %1823 = vmatprep.subr.mxu0 0.0
    %1824 = vmatpush1.msra.mxu0 0.0
    %1825 = vmatprep.subr.mxu0 0.0
    %1826 = vmatpush1.msra.mxu0 0.0
    %1827 = vmatprep.subr.mxu0 0.0
    %1828 = vmatpush1.msra.mxu0 0.0
    %1829 = vmatprep.subr.mxu0 0.0
    %1830 = vmatpush1.msra.mxu0 0.0
    %1831 = vmatprep.mubr.f32.mxu0 0.0
    %1832 = vmatmul.mubr.f32.gmra.mrb[0].mxu0 %v1762
    %v1833 = vpop.f32.mrb[0].mxu0
    %v1834 = vadd.f32 %v1754, %v1833
    %v1835 = vpop.f32.mrb[0].mxu0
    %1836 = vmatprep.mubr.f32.mxu0 0.0
    %1837 = vmatmul.mubr.f32.gmra.mrb[0].mxu0 %v1765
    %v1838 = vpop.f32.mrb[0].mxu0
    %v1839 = vadd.f32 %v1759, %v1838
    %v1840 = vpop.f32.mrb[0].mxu0
    %1841 = vdwg.mxu0
    %vm1842 = vcmp.ge.f32.partialorder %v1834, 0.0
    %vm1843 = vcmp.ge.f32.partialorder %v1839, 0.0
    %v1844 = vmul.f32 %v1834, 0.2
    %v1845 = vmul.f32 %v1839, 0.2
    %v1846 = vsel %vm1842, %v1834, %v1844
    %v1847 = vsel %vm1843, %v1839, %v1845
    %v1848 = vld [vmem:[%s14] sm:$0xff]
    %1851 = vrot.lane.b32.xlu0 %v1846, 1
    %v1852 = vpop.permute.xlu0 %1851
    %1853 = vrot.lane.b32.xlu0 %v1847, 1
    %v1854 = vpop.permute.xlu0 %1853
    %v1857 = vsel %vm132, 0.0, %v1852
    %v1858 = vsel %vm132, 0.0, %v1854
    %1859 = vrot.lane.b32.xlu0 %v1846, 113
    %v1860 = vpop.permute.xlu0 %1859
    %1861 = vrot.lane.b32.xlu0 %v1847, 113
    %v1862 = vpop.permute.xlu0 %1861
    %v1865 = vsel %vm132, 0.0, %v1860
    %v1866 = vsel %vm132, 0.0, %v1862
    %v1867 = vld [vmem:[%s13] sm:$0xff]
    %1870 = vrot.lane.b32.xlu0 %v1857, 127
    %v1871 = vpop.permute.xlu0 %1870
    %1872 = vrot.lane.b32.xlu0 %v1858, 127
    %v1873 = vpop.permute.xlu0 %1872
    %1878 = vrot.lane.b32.xlu0 %v1865, 127
    %v1879 = vpop.permute.xlu0 %1878
    %1880 = vrot.lane.b32.xlu0 %v1866, 127
    %v1881 = vpop.permute.xlu0 %1880
    %1882 = vrot.lane.b32.xlu0 %v1865, 16
    %v1883 = vpop.permute.xlu0 %1882
    %1884 = vrot.lane.b32.xlu0 %v1866, 16
    %v1885 = vpop.permute.xlu0 %1884
    %1886 = vrot.lane.b32.xlu0 %v1879, 16
    %v1887 = vpop.permute.xlu0 %1886
    %1888 = vrot.lane.b32.xlu0 %v1881, 16
    %v1889 = vpop.permute.xlu0 %1888
    %v1894 = vsel %vm1268, %v1857, %v1883
    %v1895 = vsel %vm1268, %v1858, %v1885
    %v1896 = vsel %vm1268, %v1871, %v1887
    %v1897 = vsel %vm1268, %v1873, %v1889
    %1899 = vset.pattern.permute.xlu0 0
    %1900 = vperm.xlu0 %1899, %v1848
    %v1901 = vpop.permute.xlu0 %1900
    %v1904 = vsel %vm1397, %v1867, 0
    %1906 = vmatprep.subr.mxu0 0.0
    %1907 = vmatpush1.msra.mxu0 %v1894
    %1908 = vmatprep.subr.mxu0 0.0
    %1909 = vmatpush1.msra.mxu0 %v1895
    %1910 = vmatprep.subr.mxu0 0.0
    %1911 = vmatpush1.msra.mxu0 %v1896
    %1912 = vmatprep.subr.mxu0 0.0
    %1913 = vmatpush1.msra.mxu0 %v1897
    %1914 = vmatprep.subr.mxu0 0.0
    %1915 = vmatpush1.msra.mxu0 0.0
    %1916 = vmatprep.subr.mxu0 0.0
    %1917 = vmatpush1.msra.mxu0 0.0
    %1918 = vmatprep.subr.mxu0 0.0
    %1919 = vmatpush1.msra.mxu0 0.0
    %1920 = vmatprep.subr.mxu0 0.0
    %1921 = vmatpush1.msra.mxu0 0.0
    %1922 = vmatprep.subr.mxu0 0.0
    %1923 = vmatpush1.msra.mxu0 0.0
    %1924 = vmatprep.subr.mxu0 0.0
    %1925 = vmatpush1.msra.mxu0 0.0
    %1926 = vmatprep.subr.mxu0 0.0
    %1927 = vmatpush1.msra.mxu0 0.0
    %1928 = vmatprep.subr.mxu0 0.0
    %1929 = vmatpush1.msra.mxu0 0.0
    %1930 = vmatprep.subr.mxu0 0.0
    %1931 = vmatpush1.msra.mxu0 0.0
    %1932 = vmatprep.subr.mxu0 0.0
    %1933 = vmatpush1.msra.mxu0 0.0
    %1934 = vmatprep.subr.mxu0 0.0
    %1935 = vmatpush1.msra.mxu0 0.0
    %1936 = vmatprep.subr.mxu0 0.0
    %1937 = vmatpush1.msra.mxu0 0.0
    %1938 = vmatprep.subr.mxu0 0.0
    %1939 = vmatpush1.msra.mxu0 0.0
    %1940 = vmatprep.subr.mxu0 0.0
    %1941 = vmatpush1.msra.mxu0 0.0
    %1942 = vmatprep.subr.mxu0 0.0
    %1943 = vmatpush1.msra.mxu0 0.0
    %1944 = vmatprep.subr.mxu0 0.0
    %1945 = vmatpush1.msra.mxu0 0.0
    %1946 = vmatprep.subr.mxu0 0.0
    %1947 = vmatpush1.msra.mxu0 0.0
    %1948 = vmatprep.subr.mxu0 0.0
    %1949 = vmatpush1.msra.mxu0 0.0
    %1950 = vmatprep.subr.mxu0 0.0
    %1951 = vmatpush1.msra.mxu0 0.0
    %1952 = vmatprep.subr.mxu0 0.0
    %1953 = vmatpush1.msra.mxu0 0.0
    %1954 = vmatprep.subr.mxu0 0.0
    %1955 = vmatpush1.msra.mxu0 0.0
    %1956 = vmatprep.subr.mxu0 0.0
    %1957 = vmatpush1.msra.mxu0 0.0
    %1958 = vmatprep.subr.mxu0 0.0
    %1959 = vmatpush1.msra.mxu0 0.0
    %1960 = vmatprep.subr.mxu0 0.0
    %1961 = vmatpush1.msra.mxu0 0.0
    %1962 = vmatprep.subr.mxu0 0.0
    %1963 = vmatpush1.msra.mxu0 0.0
    %1964 = vmatprep.subr.mxu0 0.0
    %1965 = vmatpush1.msra.mxu0 0.0
    %1966 = vmatprep.subr.mxu0 0.0
    %1967 = vmatpush1.msra.mxu0 0.0
    %1968 = vmatprep.subr.mxu0 0.0
    %1969 = vmatpush1.msra.mxu0 0.0
    %1970 = vmatprep.mubr.f32.mxu0 0.0
    %1971 = vmatmul.mubr.f32.gmra.mrb[0].mxu0 %v1904
    %v1972 = vpop.f32.mrb[0].mxu0
    %v1973 = vadd.f32 %v1901, %v1972
    %v1974 = vpop.f32.mrb[0].mxu0
    %1975 = vdwg.mxu0
    %v1976 = vsel %vm1268, %v1846, 0.0
    %v1977 = vsel %vm1268, %v1847, 0.0
    %1978 = vrot.lane.b32.xlu0 %v1846, 112
    %v1979 = vpop.permute.xlu0 %1978
    %1980 = vrot.lane.b32.xlu0 %v1847, 112
    %v1981 = vpop.permute.xlu0 %1980
    %v1984 = vsel %vm1268, %v1979, 0.0
    %v1985 = vsel %vm1268, %v1981, 0.0
    %s1986 = scalar_lea.vmem %s13, 8
    %v1987 = vld [vmem:[%s1986] sm:$0xff]
    %1990 = vrot.lane.b32.xlu0 %v1976, 127
    %v1991 = vpop.permute.xlu0 %1990
    %1992 = vrot.lane.b32.xlu0 %v1977, 127
    %v1993 = vpop.permute.xlu0 %1992
    %1998 = vrot.lane.b32.xlu0 %v1984, 127
    %v1999 = vpop.permute.xlu0 %1998
    %2000 = vrot.lane.b32.xlu0 %v1985, 127
    %v2001 = vpop.permute.xlu0 %2000
    %2002 = vrot.lane.b32.xlu0 %v1984, 16
    %v2003 = vpop.permute.xlu0 %2002
    %2004 = vrot.lane.b32.xlu0 %v1985, 16
    %v2005 = vpop.permute.xlu0 %2004
    %2006 = vrot.lane.b32.xlu0 %v1999, 16
    %v2007 = vpop.permute.xlu0 %2006
    %2008 = vrot.lane.b32.xlu0 %v2001, 16
    %v2009 = vpop.permute.xlu0 %2008
    %v2014 = vsel %vm1268, %v1976, %v2003
    %v2015 = vsel %vm1268, %v1977, %v2005
    %v2016 = vsel %vm1268, %v1991, %v2007
    %v2017 = vsel %vm1268, %v1993, %v2009
    %v2019 = vsel %vm1397, %v1987, 0
    %2021 = vmatprep.subr.mxu0 0.0
    %2022 = vmatpush1.msra.mxu0 %v2014
    %2023 = vmatprep.subr.mxu0 0.0
    %2024 = vmatpush1.msra.mxu0 %v2015
    %2025 = vmatprep.subr.mxu0 0.0
    %2026 = vmatpush1.msra.mxu0 %v2016
    %2027 = vmatprep.subr.mxu0 0.0
    %2028 = vmatpush1.msra.mxu0 %v2017
    %2029 = vmatprep.subr.mxu0 0.0
    %2030 = vmatpush1.msra.mxu0 0.0
    %2031 = vmatprep.subr.mxu0 0.0
    %2032 = vmatpush1.msra.mxu0 0.0
    %2033 = vmatprep.subr.mxu0 0.0
    %2034 = vmatpush1.msra.mxu0 0.0
    %2035 = vmatprep.subr.mxu0 0.0
    %2036 = vmatpush1.msra.mxu0 0.0
    %2037 = vmatprep.subr.mxu0 0.0
    %2038 = vmatpush1.msra.mxu0 0.0
    %2039 = vmatprep.subr.mxu0 0.0
    %2040 = vmatpush1.msra.mxu0 0.0
    %2041 = vmatprep.subr.mxu0 0.0
    %2042 = vmatpush1.msra.mxu0 0.0
    %2043 = vmatprep.subr.mxu0 0.0
    %2044 = vmatpush1.msra.mxu0 0.0
    %2045 = vmatprep.subr.mxu0 0.0
    %2046 = vmatpush1.msra.mxu0 0.0
    %2047 = vmatprep.subr.mxu0 0.0
    %2048 = vmatpush1.msra.mxu0 0.0
    %2049 = vmatprep.subr.mxu0 0.0
    %2050 = vmatpush1.msra.mxu0 0.0
    %2051 = vmatprep.subr.mxu0 0.0
    %2052 = vmatpush1.msra.mxu0 0.0
    %2053 = vmatprep.subr.mxu0 0.0
    %2054 = vmatpush1.msra.mxu0 0.0
    %2055 = vmatprep.subr.mxu0 0.0
    %2056 = vmatpush1.msra.mxu0 0.0
    %2057 = vmatprep.subr.mxu0 0.0
    %2058 = vmatpush1.msra.mxu0 0.0
    %2059 = vmatprep.subr.mxu0 0.0
    %2060 = vmatpush1.msra.mxu0 0.0
    %2061 = vmatprep.subr.mxu0 0.0
    %2062 = vmatpush1.msra.mxu0 0.0
    %2063 = vmatprep.subr.mxu0 0.0
    %2064 = vmatpush1.msra.mxu0 0.0
    %2065 = vmatprep.subr.mxu0 0.0
    %2066 = vmatpush1.msra.mxu0 0.0
    %2067 = vmatprep.subr.mxu0 0.0
    %2068 = vmatpush1.msra.mxu0 0.0
    %2069 = vmatprep.subr.mxu0 0.0
    %2070 = vmatpush1.msra.mxu0 0.0
    %2071 = vmatprep.subr.mxu0 0.0
    %2072 = vmatpush1.msra.mxu0 0.0
    %2073 = vmatprep.subr.mxu0 0.0
    %2074 = vmatpush1.msra.mxu0 0.0
    %2075 = vmatprep.subr.mxu0 0.0
    %2076 = vmatpush1.msra.mxu0 0.0
    %2077 = vmatprep.subr.mxu0 0.0
    %2078 = vmatpush1.msra.mxu0 0.0
    %2079 = vmatprep.subr.mxu0 0.0
    %2080 = vmatpush1.msra.mxu0 0.0
    %2081 = vmatprep.subr.mxu0 0.0
    %2082 = vmatpush1.msra.mxu0 0.0
    %2083 = vmatprep.subr.mxu0 0.0
    %2084 = vmatpush1.msra.mxu0 0.0
    %2085 = vmatprep.mubr.f32.mxu0 0.0
    %2086 = vmatmul.mubr.f32.gmra.mrb[0].mxu0 %v2019
    %v2087 = vpop.f32.mrb[0].mxu0
    %v2088 = vadd.f32 %v1901, %v2087
    %v2089 = vpop.f32.mrb[0].mxu0
    %2090 = vdwg.mxu0
    %v2091 = vadd.s32 %v822, 8
    %v2092 = vmul.u32 %v2091, 2
    %vm2093 = vcmp.eq.s32.totalorder %v824, %v2092
    %v2094 = vsel %vm2093, 1, 0
    %v2095 = vcvt.s32.f32 %v2094
    %v2096 = vadd.s32 %v2092, 1
    %vm2097 = vcmp.eq.s32.totalorder %v824, %v2096
    %v2098 = vsel %vm2097, 1, 0
    %v2099 = vcvt.s32.f32 %v2098
    %v2101 = vsel %vm1268, %v2088, 0
    %2103 = vmatprep.subr.mxu0 0.0
    %2104 = vmatpush1.msra.mxu0 %v832
    %2105 = vmatprep.subr.mxu0 0.0
    %2106 = vmatpush1.msra.mxu0 %v2099
    %2107 = vmatprep.subr.mxu0 0.0
    %2108 = vmatpush1.msra.mxu0 0.0
    %2109 = vmatprep.subr.mxu0 0.0
    %2110 = vmatpush1.msra.mxu0 0.0
    %2111 = vmatprep.subr.mxu0 0.0
    %2112 = vmatpush1.msra.mxu0 0.0
    %2113 = vmatprep.subr.mxu0 0.0
    %2114 = vmatpush1.msra.mxu0 0.0
    %2115 = vmatprep.subr.mxu0 0.0
    %2116 = vmatpush1.msra.mxu0 0.0
    %2117 = vmatprep.subr.mxu0 0.0
    %2118 = vmatpush1.msra.mxu0 0.0
    %2119 = vmatprep.subr.mxu0 0.0
    %2120 = vmatpush1.msra.mxu0 0.0
    %2121 = vmatprep.subr.mxu0 0.0
    %2122 = vmatpush1.msra.mxu0 0.0
    %2123 = vmatprep.subr.mxu0 0.0
    %2124 = vmatpush1.msra.mxu0 0.0
    %2125 = vmatprep.subr.mxu0 0.0
    %2126 = vmatpush1.msra.mxu0 0.0
    %2127 = vmatprep.subr.mxu0 0.0
    %2128 = vmatpush1.msra.mxu0 0.0
    %2129 = vmatprep.subr.mxu0 0.0
    %2130 = vmatpush1.msra.mxu0 0.0
    %2131 = vmatprep.subr.mxu0 0.0
    %2132 = vmatpush1.msra.mxu0 0.0
    %2133 = vmatprep.subr.mxu0 0.0
    %2134 = vmatpush1.msra.mxu0 0.0
    %2135 = vmatprep.subr.mxu0 0.0
    %2136 = vmatpush1.msra.mxu0 0.0
    %2137 = vmatprep.subr.mxu0 0.0
    %2138 = vmatpush1.msra.mxu0 0.0
    %2139 = vmatprep.subr.mxu0 0.0
    %2140 = vmatpush1.msra.mxu0 0.0
    %2141 = vmatprep.subr.mxu0 0.0
    %2142 = vmatpush1.msra.mxu0 0.0
    %2143 = vmatprep.subr.mxu0 0.0
    %2144 = vmatpush1.msra.mxu0 0.0
    %2145 = vmatprep.subr.mxu0 0.0
    %2146 = vmatpush1.msra.mxu0 0.0
    %2147 = vmatprep.subr.mxu0 0.0
    %2148 = vmatpush1.msra.mxu0 0.0
    %2149 = vmatprep.subr.mxu0 0.0
    %2150 = vmatpush1.msra.mxu0 0.0
    %2151 = vmatprep.subr.mxu0 0.0
    %2152 = vmatpush1.msra.mxu0 0.0
    %2153 = vmatprep.subr.mxu0 0.0
    %2154 = vmatpush1.msra.mxu0 0.0
    %2155 = vmatprep.subr.mxu0 0.0
    %2156 = vmatpush1.msra.mxu0 0.0
    %2157 = vmatprep.subr.mxu0 0.0
    %2158 = vmatpush1.msra.mxu0 0.0
    %2159 = vmatprep.subr.mxu0 0.0
    %2160 = vmatpush1.msra.mxu0 0.0
    %2161 = vmatprep.subr.mxu0 0.0
    %2162 = vmatpush1.msra.mxu0 0.0
    %2163 = vmatprep.subr.mxu0 0.0
    %2164 = vmatpush1.msra.mxu0 0.0
    %2165 = vmatprep.subr.mxu0 0.0
    %2166 = vmatpush1.msra.mxu0 0.0
    %2167 = vmatprep.mubr.f32.mxu0 0.0
    %2168 = vmatmul.mubr.f32.gmra.mrb[0].mxu0 %v2101
    %v2169 = vpop.f32.mrb[0].mxu0
    %v2170 = vadd.f32 0.0, %v2169
    %v2171 = vpop.f32.mrb[0].mxu0
    %2172 = vdwg.mxu0
    %v2174 = vsel %vm1268, %v1973, 0
    %2176 = vmatprep.subr.mxu0 0.0
    %2177 = vmatpush1.msra.mxu0 %v828
    %2178 = vmatprep.subr.mxu0 0.0
    %2179 = vmatpush1.msra.mxu0 %v2095
    %2180 = vmatprep.subr.mxu0 0.0
    %2181 = vmatpush1.msra.mxu0 0.0
    %2182 = vmatprep.subr.mxu0 0.0
    %2183 = vmatpush1.msra.mxu0 0.0
    %2184 = vmatprep.subr.mxu0 0.0
    %2185 = vmatpush1.msra.mxu0 0.0
    %2186 = vmatprep.subr.mxu0 0.0
    %2187 = vmatpush1.msra.mxu0 0.0
    %2188 = vmatprep.subr.mxu0 0.0
    %2189 = vmatpush1.msra.mxu0 0.0
    %2190 = vmatprep.subr.mxu0 0.0
    %2191 = vmatpush1.msra.mxu0 0.0
    %2192 = vmatprep.subr.mxu0 0.0
    %2193 = vmatpush1.msra.mxu0 0.0
    %2194 = vmatprep.subr.mxu0 0.0
    %2195 = vmatpush1.msra.mxu0 0.0
    %2196 = vmatprep.subr.mxu0 0.0
    %2197 = vmatpush1.msra.mxu0 0.0
    %2198 = vmatprep.subr.mxu0 0.0
    %2199 = vmatpush1.msra.mxu0 0.0
    %2200 = vmatprep.subr.mxu0 0.0
    %2201 = vmatpush1.msra.mxu0 0.0
    %2202 = vmatprep.subr.mxu0 0.0
    %2203 = vmatpush1.msra.mxu0 0.0
    %2204 = vmatprep.subr.mxu0 0.0
    %2205 = vmatpush1.msra.mxu0 0.0
    %2206 = vmatprep.subr.mxu0 0.0
    %2207 = vmatpush1.msra.mxu0 0.0
    %2208 = vmatprep.subr.mxu0 0.0
    %2209 = vmatpush1.msra.mxu0 0.0
    %2210 = vmatprep.subr.mxu0 0.0
    %2211 = vmatpush1.msra.mxu0 0.0
    %2212 = vmatprep.subr.mxu0 0.0
    %2213 = vmatpush1.msra.mxu0 0.0
    %2214 = vmatprep.subr.mxu0 0.0
    %2215 = vmatpush1.msra.mxu0 0.0
    %2216 = vmatprep.subr.mxu0 0.0
    %2217 = vmatpush1.msra.mxu0 0.0
    %2218 = vmatprep.subr.mxu0 0.0
    %2219 = vmatpush1.msra.mxu0 0.0
    %2220 = vmatprep.subr.mxu0 0.0
    %2221 = vmatpush1.msra.mxu0 0.0
    %2222 = vmatprep.subr.mxu0 0.0
    %2223 = vmatpush1.msra.mxu0 0.0
    %2224 = vmatprep.subr.mxu0 0.0
    %2225 = vmatpush1.msra.mxu0 0.0
    %2226 = vmatprep.subr.mxu0 0.0
    %2227 = vmatpush1.msra.mxu0 0.0
    %2228 = vmatprep.subr.mxu0 0.0
    %2229 = vmatpush1.msra.mxu0 0.0
    %2230 = vmatprep.subr.mxu0 0.0
    %2231 = vmatpush1.msra.mxu0 0.0
    %2232 = vmatprep.subr.mxu0 0.0
    %2233 = vmatpush1.msra.mxu0 0.0
    %2234 = vmatprep.subr.mxu0 0.0
    %2235 = vmatpush1.msra.mxu0 0.0
    %2236 = vmatprep.subr.mxu0 0.0
    %2237 = vmatpush1.msra.mxu0 0.0
    %2238 = vmatprep.subr.mxu0 0.0
    %2239 = vmatpush1.msra.mxu0 0.0
    %2240 = vmatprep.mubr.f32.mxu0 0.0
    %2241 = vmatmul.mubr.f32.gmra.mrb[0].mxu0 %v2174
    %v2242 = vpop.f32.mrb[0].mxu0
    %v2243 = vadd.f32 %v2170, %v2242
    %v2244 = vpop.f32.mrb[0].mxu0
    %2245 = vdwg.mxu0
    %2246 = vrot.lane.b32.xlu0 %v2088, 112
    %v2247 = vpop.permute.xlu0 %2246
    %v2248 = vsel %vm1268, %v2247, 0
    %2250 = vmatprep.subr.mxu0 0.0
    %2251 = vmatpush1.msra.mxu0 %v832
    %2252 = vmatprep.subr.mxu0 0.0
    %2253 = vmatpush1.msra.mxu0 %v2099
    %2254 = vmatprep.subr.mxu0 0.0
    %2255 = vmatpush1.msra.mxu0 0.0
    %2256 = vmatprep.subr.mxu0 0.0
    %2257 = vmatpush1.msra.mxu0 0.0
    %2258 = vmatprep.subr.mxu0 0.0
    %2259 = vmatpush1.msra.mxu0 0.0
    %2260 = vmatprep.subr.mxu0 0.0
    %2261 = vmatpush1.msra.mxu0 0.0
    %2262 = vmatprep.subr.mxu0 0.0
    %2263 = vmatpush1.msra.mxu0 0.0
    %2264 = vmatprep.subr.mxu0 0.0
    %2265 = vmatpush1.msra.mxu0 0.0
    %2266 = vmatprep.subr.mxu0 0.0
    %2267 = vmatpush1.msra.mxu0 0.0
    %2268 = vmatprep.subr.mxu0 0.0
    %2269 = vmatpush1.msra.mxu0 0.0
    %2270 = vmatprep.subr.mxu0 0.0
    %2271 = vmatpush1.msra.mxu0 0.0
    %2272 = vmatprep.subr.mxu0 0.0
    %2273 = vmatpush1.msra.mxu0 0.0
    %2274 = vmatprep.subr.mxu0 0.0
    %2275 = vmatpush1.msra.mxu0 0.0
    %2276 = vmatprep.subr.mxu0 0.0
    %2277 = vmatpush1.msra.mxu0 0.0
    %2278 = vmatprep.subr.mxu0 0.0
    %2279 = vmatpush1.msra.mxu0 0.0
    %2280 = vmatprep.subr.mxu0 0.0
    %2281 = vmatpush1.msra.mxu0 0.0
    %2282 = vmatprep.subr.mxu0 0.0
    %2283 = vmatpush1.msra.mxu0 0.0
    %2284 = vmatprep.subr.mxu0 0.0
    %2285 = vmatpush1.msra.mxu0 0.0
    %2286 = vmatprep.subr.mxu0 0.0
    %2287 = vmatpush1.msra.mxu0 0.0
    %2288 = vmatprep.subr.mxu0 0.0
    %2289 = vmatpush1.msra.mxu0 0.0
    %2290 = vmatprep.subr.mxu0 0.0
    %2291 = vmatpush1.msra.mxu0 0.0
    %2292 = vmatprep.subr.mxu0 0.0
    %2293 = vmatpush1.msra.mxu0 0.0
    %2294 = vmatprep.subr.mxu0 0.0
    %2295 = vmatpush1.msra.mxu0 0.0
    %2296 = vmatprep.subr.mxu0 0.0
    %2297 = vmatpush1.msra.mxu0 0.0
    %2298 = vmatprep.subr.mxu0 0.0
    %2299 = vmatpush1.msra.mxu0 0.0
    %2300 = vmatprep.subr.mxu0 0.0
    %2301 = vmatpush1.msra.mxu0 0.0
    %2302 = vmatprep.subr.mxu0 0.0
    %2303 = vmatpush1.msra.mxu0 0.0
    %2304 = vmatprep.subr.mxu0 0.0
    %2305 = vmatpush1.msra.mxu0 0.0
    %2306 = vmatprep.subr.mxu0 0.0
    %2307 = vmatpush1.msra.mxu0 0.0
    %2308 = vmatprep.subr.mxu0 0.0
    %2309 = vmatpush1.msra.mxu0 0.0
    %2310 = vmatprep.subr.mxu0 0.0
    %2311 = vmatpush1.msra.mxu0 0.0
    %2312 = vmatprep.subr.mxu0 0.0
    %2313 = vmatpush1.msra.mxu0 0.0
    %2314 = vmatprep.mubr.f32.mxu0 0.0
    %2315 = vmatmul.mubr.f32.gmra.mrb[0].mxu0 %v2248
    %v2316 = vpop.f32.mrb[0].mxu0
    %v2317 = vadd.f32 0.0, %v2316
    %v2318 = vpop.f32.mrb[0].mxu0
    %2319 = vdwg.mxu0
    %2320 = vrot.lane.b32.xlu0 %v1973, 112
    %v2321 = vpop.permute.xlu0 %2320
    %v2322 = vsel %vm1268, %v2321, 0
    %2324 = vmatprep.subr.mxu0 0.0
    %2325 = vmatpush1.msra.mxu0 %v828
    %2326 = vmatprep.subr.mxu0 0.0
    %2327 = vmatpush1.msra.mxu0 %v2095
    %2328 = vmatprep.subr.mxu0 0.0
    %2329 = vmatpush1.msra.mxu0 0.0
    %2330 = vmatprep.subr.mxu0 0.0
    %2331 = vmatpush1.msra.mxu0 0.0
    %2332 = vmatprep.subr.mxu0 0.0
    %2333 = vmatpush1.msra.mxu0 0.0
    %2334 = vmatprep.subr.mxu0 0.0
    %2335 = vmatpush1.msra.mxu0 0.0
    %2336 = vmatprep.subr.mxu0 0.0
    %2337 = vmatpush1.msra.mxu0 0.0
    %2338 = vmatprep.subr.mxu0 0.0
    %2339 = vmatpush1.msra.mxu0 0.0
    %2340 = vmatprep.subr.mxu0 0.0
    %2341 = vmatpush1.msra.mxu0 0.0
    %2342 = vmatprep.subr.mxu0 0.0
    %2343 = vmatpush1.msra.mxu0 0.0
    %2344 = vmatprep.subr.mxu0 0.0
    %2345 = vmatpush1.msra.mxu0 0.0
    %2346 = vmatprep.subr.mxu0 0.0
    %2347 = vmatpush1.msra.mxu0 0.0
    %2348 = vmatprep.subr.mxu0 0.0
    %2349 = vmatpush1.msra.mxu0 0.0
    %2350 = vmatprep.subr.mxu0 0.0
    %2351 = vmatpush1.msra.mxu0 0.0
    %2352 = vmatprep.subr.mxu0 0.0
    %2353 = vmatpush1.msra.mxu0 0.0
    %2354 = vmatprep.subr.mxu0 0.0
    %2355 = vmatpush1.msra.mxu0 0.0
    %2356 = vmatprep.subr.mxu0 0.0
    %2357 = vmatpush1.msra.mxu0 0.0
    %2358 = vmatprep.subr.mxu0 0.0
    %2359 = vmatpush1.msra.mxu0 0.0
    %2360 = vmatprep.subr.mxu0 0.0
    %2361 = vmatpush1.msra.mxu0 0.0
    %2362 = vmatprep.subr.mxu0 0.0
    %2363 = vmatpush1.msra.mxu0 0.0
    %2364 = vmatprep.subr.mxu0 0.0
    %2365 = vmatpush1.msra.mxu0 0.0
    %2366 = vmatprep.subr.mxu0 0.0
    %2367 = vmatpush1.msra.mxu0 0.0
    %2368 = vmatprep.subr.mxu0 0.0
    %2369 = vmatpush1.msra.mxu0 0.0
    %2370 = vmatprep.subr.mxu0 0.0
    %2371 = vmatpush1.msra.mxu0 0.0
    %2372 = vmatprep.subr.mxu0 0.0
    %2373 = vmatpush1.msra.mxu0 0.0
    %2374 = vmatprep.subr.mxu0 0.0
    %2375 = vmatpush1.msra.mxu0 0.0
    %2376 = vmatprep.subr.mxu0 0.0
    %2377 = vmatpush1.msra.mxu0 0.0
    %2378 = vmatprep.subr.mxu0 0.0
    %2379 = vmatpush1.msra.mxu0 0.0
    %2380 = vmatprep.subr.mxu0 0.0
    %2381 = vmatpush1.msra.mxu0 0.0
    %2382 = vmatprep.subr.mxu0 0.0
    %2383 = vmatpush1.msra.mxu0 0.0
    %2384 = vmatprep.subr.mxu0 0.0
    %2385 = vmatpush1.msra.mxu0 0.0
    %2386 = vmatprep.subr.mxu0 0.0
    %2387 = vmatpush1.msra.mxu0 0.0
    %2388 = vmatprep.mubr.f32.mxu0 0.0
    %2389 = vmatmul.mubr.f32.gmra.mrb[0].mxu0 %v2322
    %v2390 = vpop.f32.mrb[0].mxu0
    %v2391 = vadd.f32 %v2317, %v2390
    %v2392 = vpop.f32.mrb[0].mxu0
    %2393 = vdwg.mxu0
    %vm2394 = vcmp.ge.f32.partialorder %v2243, 0.0
    %v2395 = vmul.f32 %v2243, 0.2
    %v2396 = vsel %vm2394, %v2243, %v2395
    %2398 = vrot.lane.b32.xlu0 %v2396, 127
    %v2399 = vpop.permute.xlu0 %2398
    %2401 = vrot.lane.b32.xlu0 %v2396, 1
    %v2402 = vpop.permute.xlu0 %2401
    %2404 = vrot.lane.b32.xlu0 %v2396, 3
    %v2405 = vpop.permute.xlu0 %2404
    %v2407 = vsel %vm132, %v2399, %v2402
    %vm2408 = vcmask 269312
    %v2409 = vsel %vm2408, %v2407, %v2405
    %vm2410 = vcmp.ge.f32.partialorder %v2391, 0.0
    %v2411 = vmul.f32 %v2391, 0.2
    %v2412 = vsel %vm2410, %v2391, %v2411
    %2414 = vrot.lane.b32.xlu0 %v2412, 127
    %v2415 = vpop.permute.xlu0 %2414
    %2417 = vrot.lane.b32.xlu0 %v2412, 1
    %v2418 = vpop.permute.xlu0 %2417
    %2420 = vrot.lane.b32.xlu0 %v2412, 3
    %v2421 = vpop.permute.xlu0 %2420
    %v2423 = vsel %vm132, %v2415, %v2418
    %v2424 = vsel %vm2408, %v2423, %v2421
    %v2425 = vld [vmem:[%s15] sm:$0xff]
    %v2426 = vld [vmem:[%s16] sm:$0xff]
    %2428 = vrot.lane.b32.xlu0 %v2409, 127
    %v2429 = vpop.permute.xlu0 %2428
    %2431 = vrot.lane.b32.xlu0 %v2409, 126
    %v2432 = vpop.permute.xlu0 %2431
    %2435 = vrot.lane.b32.xlu0 %v2424, 127
    %v2436 = vpop.permute.xlu0 %2435
    %2437 = vrot.lane.b32.xlu0 %v2424, 126
    %v2438 = vpop.permute.xlu0 %2437
    %2439 = vrot.lane.b32.xlu0 %v2424, 32
    %v2440 = vpop.permute.xlu0 %2439
    %2441 = vrot.lane.b32.xlu0 %v2436, 32
    %v2442 = vpop.permute.xlu0 %2441
    %2443 = vrot.lane.b32.xlu0 %v2438, 32
    %v2444 = vpop.permute.xlu0 %2443
    %v2448 = vsel %vm1397, %v2409, %v2440
    %v2449 = vsel %vm1397, %v2429, %v2442
    %v2450 = vsel %vm1397, %v2432, %v2444
    %2452 = vset.pattern.permute.xlu0 0
    %2453 = vperm.xlu0 %2452, %v2426
    %v2454 = vpop.permute.xlu0 %2453
    %vm2456 = vcmask 195584
    %v2458 = vsel %vm2456, %v2425, 0
    %2460 = vmatprep.subr.mxu0 0.0
    %2461 = vmatpush1.msra.mxu0 %v2448
    %2462 = vmatprep.subr.mxu0 0.0
    %2463 = vmatpush1.msra.mxu0 %v2449
    %2464 = vmatprep.subr.mxu0 0.0
    %2465 = vmatpush1.msra.mxu0 %v2450
    %2466 = vmatprep.subr.mxu0 0.0
    %2467 = vmatpush1.msra.mxu0 0.0
    %2468 = vmatprep.subr.mxu0 0.0
    %2469 = vmatpush1.msra.mxu0 0.0
    %2470 = vmatprep.subr.mxu0 0.0
    %2471 = vmatpush1.msra.mxu0 0.0
    %2472 = vmatprep.subr.mxu0 0.0
    %2473 = vmatpush1.msra.mxu0 0.0
    %2474 = vmatprep.subr.mxu0 0.0
    %2475 = vmatpush1.msra.mxu0 0.0
    %2476 = vmatprep.subr.mxu0 0.0
    %2477 = vmatpush1.msra.mxu0 0.0
    %2478 = vmatprep.subr.mxu0 0.0
    %2479 = vmatpush1.msra.mxu0 0.0
    %2480 = vmatprep.subr.mxu0 0.0
    %2481 = vmatpush1.msra.mxu0 0.0
    %2482 = vmatprep.subr.mxu0 0.0
    %2483 = vmatpush1.msra.mxu0 0.0
    %2484 = vmatprep.subr.mxu0 0.0
    %2485 = vmatpush1.msra.mxu0 0.0
    %2486 = vmatprep.subr.mxu0 0.0
    %2487 = vmatpush1.msra.mxu0 0.0
    %2488 = vmatprep.subr.mxu0 0.0
    %2489 = vmatpush1.msra.mxu0 0.0
    %2490 = vmatprep.subr.mxu0 0.0
    %2491 = vmatpush1.msra.mxu0 0.0
    %2492 = vmatprep.subr.mxu0 0.0
    %2493 = vmatpush1.msra.mxu0 0.0
    %2494 = vmatprep.subr.mxu0 0.0
    %2495 = vmatpush1.msra.mxu0 0.0
    %2496 = vmatprep.subr.mxu0 0.0
    %2497 = vmatpush1.msra.mxu0 0.0
    %2498 = vmatprep.subr.mxu0 0.0
    %2499 = vmatpush1.msra.mxu0 0.0
    %2500 = vmatprep.subr.mxu0 0.0
    %2501 = vmatpush1.msra.mxu0 0.0
    %2502 = vmatprep.subr.mxu0 0.0
    %2503 = vmatpush1.msra.mxu0 0.0
    %2504 = vmatprep.subr.mxu0 0.0
    %2505 = vmatpush1.msra.mxu0 0.0
    %2506 = vmatprep.subr.mxu0 0.0
    %2507 = vmatpush1.msra.mxu0 0.0
    %2508 = vmatprep.subr.mxu0 0.0
    %2509 = vmatpush1.msra.mxu0 0.0
    %2510 = vmatprep.subr.mxu0 0.0
    %2511 = vmatpush1.msra.mxu0 0.0
    %2512 = vmatprep.subr.mxu0 0.0
    %2513 = vmatpush1.msra.mxu0 0.0
    %2514 = vmatprep.subr.mxu0 0.0
    %2515 = vmatpush1.msra.mxu0 0.0
    %2516 = vmatprep.subr.mxu0 0.0
    %2517 = vmatpush1.msra.mxu0 0.0
    %2518 = vmatprep.subr.mxu0 0.0
    %2519 = vmatpush1.msra.mxu0 0.0
    %2520 = vmatprep.subr.mxu0 0.0
    %2521 = vmatpush1.msra.mxu0 0.0
    %2522 = vmatprep.subr.mxu0 0.0
    %2523 = vmatpush1.msra.mxu0 0.0
    %2524 = vmatprep.mubr.f32.mxu0 0.0
    %2525 = vmatmul.mubr.f32.gmra.mrb[0].mxu0 %v2458
    %v2526 = vpop.f32.mrb[0].mxu0
    %v2527 = vadd.f32 %v2454, %v2526
    %v2528 = vpop.f32.mrb[0].mxu0
    %2529 = vdwg.mxu0
    %vm2530 = vcmp.ge.f32.partialorder %v2527, 0.0
    %v2531 = vmul.f32 %v2527, 0.2
    %v2532 = vsel %vm2530, %v2527, %v2531
    %2534 = vrot.lane.b32.xlu0 %v2391, 32
    %v2535 = vpop.permute.xlu0 %2534
    %v2537 = vld [vmem:[%s17] sm:$0xff]
    %v2538 = vld [vmem:[%s18] sm:$0xff]
    %v2539 = vsel %vm1397, %v2243, %v2535
    %2541 = vset.pattern.permute.xlu0 0
    %2542 = vperm.xlu0 %2541, %v2538
    %v2543 = vpop.permute.xlu0 %2542
    %v2546 = vsel %vm1268, %v2537, 0
    %2548 = vmatprep.subr.mxu0 0.0
    %2549 = vmatpush1.msra.mxu0 %v2532
    %2550 = vmatprep.subr.mxu0 0.0
    %2551 = vmatpush1.msra.mxu0 %v2539
    %2552 = vmatprep.subr.mxu0 0.0
    %2553 = vmatpush1.msra.mxu0 0.0
    %2554 = vmatprep.subr.mxu0 0.0
    %2555 = vmatpush1.msra.mxu0 0.0
    %2556 = vmatprep.subr.mxu0 0.0
    %2557 = vmatpush1.msra.mxu0 0.0
    %2558 = vmatprep.subr.mxu0 0.0
    %2559 = vmatpush1.msra.mxu0 0.0
    %2560 = vmatprep.subr.mxu0 0.0
    %2561 = vmatpush1.msra.mxu0 0.0
    %2562 = vmatprep.subr.mxu0 0.0
    %2563 = vmatpush1.msra.mxu0 0.0
    %2564 = vmatprep.subr.mxu0 0.0
    %2565 = vmatpush1.msra.mxu0 0.0
    %2566 = vmatprep.subr.mxu0 0.0
    %2567 = vmatpush1.msra.mxu0 0.0
    %2568 = vmatprep.subr.mxu0 0.0
    %2569 = vmatpush1.msra.mxu0 0.0
    %2570 = vmatprep.subr.mxu0 0.0
    %2571 = vmatpush1.msra.mxu0 0.0
    %2572 = vmatprep.subr.mxu0 0.0
    %2573 = vmatpush1.msra.mxu0 0.0
    %2574 = vmatprep.subr.mxu0 0.0
    %2575 = vmatpush1.msra.mxu0 0.0
    %2576 = vmatprep.subr.mxu0 0.0
    %2577 = vmatpush1.msra.mxu0 0.0
    %2578 = vmatprep.subr.mxu0 0.0
    %2579 = vmatpush1.msra.mxu0 0.0
    %2580 = vmatprep.subr.mxu0 0.0
    %2581 = vmatpush1.msra.mxu0 0.0
    %2582 = vmatprep.subr.mxu0 0.0
    %2583 = vmatpush1.msra.mxu0 0.0
    %2584 = vmatprep.subr.mxu0 0.0
    %2585 = vmatpush1.msra.mxu0 0.0
    %2586 = vmatprep.subr.mxu0 0.0
    %2587 = vmatpush1.msra.mxu0 0.0
    %2588 = vmatprep.subr.mxu0 0.0
    %2589 = vmatpush1.msra.mxu0 0.0
    %2590 = vmatprep.subr.mxu0 0.0
    %2591 = vmatpush1.msra.mxu0 0.0
    %2592 = vmatprep.subr.mxu0 0.0
    %2593 = vmatpush1.msra.mxu0 0.0
    %2594 = vmatprep.subr.mxu0 0.0
    %2595 = vmatpush1.msra.mxu0 0.0
    %2596 = vmatprep.subr.mxu0 0.0
    %2597 = vmatpush1.msra.mxu0 0.0
    %2598 = vmatprep.subr.mxu0 0.0
    %2599 = vmatpush1.msra.mxu0 0.0
    %2600 = vmatprep.subr.mxu0 0.0
    %2601 = vmatpush1.msra.mxu0 0.0
    %2602 = vmatprep.subr.mxu0 0.0
    %2603 = vmatpush1.msra.mxu0 0.0
    %2604 = vmatprep.subr.mxu0 0.0
    %2605 = vmatpush1.msra.mxu0 0.0
    %2606 = vmatprep.subr.mxu0 0.0
    %2607 = vmatpush1.msra.mxu0 0.0
    %2608 = vmatprep.subr.mxu0 0.0
    %2609 = vmatpush1.msra.mxu0 0.0
    %2610 = vmatprep.subr.mxu0 0.0
    %2611 = vmatpush1.msra.mxu0 0.0
    %2612 = vmatprep.mubr.f32.mxu0 0.0
    %2613 = vmatmul.mubr.f32.gmra.mrb[0].mxu0 %v2546
    %v2614 = vpop.f32.mrb[0].mxu0
    %v2615 = vadd.f32 %v2543, %v2614
    %v2616 = vpop.f32.mrb[0].mxu0
    %2617 = vdwg.mxu0
    %vm2618 = vcmp.ge.f32.partialorder %v2615, 0.0
    %v2619 = vmul.f32 %v2615, 0.2
    %v2620 = vsel %vm2618, %v2615, %v2619
    %2622 = vrot.lane.b32.xlu0 %v2620, 125
    %v2623 = vpop.permute.xlu0 %2622
    %2625 = vrot.lane.b32.xlu0 %v2620, 127
    %v2626 = vpop.permute.xlu0 %2625
    %2628 = vrot.lane.b32.xlu0 %v2620, 1
    %v2629 = vpop.permute.xlu0 %2628
    %2631 = vrot.lane.b32.xlu0 %v2620, 3
    %v2632 = vpop.permute.xlu0 %2631
    %2634 = vrot.lane.b32.xlu0 %v2620, 5
    %v2635 = vpop.permute.xlu0 %2634
    %2637 = vrot.lane.b32.xlu0 %v2620, 7
    %v2638 = vpop.permute.xlu0 %2637
    %2640 = vrot.lane.b32.xlu0 %v2620, 9
    %v2641 = vpop.permute.xlu0 %2640
    %v2643 = vsel %vm132, %v2623, %v2626
    %v2644 = vsel %vm135, %v2643, %v2629
    %v2645 = vsel %vm138, %v2644, %v2632
    %vm2646 = vcmask 285696
    %v2647 = vsel %vm2646, %v2645, %v2635
    %vm2648 = vcmask 293888
    %v2649 = vsel %vm2648, %v2647, %v2638
    %vm2650 = vcmask 302080
    %v2651 = vsel %vm2650, %v2649, %v2641
    %2652 = vrot.lane.b32.xlu0 %v2620, 93
    %v2653 = vpop.permute.xlu0 %2652
    %2655 = vrot.lane.b32.xlu0 %v2620, 95
    %v2656 = vpop.permute.xlu0 %2655
    %2658 = vrot.lane.b32.xlu0 %v2620, 97
    %v2659 = vpop.permute.xlu0 %2658
    %2661 = vrot.lane.b32.xlu0 %v2620, 99
    %v2662 = vpop.permute.xlu0 %2661
    %2664 = vrot.lane.b32.xlu0 %v2620, 101
    %v2665 = vpop.permute.xlu0 %2664
    %2667 = vrot.lane.b32.xlu0 %v2620, 103
    %v2668 = vpop.permute.xlu0 %2667
    %2670 = vrot.lane.b32.xlu0 %v2620, 105
    %v2671 = vpop.permute.xlu0 %2670
    %v2673 = vsel %vm132, %v2653, %v2656
    %v2674 = vsel %vm135, %v2673, %v2659
    %v2675 = vsel %vm138, %v2674, %v2662
    %v2676 = vsel %vm2646, %v2675, %v2665
    %v2677 = vsel %vm2648, %v2676, %v2668
    %v2678 = vsel %vm2650, %v2677, %v2671
    %v2679 = vld [vmem:[%s19] sm:$0xff]
    %v2680 = vld [vmem:[%s20] sm:$0xff]
    %2682 = vrot.lane.b32.xlu0 %v2651, 125
    %v2683 = vpop.permute.xlu0 %2682
    %2685 = vrot.lane.b32.xlu0 %v2651, 122
    %v2686 = vpop.permute.xlu0 %2685
    %2689 = vrot.lane.b32.xlu0 %v2678, 125
    %v2690 = vpop.permute.xlu0 %2689
    %2691 = vrot.lane.b32.xlu0 %v2678, 122
    %v2692 = vpop.permute.xlu0 %2691
    %2693 = vrot.lane.b32.xlu0 %v2678, 32
    %v2694 = vpop.permute.xlu0 %2693
    %2695 = vrot.lane.b32.xlu0 %v2690, 32
    %v2696 = vpop.permute.xlu0 %2695
    %2697 = vrot.lane.b32.xlu0 %v2692, 32
    %v2698 = vpop.permute.xlu0 %2697
    %v2702 = vsel %vm1397, %v2651, %v2694
    %v2703 = vsel %vm1397, %v2683, %v2696
    %v2704 = vsel %vm1397, %v2686, %v2698
    %2706 = vset.pattern.permute.xlu0 0
    %2707 = vperm.xlu0 %2706, %v2680
    %v2708 = vpop.permute.xlu0 %2707
    %v2711 = vsel %vm2456, %v2679, 0
    %2713 = vmatprep.subr.mxu0 0.0
    %2714 = vmatpush1.msra.mxu0 %v2702
    %2715 = vmatprep.subr.mxu0 0.0
    %2716 = vmatpush1.msra.mxu0 %v2703
    %2717 = vmatprep.subr.mxu0 0.0
    %2718 = vmatpush1.msra.mxu0 %v2704
    %2719 = vmatprep.subr.mxu0 0.0
    %2720 = vmatpush1.msra.mxu0 0.0
    %2721 = vmatprep.subr.mxu0 0.0
    %2722 = vmatpush1.msra.mxu0 0.0
    %2723 = vmatprep.subr.mxu0 0.0
    %2724 = vmatpush1.msra.mxu0 0.0
    %2725 = vmatprep.subr.mxu0 0.0
    %2726 = vmatpush1.msra.mxu0 0.0
    %2727 = vmatprep.subr.mxu0 0.0
    %2728 = vmatpush1.msra.mxu0 0.0
    %2729 = vmatprep.subr.mxu0 0.0
    %2730 = vmatpush1.msra.mxu0 0.0
    %2731 = vmatprep.subr.mxu0 0.0
    %2732 = vmatpush1.msra.mxu0 0.0
    %2733 = vmatprep.subr.mxu0 0.0
    %2734 = vmatpush1.msra.mxu0 0.0
    %2735 = vmatprep.subr.mxu0 0.0
    %2736 = vmatpush1.msra.mxu0 0.0
    %2737 = vmatprep.subr.mxu0 0.0
    %2738 = vmatpush1.msra.mxu0 0.0
    %2739 = vmatprep.subr.mxu0 0.0
    %2740 = vmatpush1.msra.mxu0 0.0
    %2741 = vmatprep.subr.mxu0 0.0
    %2742 = vmatpush1.msra.mxu0 0.0
    %2743 = vmatprep.subr.mxu0 0.0
    %2744 = vmatpush1.msra.mxu0 0.0
    %2745 = vmatprep.subr.mxu0 0.0
    %2746 = vmatpush1.msra.mxu0 0.0
    %2747 = vmatprep.subr.mxu0 0.0
    %2748 = vmatpush1.msra.mxu0 0.0
    %2749 = vmatprep.subr.mxu0 0.0
    %2750 = vmatpush1.msra.mxu0 0.0
    %2751 = vmatprep.subr.mxu0 0.0
    %2752 = vmatpush1.msra.mxu0 0.0
    %2753 = vmatprep.subr.mxu0 0.0
    %2754 = vmatpush1.msra.mxu0 0.0
    %2755 = vmatprep.subr.mxu0 0.0
    %2756 = vmatpush1.msra.mxu0 0.0
    %2757 = vmatprep.subr.mxu0 0.0
    %2758 = vmatpush1.msra.mxu0 0.0
    %2759 = vmatprep.subr.mxu0 0.0
    %2760 = vmatpush1.msra.mxu0 0.0
    %2761 = vmatprep.subr.mxu0 0.0
    %2762 = vmatpush1.msra.mxu0 0.0
    %2763 = vmatprep.subr.mxu0 0.0
    %2764 = vmatpush1.msra.mxu0 0.0
    %2765 = vmatprep.subr.mxu0 0.0
    %2766 = vmatpush1.msra.mxu0 0.0
    %2767 = vmatprep.subr.mxu0 0.0
    %2768 = vmatpush1.msra.mxu0 0.0
    %2769 = vmatprep.subr.mxu0 0.0
    %2770 = vmatpush1.msra.mxu0 0.0
    %2771 = vmatprep.subr.mxu0 0.0
    %2772 = vmatpush1.msra.mxu0 0.0
    %2773 = vmatprep.subr.mxu0 0.0
    %2774 = vmatpush1.msra.mxu0 0.0
    %2775 = vmatprep.subr.mxu0 0.0
    %2776 = vmatpush1.msra.mxu0 0.0
    %2777 = vmatprep.mubr.f32.mxu0 0.0
    %2778 = vmatmul.mubr.f32.gmra.mrb[0].mxu0 %v2711
    %v2779 = vpop.f32.mrb[0].mxu0
    %v2780 = vadd.f32 %v2708, %v2779
    %v2781 = vpop.f32.mrb[0].mxu0
    %2782 = vdwg.mxu0
    %vm2783 = vcmp.ge.f32.partialorder %v2780, 0.0
    %v2784 = vmul.f32 %v2780, 0.2
    %v2785 = vsel %vm2783, %v2780, %v2784
    %v2786 = vld [vmem:[%s21] sm:$0xff]
    %v2787 = vld [vmem:[%s22] sm:$0xff]
    %2789 = vset.pattern.permute.xlu0 0
    %2790 = vperm.xlu0 %2789, %v2787
    %v2791 = vpop.permute.xlu0 %2790
    %v2794 = vsel %vm1268, %v2786, 0
    %2796 = vmatprep.subr.mxu0 0.0
    %2797 = vmatpush1.msra.mxu0 %v2785
    %2798 = vmatprep.subr.mxu0 0.0
    %2799 = vmatpush1.msra.mxu0 %v2615
    %2800 = vmatprep.subr.mxu0 0.0
    %2801 = vmatpush1.msra.mxu0 0.0
    %2802 = vmatprep.subr.mxu0 0.0
    %2803 = vmatpush1.msra.mxu0 0.0
    %2804 = vmatprep.subr.mxu0 0.0
    %2805 = vmatpush1.msra.mxu0 0.0
    %2806 = vmatprep.subr.mxu0 0.0
    %2807 = vmatpush1.msra.mxu0 0.0
    %2808 = vmatprep.subr.mxu0 0.0
    %2809 = vmatpush1.msra.mxu0 0.0
    %2810 = vmatprep.subr.mxu0 0.0
    %2811 = vmatpush1.msra.mxu0 0.0
    %2812 = vmatprep.subr.mxu0 0.0
    %2813 = vmatpush1.msra.mxu0 0.0
    %2814 = vmatprep.subr.mxu0 0.0
    %2815 = vmatpush1.msra.mxu0 0.0
    %2816 = vmatprep.subr.mxu0 0.0
    %2817 = vmatpush1.msra.mxu0 0.0
    %2818 = vmatprep.subr.mxu0 0.0
    %2819 = vmatpush1.msra.mxu0 0.0
    %2820 = vmatprep.subr.mxu0 0.0
    %2821 = vmatpush1.msra.mxu0 0.0
    %2822 = vmatprep.subr.mxu0 0.0
    %2823 = vmatpush1.msra.mxu0 0.0
    %2824 = vmatprep.subr.mxu0 0.0
    %2825 = vmatpush1.msra.mxu0 0.0
    %2826 = vmatprep.subr.mxu0 0.0
    %2827 = vmatpush1.msra.mxu0 0.0
    %2828 = vmatprep.subr.mxu0 0.0
    %2829 = vmatpush1.msra.mxu0 0.0
    %2830 = vmatprep.subr.mxu0 0.0
    %2831 = vmatpush1.msra.mxu0 0.0
    %2832 = vmatprep.subr.mxu0 0.0
    %2833 = vmatpush1.msra.mxu0 0.0
    %2834 = vmatprep.subr.mxu0 0.0
    %2835 = vmatpush1.msra.mxu0 0.0
    %2836 = vmatprep.subr.mxu0 0.0
    %2837 = vmatpush1.msra.mxu0 0.0
    %2838 = vmatprep.subr.mxu0 0.0
    %2839 = vmatpush1.msra.mxu0 0.0
    %2840 = vmatprep.subr.mxu0 0.0
    %2841 = vmatpush1.msra.mxu0 0.0
    %2842 = vmatprep.subr.mxu0 0.0
    %2843 = vmatpush1.msra.mxu0 0.0
    %2844 = vmatprep.subr.mxu0 0.0
    %2845 = vmatpush1.msra.mxu0 0.0
    %2846 = vmatprep.subr.mxu0 0.0
    %2847 = vmatpush1.msra.mxu0 0.0
    %2848 = vmatprep.subr.mxu0 0.0
    %2849 = vmatpush1.msra.mxu0 0.0
    %2850 = vmatprep.subr.mxu0 0.0
    %2851 = vmatpush1.msra.mxu0 0.0
    %2852 = vmatprep.subr.mxu0 0.0
    %2853 = vmatpush1.msra.mxu0 0.0
    %2854 = vmatprep.subr.mxu0 0.0
    %2855 = vmatpush1.msra.mxu0 0.0
    %2856 = vmatprep.subr.mxu0 0.0
    %2857 = vmatpush1.msra.mxu0 0.0
    %2858 = vmatprep.subr.mxu0 0.0
    %2859 = vmatpush1.msra.mxu0 0.0
    %2860 = vmatprep.mubr.f32.mxu0 0.0
    %2861 = vmatmul.mubr.f32.gmra.mrb[0].mxu0 %v2794
    %v2862 = vpop.f32.mrb[0].mxu0
    %v2863 = vadd.f32 %v2791, %v2862
    %v2864 = vpop.f32.mrb[0].mxu0
    %2865 = vdwg.mxu0
    %vm2866 = vcmp.ge.f32.partialorder %v2863, 0.0
    %v2867 = vmul.f32 %v2863, 0.2
    %v2868 = vsel %vm2866, %v2863, %v2867
    %2870 = vrot.lane.b32.xlu0 %v2868, 125
    %v2871 = vpop.permute.xlu0 %2870
    %2873 = vrot.lane.b32.xlu0 %v2868, 127
    %v2874 = vpop.permute.xlu0 %2873
    %2876 = vrot.lane.b32.xlu0 %v2868, 1
    %v2877 = vpop.permute.xlu0 %2876
    %2879 = vrot.lane.b32.xlu0 %v2868, 3
    %v2880 = vpop.permute.xlu0 %2879
    %2882 = vrot.lane.b32.xlu0 %v2868, 5
    %v2883 = vpop.permute.xlu0 %2882
    %2885 = vrot.lane.b32.xlu0 %v2868, 7
    %v2886 = vpop.permute.xlu0 %2885
    %2888 = vrot.lane.b32.xlu0 %v2868, 9
    %v2889 = vpop.permute.xlu0 %2888
    %v2891 = vsel %vm132, %v2871, %v2874
    %v2892 = vsel %vm135, %v2891, %v2877
    %v2893 = vsel %vm138, %v2892, %v2880
    %v2894 = vsel %vm2646, %v2893, %v2883
    %v2895 = vsel %vm2648, %v2894, %v2886
    %v2896 = vsel %vm2650, %v2895, %v2889
    %2897 = vrot.lane.b32.xlu0 %v2868, 93
    %v2898 = vpop.permute.xlu0 %2897
    %2900 = vrot.lane.b32.xlu0 %v2868, 95
    %v2901 = vpop.permute.xlu0 %2900
    %2903 = vrot.lane.b32.xlu0 %v2868, 97
    %v2904 = vpop.permute.xlu0 %2903
    %2906 = vrot.lane.b32.xlu0 %v2868, 99
    %v2907 = vpop.permute.xlu0 %2906
    %2909 = vrot.lane.b32.xlu0 %v2868, 101
    %v2910 = vpop.permute.xlu0 %2909
    %2912 = vrot.lane.b32.xlu0 %v2868, 103
    %v2913 = vpop.permute.xlu0 %2912
    %2915 = vrot.lane.b32.xlu0 %v2868, 105
    %v2916 = vpop.permute.xlu0 %2915
    %v2918 = vsel %vm132, %v2898, %v2901
    %v2919 = vsel %vm135, %v2918, %v2904
    %v2920 = vsel %vm138, %v2919, %v2907
    %v2921 = vsel %vm2646, %v2920, %v2910
    %v2922 = vsel %vm2648, %v2921, %v2913
    %v2923 = vsel %vm2650, %v2922, %v2916
    %v2924 = vld [vmem:[%s23] sm:$0x1]
    %v2925 = vld [vmem:[#allocation2] sm:$0x1]
    %2927 = vrot.lane.b32.xlu0 %v2896, 127
    %v2928 = vpop.permute.xlu0 %2927
    %2930 = vrot.lane.b32.xlu0 %v2896, 126
    %v2931 = vpop.permute.xlu0 %2930
    %2933 = vrot.lane.b32.xlu0 %v2896, 125
    %v2934 = vpop.permute.xlu0 %2933
    %2936 = vrot.lane.b32.xlu0 %v2896, 124
    %v2937 = vpop.permute.xlu0 %2936
    %2939 = vrot.lane.b32.xlu0 %v2896, 123
    %v2940 = vpop.permute.xlu0 %2939
    %2942 = vrot.lane.b32.xlu0 %v2896, 122
    %v2943 = vpop.permute.xlu0 %2942
    %2946 = vrot.lane.b32.xlu0 %v2923, 127
    %v2947 = vpop.permute.xlu0 %2946
    %2948 = vrot.lane.b32.xlu0 %v2923, 126
    %v2949 = vpop.permute.xlu0 %2948
    %2950 = vrot.lane.b32.xlu0 %v2923, 125
    %v2951 = vpop.permute.xlu0 %2950
    %2952 = vrot.lane.b32.xlu0 %v2923, 124
    %v2953 = vpop.permute.xlu0 %2952
    %2954 = vrot.lane.b32.xlu0 %v2923, 123
    %v2955 = vpop.permute.xlu0 %2954
    %2956 = vrot.lane.b32.xlu0 %v2923, 122
    %v2957 = vpop.permute.xlu0 %2956
    %2958 = vrot.lane.b32.xlu0 %v2923, 32
    %v2959 = vpop.permute.xlu0 %2958
    %2960 = vrot.lane.b32.xlu0 %v2947, 32
    %v2961 = vpop.permute.xlu0 %2960
    %2962 = vrot.lane.b32.xlu0 %v2949, 32
    %v2963 = vpop.permute.xlu0 %2962
    %2964 = vrot.lane.b32.xlu0 %v2951, 32
    %v2965 = vpop.permute.xlu0 %2964
    %2966 = vrot.lane.b32.xlu0 %v2953, 32
    %v2967 = vpop.permute.xlu0 %2966
    %2968 = vrot.lane.b32.xlu0 %v2955, 32
    %v2969 = vpop.permute.xlu0 %2968
    %2970 = vrot.lane.b32.xlu0 %v2957, 32
    %v2971 = vpop.permute.xlu0 %2970
    %v2979 = vsel %vm1397, %v2896, %v2959
    %v2980 = vsel %vm1397, %v2928, %v2961
    %v2981 = vsel %vm1397, %v2931, %v2963
    %v2982 = vsel %vm1397, %v2934, %v2965
    %v2983 = vsel %vm1397, %v2937, %v2967
    %v2984 = vsel %vm1397, %v2940, %v2969
    %v2985 = vsel %vm1397, %v2943, %v2971
    %2987 = vset.pattern.permute.xlu0 0
    %2988 = vperm.xlu0 %2987, %v2925
    %v2989 = vpop.permute.xlu0 %2988
    %v2991 = vlaneseq
    %v2992 = vshrl.u32 %v2991, 7
    %v2993 = vsub.s32 0, %v2992
    %v2994 = vrot.slane %v2989, %v2993
    %vm2995 = vcmask 457728
    %v2997 = vsel %vm2995, %v2924, 0
    %2999 = vmatprep.subr.mxu0 0.0
    %3000 = vmatpush1.msra.mxu0 %v2979
    %3001 = vmatprep.subr.mxu0 0.0
    %3002 = vmatpush1.msra.mxu0 %v2980
    %3003 = vmatprep.subr.mxu0 0.0
    %3004 = vmatpush1.msra.mxu0 %v2981
    %3005 = vmatprep.subr.mxu0 0.0
    %3006 = vmatpush1.msra.mxu0 %v2982
    %3007 = vmatprep.subr.mxu0 0.0
    %3008 = vmatpush1.msra.mxu0 %v2983
    %3009 = vmatprep.subr.mxu0 0.0
    %3010 = vmatpush1.msra.mxu0 %v2984
    %3011 = vmatprep.subr.mxu0 0.0
    %3012 = vmatpush1.msra.mxu0 %v2985
    %3013 = vmatprep.subr.mxu0 0.0
    %3014 = vmatpush1.msra.mxu0 0.0
    %3015 = vmatprep.subr.mxu0 0.0
    %3016 = vmatpush1.msra.mxu0 0.0
    %3017 = vmatprep.subr.mxu0 0.0
    %3018 = vmatpush1.msra.mxu0 0.0
    %3019 = vmatprep.subr.mxu0 0.0
    %3020 = vmatpush1.msra.mxu0 0.0
    %3021 = vmatprep.subr.mxu0 0.0
    %3022 = vmatpush1.msra.mxu0 0.0
    %3023 = vmatprep.subr.mxu0 0.0
    %3024 = vmatpush1.msra.mxu0 0.0
    %3025 = vmatprep.subr.mxu0 0.0
    %3026 = vmatpush1.msra.mxu0 0.0
    %3027 = vmatprep.subr.mxu0 0.0
    %3028 = vmatpush1.msra.mxu0 0.0
    %3029 = vmatprep.subr.mxu0 0.0
    %3030 = vmatpush1.msra.mxu0 0.0
    %3031 = vmatprep.subr.mxu0 0.0
    %3032 = vmatpush1.msra.mxu0 0.0
    %3033 = vmatprep.subr.mxu0 0.0
    %3034 = vmatpush1.msra.mxu0 0.0
    %3035 = vmatprep.subr.mxu0 0.0
    %3036 = vmatpush1.msra.mxu0 0.0
    %3037 = vmatprep.subr.mxu0 0.0
    %3038 = vmatpush1.msra.mxu0 0.0
    %3039 = vmatprep.subr.mxu0 0.0
    %3040 = vmatpush1.msra.mxu0 0.0
    %3041 = vmatprep.subr.mxu0 0.0
    %3042 = vmatpush1.msra.mxu0 0.0
    %3043 = vmatprep.subr.mxu0 0.0
    %3044 = vmatpush1.msra.mxu0 0.0
    %3045 = vmatprep.subr.mxu0 0.0
    %3046 = vmatpush1.msra.mxu0 0.0
    %3047 = vmatprep.subr.mxu0 0.0
    %3048 = vmatpush1.msra.mxu0 0.0
    %3049 = vmatprep.subr.mxu0 0.0
    %3050 = vmatpush1.msra.mxu0 0.0
    %3051 = vmatprep.subr.mxu0 0.0
    %3052 = vmatpush1.msra.mxu0 0.0
    %3053 = vmatprep.subr.mxu0 0.0
    %3054 = vmatpush1.msra.mxu0 0.0
    %3055 = vmatprep.subr.mxu0 0.0
    %3056 = vmatpush1.msra.mxu0 0.0
    %3057 = vmatprep.subr.mxu0 0.0
    %3058 = vmatpush1.msra.mxu0 0.0
    %3059 = vmatprep.subr.mxu0 0.0
    %3060 = vmatpush1.msra.mxu0 0.0
    %3061 = vmatprep.subr.mxu0 0.0
    %3062 = vmatpush1.msra.mxu0 0.0
    %3063 = vmatprep.mubr.f32.mxu0 0.0
    %3064 = vmatmul.mubr.f32.gmra.mrb[0].mxu0 %v2997
    %v3065 = vpop.f32.mrb[0].mxu0
    %v3066 = vadd.f32 %v2994, %v3065
    %v3067 = vpop.f32.mrb[0].mxu0
    %3068 = vdwg.mxu0
    %v3069 = vtanh.pop %v3066
    %vm3070 = vcmask 253952
    %3071 = vst.msk [vmem:[#allocation3] sm:$0x1] %vm3070, %v3069
    %3073 = vrot.lane.b32.xlu0 %v3069, 96
    %v3074 = vpop.permute.xlu0 %3073
    %s3076 = scalar_lea.vmem [#allocation3], 1
    %3077 = vst.msk [vmem:[%s3076] sm:$0x1] %vm3070, %v3074
    // Predicated region
    $region102: #{tpu_custom_call.1} parent=1 // pred_check
      _
    $region103: #{tpu_custom_call.1} parent=1 // pred_check_branch
      %3079 = sbr.rel (0) target = $region105
    $region104: #{tpu_custom_call.1} parent=1 // pred_region
      %s3081 = ssub.s32 32, 32
      %3082 = vsyncadd [#allocation4], %s3081
      %s3083 = sshll.u32 [#allocation3], 4
      %s3084 = int_to_ptr.vmem [resolvable:$true] %s3083
      %3089 = dma.vmem_to_hbm [thread:$0]  %s3084, 32, %s25, [#allocation4], 16, 16, 1
    $region105: #{tpu_custom_call.1} parent=1 // pred_fallthru
      _
    // Predicated region
    $region106: #{tpu_custom_call.1} parent=1 // pred_check
      _
    $region107: #{tpu_custom_call.1} parent=1 // pred_check_branch
      %3091 = sbr.rel (0) target = $region109
    $region108: #{tpu_custom_call.1} parent=1 // pred_region
      %3092 = dma.done [#allocation4], 32
    $region109: #{tpu_custom_call.1} parent=1 // pred_fallthru
      _
    %3093 = vsyncpa [#allocation4], 1

</llo_original>
